<compile_context>
chip_gen: v7x
topology: tpu7x:2x2x1
jax: 0.10.0
libtpu: 0.0.40
codegen_flags: <defaults>
</compile_context>

<pallas_src>
import functools

import jax
import jax.numpy as jnp
from jax.experimental import pallas as pl
from jax.experimental.pallas import tpu as pltpu

_GELU_K = 0.7978845608028654          # sqrt(2/pi)
_VMEM_LIMIT = 48 * 1024 * 1024        # v7x-safe (64 MiB/TC); raise on v5e/v6e


def _gelu(x):
    # tanh-approx GELU (EUP slot instead of an erf VALU polynomial).
    return 0.5 * x * (1.0 + jnp.tanh(_GELU_K * (x + 0.044715 * x * x * x)))


def _groupnorm(h, g_ref, b_ref, eps=1e-5):
    """GroupNorm(num_groups=1) over a per-sample (L, C) block; one-pass stats in f32."""
    n = float(h.shape[0] * h.shape[1])
    s = jnp.sum(h)
    ss = jnp.sum(h * h)
    mean = s / n
    var = jnp.maximum(ss / n - mean * mean, 0.0)     # biased var (torch GN)
    inv = jax.lax.rsqrt(var + eps)
    return (h - mean) * inv * g_ref[...] + b_ref[...]


def _zero_halo(pad_ref, H, W):
    """Zero only the 1-wide halo strips (2 rows + 2 cols), not the whole buffer."""
    C = pad_ref.shape[-1]
    z_row = jnp.zeros((1, W + 2, C), dtype=pad_ref.dtype)
    z_col = jnp.zeros((H + 2, 1, C), dtype=pad_ref.dtype)
    pad_ref[0:1, :, :] = z_row
    pad_ref[H + 1:H + 2, :, :] = z_row
    pad_ref[:, 0:1, :] = z_col
    pad_ref[:, W + 1:W + 2, :] = z_col


def _im2col(pad_ref, col_ref, H, W):
    """Build a (H*W, 9*C) bf16 im2col slab from a zero-haloed (H+2, W+2, C) scratch.

    Column block t = ky*3 + kx holds pad[ky:ky+H, kx:kx+W, :] -> one MXU dot with
    K = 9*C instead of 9 dots with K = C.
    """
    C = pad_ref.shape[-1]
    for ky in range(3):
        for kx in range(3):
            t = ky * 3 + kx
            col_ref[:, t * C:(t + 1) * C] = (
                pad_ref[ky:ky + H, kx:kx + W, :]
                .reshape(H * W, C).astype(jnp.bfloat16))


# ---------------------------------------------------------------------------
# Fused kernel: PatchConv + DoubleConv1(residual) + DoubleConv2 + emb add
# (one sample per grid step; no intermediate HBM round trips)
# ---------------------------------------------------------------------------
def _down_kernel(xs_ref, wp_ref, bp_ref,
                 w11_ref, g11_ref, b11_ref, w12_ref, g12_ref, b12_ref,
                 w21_ref, g21_ref, b21_ref, w22_ref, g22_ref, b22_ref,
                 emb_ref, o_ref, pad_c, pad_o, col_c, col_o, *, H, W):
    C = pad_c.shape[-1]
    Cout = o_ref.shape[-1]

    _zero_halo(pad_c, H, W)
    _zero_halo(pad_o, H, W)

    # ---- PatchConv 1x1: (L, 4C) @ (4C, C) + bias  (bf16 MXU, f32 accumulate) ----
    y0 = jnp.dot(xs_ref[...], wp_ref[...],
                 preferred_element_type=jnp.float32) + bp_ref[...]

    # ---- DoubleConv1 (residual): conv -> GN -> GELU -> conv -> GN -> +y0 -> GELU
    pad_c[1:H + 1, 1:W + 1, :] = y0.reshape(H, W, C)
    _im2col(pad_c, col_c, H, W)
    h = jnp.dot(col_c[...], w11_ref[...], preferred_element_type=jnp.float32)
    h = _gelu(_groupnorm(h, g11_ref, b11_ref))

    pad_c[1:H + 1, 1:W + 1, :] = h.reshape(H, W, C)
    _im2col(pad_c, col_c, H, W)
    h = jnp.dot(col_c[...], w12_ref[...], preferred_element_type=jnp.float32)
    y1 = _gelu(y0 + _groupnorm(h, g12_ref, b12_ref))

    # ---- DoubleConv2: conv -> GN -> GELU -> conv -> GN -> GELU, then + emb ----
    pad_c[1:H + 1, 1:W + 1, :] = y1.reshape(H, W, C)
    _im2col(pad_c, col_c, H, W)
    h = jnp.dot(col_c[...], w21_ref[...], preferred_element_type=jnp.float32)
    h = _gelu(_groupnorm(h, g21_ref, b21_ref))

    pad_o[1:H + 1, 1:W + 1, :] = h.reshape(H, W, Cout)
    _im2col(pad_o, col_o, H, W)
    h = jnp.dot(col_o[...], w22_ref[...], preferred_element_type=jnp.float32)
    h = _gelu(_groupnorm(h, g22_ref, b22_ref)) + emb_ref[...]

    o_ref[...] = h.reshape(H, W, Cout).astype(o_ref.dtype)


# ---------------------------------------------------------------------------
# Wrapper
# ---------------------------------------------------------------------------
def _conv_w(w):
    """torch (Cout, Cin, 3, 3) -> (9*Cin, Cout) bf16, row index = (ky*3+kx)*Cin + cin."""
    co, ci = w.shape[0], w.shape[1]
    return jnp.transpose(w, (2, 3, 1, 0)).reshape(9 * ci, co).astype(jnp.bfloat16)


@jax.jit
def down_forward(x_nchw, t_emb, params):
    p = 2
    B, C, H, W = x_nchw.shape
    if H % p != 0 or W % p != 0:
        # Matches the PyTorch PatchConv zero-pad for non-divisible H/W.
        x_nchw = jnp.pad(x_nchw, ((0, 0), (0, 0), (0, (-H) % p), (0, (-W) % p)))
        B, C, H, W = x_nchw.shape
    H2, W2 = H // p, W // p
    L, K0 = H2 * W2, C * p * p
    Cout = params["emb_w"].shape[0]

    # Space-to-depth straight from NCHW into (B, L, 4C) bf16;
    # new channel index = c*p*p + pr*p + pc  (torch unfold/permute order).
    xs = x_nchw.reshape(B, C, H2, p, W2, p).transpose(0, 2, 4, 1, 3, 5)
    xs = xs.reshape(B, L, K0).astype(jnp.bfloat16)

    wp = params["pd_w"].reshape(C, K0).T.astype(jnp.bfloat16)    # (4C, C)
    bp = params["pd_b"].reshape(1, C).astype(jnp.float32)
    dc1, dc2 = params["dc1"], params["dc2"]
    vec = lambda v: v.reshape(1, -1).astype(jnp.float32)

    # Tiny time-embedding Linear runs as plain XLA (no kernel launch).
    emb = (jax.nn.silu(t_emb.astype(jnp.float32))
           @ params["emb_w"].T.astype(jnp.float32)
           + params["emb_b"].astype(jnp.float32)).reshape(B, 1, Cout)

    row = lambda n: pl.BlockSpec((1, n), lambda b: (0, 0))
    mat = lambda r, c: pl.BlockSpec((r, c), lambda b: (0, 0))

    # TODO(synk): for realistic UNet sizes add a spatial 'parallel' row-block grid
    # axis (overlapping 1-row halo) so v7x keeps both cores busy when B is small
    # and per-sample scratches stay well under the 64 MiB/TC VMEM.
    y = pl.pallas_call(
        functools.partial(_down_kernel, H=H2, W=W2),
        out_shape=jax.ShapeDtypeStruct((B, H2, W2, Cout), jnp.float32),
        grid=(B,),
        in_specs=[
            pl.BlockSpec((None, L, K0), lambda b: (b, 0, 0)),      # xs (per sample)
            mat(K0, C), row(C),                                    # PatchConv w, b
            mat(9 * C, C), row(C), row(C),                         # dc1 conv1 w, gamma, beta
            mat(9 * C, C), row(C), row(C),                         # dc1 conv2 w, gamma, beta
            mat(9 * C, Cout), row(Cout), row(Cout),                # dc2 conv1 w, gamma, beta
            mat(9 * Cout, Cout), row(Cout), row(Cout),             # dc2 conv2 w, gamma, beta
            pl.BlockSpec((None, 1, Cout), lambda b: (b, 0, 0)),    # emb (per sample)
        ],
        out_specs=pl.BlockSpec((None, H2, W2, Cout), lambda b: (b, 0, 0, 0)),
        scratch_shapes=[
            pltpu.VMEM((H2 + 2, W2 + 2, C), jnp.float32),          # haloed act, C channels
            pltpu.VMEM((H2 + 2, W2 + 2, Cout), jnp.float32),       # haloed act, Cout channels
            pltpu.VMEM((L, 9 * C), jnp.bfloat16),                  # im2col, C channels
            pltpu.VMEM((L, 9 * Cout), jnp.bfloat16),               # im2col, Cout channels
        ],
        compiler_params=pltpu.CompilerParams(
            dimension_semantics=("parallel",),
            vmem_limit_bytes=_VMEM_LIMIT),
    )(xs, wp, bp,
      _conv_w(dc1["w1"]), vec(dc1["g1"]), vec(dc1["b1"]),
      _conv_w(dc1["w2"]), vec(dc1["g2"]), vec(dc1["b2"]),
      _conv_w(dc2["w1"]), vec(dc2["g1"]), vec(dc2["b1"]),
      _conv_w(dc2["w2"]), vec(dc2["g2"]), vec(dc2["b2"]),
      emb)

    # NCHW to match the PyTorch module (keep NHWC through a real model to drop this).
    return jnp.transpose(y, (0, 3, 1, 2))


# ---------------------------------------------------------------------------
# Deterministic parameter init (same shapes as the PyTorch module)
# ---------------------------------------------------------------------------
def init_params(key, cin, cout, emb_dim, patch_size=2):
    ks = jax.random.split(key, 16)
    nrm = lambda k, s, scale=0.1: scale * jax.random.normal(k, s, jnp.float32)
    pp = patch_size * patch_size
    return {
        "pd_w": nrm(ks[0], (cin, cin * pp, 1, 1)),
        "pd_b": nrm(ks[1], (cin,)),
        "dc1": {"w1": nrm(ks[2], (cin, cin, 3, 3)),
                "g1": 1.0 + nrm(ks[3], (cin,)), "b1": nrm(ks[4], (cin,)),
                "w2": nrm(ks[5], (cin, cin, 3, 3)),
                "g2": 1.0 + nrm(ks[6], (cin,)), "b2": nrm(ks[7], (cin,))},
        "dc2": {"w1": nrm(ks[8], (cout, cin, 3, 3)),
                "g1": 1.0 + nrm(ks[9], (cout,)), "b1": nrm(ks[10], (cout,)),
                "w2": nrm(ks[11], (cout, cout, 3, 3)),
                "g2": 1.0 + nrm(ks[12], (cout,)), "b2": nrm(ks[13], (cout,))},
        "emb_w": nrm(ks[14], (cout, emb_dim)),
        "emb_b": nrm(ks[15], (cout,)),
    }


if __name__ == "__main__":
    B, Cin, Cout, H, W, E = 2, 4, 8, 16, 16, 32
    key = jax.random.PRNGKey(0)
    kx, kt, kp = jax.random.split(key, 3)
    x = jax.random.normal(kx, (B, Cin, H, W), jnp.float32)
    t_emb = jax.random.normal(kt, (B, E), jnp.float32)
    params = init_params(kp, Cin, Cout, E)

    out = jax.block_until_ready(down_forward(x, t_emb, params))
    assert out.shape == (B, Cout, H // 2, W // 2), out.shape
    assert bool(jnp.all(jnp.isfinite(out)))
    print("KERNEL_OK")
</pallas_src>

<mosaic_0001>
module attributes {stable_mosaic.version = 11 : i64} {
  func.func @_down_kernel(%arg0: i32, %arg1: memref<1x64x16xbf16, #tpu.memory_space<vmem>>, %arg2: memref<16x4xbf16, #tpu.memory_space<vmem>>, %arg3: memref<1x4xf32, #tpu.memory_space<vmem>>, %arg4: memref<36x4xbf16, #tpu.memory_space<vmem>>, %arg5: memref<1x4xf32, #tpu.memory_space<vmem>>, %arg6: memref<1x4xf32, #tpu.memory_space<vmem>>, %arg7: memref<36x4xbf16, #tpu.memory_space<vmem>>, %arg8: memref<1x4xf32, #tpu.memory_space<vmem>>, %arg9: memref<1x4xf32, #tpu.memory_space<vmem>>, %arg10: memref<36x8xbf16, #tpu.memory_space<vmem>>, %arg11: memref<1x8xf32, #tpu.memory_space<vmem>>, %arg12: memref<1x8xf32, #tpu.memory_space<vmem>>, %arg13: memref<72x8xbf16, #tpu.memory_space<vmem>>, %arg14: memref<1x8xf32, #tpu.memory_space<vmem>>, %arg15: memref<1x8xf32, #tpu.memory_space<vmem>>, %arg16: memref<1x1x8xf32, #tpu.memory_space<vmem>>, %arg17: memref<1x8x8x8xf32, #tpu.memory_space<vmem>>, %arg18: memref<10x10x4xf32, #tpu.memory_space<vmem>>, %arg19: memref<10x10x8xf32, #tpu.memory_space<vmem>>, %arg20: memref<64x36xbf16, #tpu.memory_space<vmem>>, %arg21: memref<64x72xbf16, #tpu.memory_space<vmem>>) attributes {dimension_semantics = [#tpu.dimension_semantics<parallel>], iteration_bounds = array<i64: 2>, scalar_prefetch = 0 : i64, scratch_operands = 4 : i64, tpu.core_type = #tpu.core_type<tc>, window_params = [{transform_indices = @transform_0, window_bounds = array<i64: 1, 64, 16>}, {pipeline_mode = #tpu.pipeline_mode<synchronous>, transform_indices = @transform_1, window_bounds = array<i64: 16, 4>}, {pipeline_mode = #tpu.pipeline_mode<synchronous>, transform_indices = @transform_2, window_bounds = array<i64: 1, 4>}, {pipeline_mode = #tpu.pipeline_mode<synchronous>, transform_indices = @transform_3, window_bounds = array<i64: 36, 4>}, {pipeline_mode = #tpu.pipeline_mode<synchronous>, transform_indices = @transform_4, window_bounds = array<i64: 1, 4>}, {pipeline_mode = #tpu.pipeline_mode<synchronous>, transform_indices = @transform_5, window_bounds = array<i64: 1, 4>}, {pipeline_mode = #tpu.pipeline_mode<synchronous>, transform_indices = @transform_6, window_bounds = array<i64: 36, 4>}, {pipeline_mode = #tpu.pipeline_mode<synchronous>, transform_indices = @transform_7, window_bounds = array<i64: 1, 4>}, {pipeline_mode = #tpu.pipeline_mode<synchronous>, transform_indices = @transform_8, window_bounds = array<i64: 1, 4>}, {pipeline_mode = #tpu.pipeline_mode<synchronous>, transform_indices = @transform_9, window_bounds = array<i64: 36, 8>}, {pipeline_mode = #tpu.pipeline_mode<synchronous>, transform_indices = @transform_10, window_bounds = array<i64: 1, 8>}, {pipeline_mode = #tpu.pipeline_mode<synchronous>, transform_indices = @transform_11, window_bounds = array<i64: 1, 8>}, {pipeline_mode = #tpu.pipeline_mode<synchronous>, transform_indices = @transform_12, window_bounds = array<i64: 72, 8>}, {pipeline_mode = #tpu.pipeline_mode<synchronous>, transform_indices = @transform_13, window_bounds = array<i64: 1, 8>}, {pipeline_mode = #tpu.pipeline_mode<synchronous>, transform_indices = @transform_14, window_bounds = array<i64: 1, 8>}, {transform_indices = @transform_15, window_bounds = array<i64: 1, 1, 8>}, {transform_indices = @transform_16, window_bounds = array<i64: 1, 8, 8, 8>}]} {
    %cst = arith.constant 0.000000e+00 : f32
    %0 = vector.broadcast %cst : f32 to vector<1x10x4xf32>
    %cst_0 = arith.constant 0.000000e+00 : f32
    %1 = vector.broadcast %cst_0 : f32 to vector<10x1x4xf32>
    %c0 = arith.constant 0 : index
    %c0_1 = arith.constant 0 : index
    %c0_2 = arith.constant 0 : index
    %2 = vector.load %arg18[%c0, %c0_1, %c0_2] : memref<10x10x4xf32, #tpu.memory_space<vmem>>, vector<1x10x4xf32>
    tpu.vector_store %arg18[%c0, %c0_1, %c0_2], %0 {strides = array<i32>} : memref<10x10x4xf32, #tpu.memory_space<vmem>>, vector<1x10x4xf32>,
    %c9 = arith.constant 9 : index
    %c0_3 = arith.constant 0 : index
    %c0_4 = arith.constant 0 : index
    %3 = vector.load %arg18[%c9, %c0_3, %c0_4] : memref<10x10x4xf32, #tpu.memory_space<vmem>>, vector<1x10x4xf32>
    tpu.vector_store %arg18[%c9, %c0_3, %c0_4], %0 {strides = array<i32>} : memref<10x10x4xf32, #tpu.memory_space<vmem>>, vector<1x10x4xf32>,
    %c0_5 = arith.constant 0 : index
    %c0_6 = arith.constant 0 : index
    %c0_7 = arith.constant 0 : index
    %4 = vector.load %arg18[%c0_5, %c0_6, %c0_7] : memref<10x10x4xf32, #tpu.memory_space<vmem>>, vector<10x1x4xf32>
    tpu.vector_store %arg18[%c0_5, %c0_6, %c0_7], %1 {strides = array<i32>} : memref<10x10x4xf32, #tpu.memory_space<vmem>>, vector<10x1x4xf32>,
    %c0_8 = arith.constant 0 : index
    %c9_9 = arith.constant 9 : index
    %c0_10 = arith.constant 0 : index
    %5 = vector.load %arg18[%c0_8, %c9_9, %c0_10] : memref<10x10x4xf32, #tpu.memory_space<vmem>>, vector<10x1x4xf32>
    tpu.vector_store %arg18[%c0_8, %c9_9, %c0_10], %1 {strides = array<i32>} : memref<10x10x4xf32, #tpu.memory_space<vmem>>, vector<10x1x4xf32>,
    %cst_11 = arith.constant 0.000000e+00 : f32
    %6 = vector.broadcast %cst_11 : f32 to vector<1x10x8xf32>
    %cst_12 = arith.constant 0.000000e+00 : f32
    %7 = vector.broadcast %cst_12 : f32 to vector<10x1x8xf32>
    %c0_13 = arith.constant 0 : index
    %c0_14 = arith.constant 0 : index
    %c0_15 = arith.constant 0 : index
    %8 = vector.load %arg19[%c0_13, %c0_14, %c0_15] : memref<10x10x8xf32, #tpu.memory_space<vmem>>, vector<1x10x8xf32>
    tpu.vector_store %arg19[%c0_13, %c0_14, %c0_15], %6 {strides = array<i32>} : memref<10x10x8xf32, #tpu.memory_space<vmem>>, vector<1x10x8xf32>,
    %c9_16 = arith.constant 9 : index
    %c0_17 = arith.constant 0 : index
    %c0_18 = arith.constant 0 : index
    %9 = vector.load %arg19[%c9_16, %c0_17, %c0_18] : memref<10x10x8xf32, #tpu.memory_space<vmem>>, vector<1x10x8xf32>
    tpu.vector_store %arg19[%c9_16, %c0_17, %c0_18], %6 {strides = array<i32>} : memref<10x10x8xf32, #tpu.memory_space<vmem>>, vector<1x10x8xf32>,
    %c0_19 = arith.constant 0 : index
    %c0_20 = arith.constant 0 : index
    %c0_21 = arith.constant 0 : index
    %10 = vector.load %arg19[%c0_19, %c0_20, %c0_21] : memref<10x10x8xf32, #tpu.memory_space<vmem>>, vector<10x1x8xf32>
    tpu.vector_store %arg19[%c0_19, %c0_20, %c0_21], %7 {strides = array<i32>} : memref<10x10x8xf32, #tpu.memory_space<vmem>>, vector<10x1x8xf32>,
    %c0_22 = arith.constant 0 : index
    %c9_23 = arith.constant 9 : index
    %c0_24 = arith.constant 0 : index
    %11 = vector.load %arg19[%c0_22, %c9_23, %c0_24] : memref<10x10x8xf32, #tpu.memory_space<vmem>>, vector<10x1x8xf32>
    tpu.vector_store %arg19[%c0_22, %c9_23, %c0_24], %7 {strides = array<i32>} : memref<10x10x8xf32, #tpu.memory_space<vmem>>, vector<10x1x8xf32>,
    %c0_25 = arith.constant 0 : index
    %c0_26 = arith.constant 0 : index
    %c0_27 = arith.constant 0 : index
    %12 = vector.load %arg1[%c0_25, %c0_26, %c0_27] : memref<1x64x16xbf16, #tpu.memory_space<vmem>>, vector<1x64x16xbf16>
    %13 = vector.shape_cast %12 : vector<1x64x16xbf16> to vector<64x16xbf16>
    %c0_28 = arith.constant 0 : index
    %c0_29 = arith.constant 0 : index
    %14 = vector.load %arg2[%c0_28, %c0_29] : memref<16x4xbf16, #tpu.memory_space<vmem>>, vector<16x4xbf16>
    %cst_30 = arith.constant dense<0.000000e+00> : vector<64x4xf32>
    %15 = tpu.matmul %13, %14, %cst_30 {dimension_numbers = #tpu.dot_dimension_numbers<[1], [0], [0], [1], [0, 0, 1, 1], [], []>} : vector<64x16xbf16>, vector<16x4xbf16>, vector<64x4xf32> -> vector<64x4xf32>
    %c0_31 = arith.constant 0 : index
    %c0_32 = arith.constant 0 : index
    %16 = vector.load %arg3[%c0_31, %c0_32] : memref<1x4xf32, #tpu.memory_space<vmem>>, vector<1x4xf32>
    %17 = vector.broadcast %16 : vector<1x4xf32> to vector<64x4xf32>
    %18 = arith.addf %15, %17 : vector<64x4xf32>
    %19 = vector.shape_cast %18 : vector<64x4xf32> to vector<8x8x4xf32>
    %c1 = arith.constant 1 : index
    %c1_33 = arith.constant 1 : index
    %c0_34 = arith.constant 0 : index
    %20 = vector.load %arg18[%c1, %c1_33, %c0_34] : memref<10x10x4xf32, #tpu.memory_space<vmem>>, vector<8x8x4xf32>
    tpu.vector_store %arg18[%c1, %c1_33, %c0_34], %19 {strides = array<i32>} : memref<10x10x4xf32, #tpu.memory_space<vmem>>, vector<8x8x4xf32>,
    %c0_35 = arith.constant 0 : index
    %c0_36 = arith.constant 0 : index
    %c0_37 = arith.constant 0 : index
    %21 = vector.load %arg18[%c0_35, %c0_36, %c0_37] : memref<10x10x4xf32, #tpu.memory_space<vmem>>, vector<8x8x4xf32>
    %22 = vector.shape_cast %21 : vector<8x8x4xf32> to vector<64x4xf32>
    %23 = arith.truncf %22 : vector<64x4xf32> to vector<64x4xbf16>
    %c0_38 = arith.constant 0 : index
    %c0_39 = arith.constant 0 : index
    %24 = vector.load %arg20[%c0_38, %c0_39] : memref<64x36xbf16, #tpu.memory_space<vmem>>, vector<64x4xbf16>
    tpu.vector_store %arg20[%c0_38, %c0_39], %23 {strides = array<i32>} : memref<64x36xbf16, #tpu.memory_space<vmem>>, vector<64x4xbf16>,
    %c0_40 = arith.constant 0 : index
    %c1_41 = arith.constant 1 : index
    %c0_42 = arith.constant 0 : index
    %25 = vector.load %arg18[%c0_40, %c1_41, %c0_42] : memref<10x10x4xf32, #tpu.memory_space<vmem>>, vector<8x8x4xf32>
    %26 = vector.shape_cast %25 : vector<8x8x4xf32> to vector<64x4xf32>
    %27 = arith.truncf %26 : vector<64x4xf32> to vector<64x4xbf16>
    %c0_43 = arith.constant 0 : index
    %c4 = arith.constant 4 : index
    %28 = vector.load %arg20[%c0_43, %c4] : memref<64x36xbf16, #tpu.memory_space<vmem>>, vector<64x4xbf16>
    tpu.vector_store %arg20[%c0_43, %c4], %27 {strides = array<i32>} : memref<64x36xbf16, #tpu.memory_space<vmem>>, vector<64x4xbf16>,
    %c0_44 = arith.constant 0 : index
    %c2 = arith.constant 2 : index
    %c0_45 = arith.constant 0 : index
    %29 = vector.load %arg18[%c0_44, %c2, %c0_45] : memref<10x10x4xf32, #tpu.memory_space<vmem>>, vector<8x8x4xf32>
    %30 = vector.shape_cast %29 : vector<8x8x4xf32> to vector<64x4xf32>
    %31 = arith.truncf %30 : vector<64x4xf32> to vector<64x4xbf16>
    %c0_46 = arith.constant 0 : index
    %c8 = arith.constant 8 : index
    %32 = vector.load %arg20[%c0_46, %c8] : memref<64x36xbf16, #tpu.memory_space<vmem>>, vector<64x4xbf16>
    tpu.vector_store %arg20[%c0_46, %c8], %31 {strides = array<i32>} : memref<64x36xbf16, #tpu.memory_space<vmem>>, vector<64x4xbf16>,
    %c1_47 = arith.constant 1 : index
    %c0_48 = arith.constant 0 : index
    %c0_49 = arith.constant 0 : index
    %33 = vector.load %arg18[%c1_47, %c0_48, %c0_49] : memref<10x10x4xf32, #tpu.memory_space<vmem>>, vector<8x8x4xf32>
    %34 = vector.shape_cast %33 : vector<8x8x4xf32> to vector<64x4xf32>
    %35 = arith.truncf %34 : vector<64x4xf32> to vector<64x4xbf16>
    %c0_50 = arith.constant 0 : index
    %c12 = arith.constant 12 : index
    %36 = vector.load %arg20[%c0_50, %c12] : memref<64x36xbf16, #tpu.memory_space<vmem>>, vector<64x4xbf16>
    tpu.vector_store %arg20[%c0_50, %c12], %35 {strides = array<i32>} : memref<64x36xbf16, #tpu.memory_space<vmem>>, vector<64x4xbf16>,
    %c1_51 = arith.constant 1 : index
    %c1_52 = arith.constant 1 : index
    %c0_53 = arith.constant 0 : index
    %37 = vector.load %arg18[%c1_51, %c1_52, %c0_53] : memref<10x10x4xf32, #tpu.memory_space<vmem>>, vector<8x8x4xf32>
    %38 = vector.shape_cast %37 : vector<8x8x4xf32> to vector<64x4xf32>
    %39 = arith.truncf %38 : vector<64x4xf32> to vector<64x4xbf16>
    %c0_54 = arith.constant 0 : index
    %c16 = arith.constant 16 : index
    %40 = vector.load %arg20[%c0_54, %c16] : memref<64x36xbf16, #tpu.memory_space<vmem>>, vector<64x4xbf16>
    tpu.vector_store %arg20[%c0_54, %c16], %39 {strides = array<i32>} : memref<64x36xbf16, #tpu.memory_space<vmem>>, vector<64x4xbf16>,
    %c1_55 = arith.constant 1 : index
    %c2_56 = arith.constant 2 : index
    %c0_57 = arith.constant 0 : index
    %41 = vector.load %arg18[%c1_55, %c2_56, %c0_57] : memref<10x10x4xf32, #tpu.memory_space<vmem>>, vector<8x8x4xf32>
    %42 = vector.shape_cast %41 : vector<8x8x4xf32> to vector<64x4xf32>
    %43 = arith.truncf %42 : vector<64x4xf32> to vector<64x4xbf16>
    %c0_58 = arith.constant 0 : index
    %c20 = arith.constant 20 : index
    %44 = vector.load %arg20[%c0_58, %c20] : memref<64x36xbf16, #tpu.memory_space<vmem>>, vector<64x4xbf16>
    tpu.vector_store %arg20[%c0_58, %c20], %43 {strides = array<i32>} : memref<64x36xbf16, #tpu.memory_space<vmem>>, vector<64x4xbf16>,
    %c2_59 = arith.constant 2 : index
    %c0_60 = arith.constant 0 : index
    %c0_61 = arith.constant 0 : index
    %45 = vector.load %arg18[%c2_59, %c0_60, %c0_61] : memref<10x10x4xf32, #tpu.memory_space<vmem>>, vector<8x8x4xf32>
    %46 = vector.shape_cast %45 : vector<8x8x4xf32> to vector<64x4xf32>
    %47 = arith.truncf %46 : vector<64x4xf32> to vector<64x4xbf16>
    %c0_62 = arith.constant 0 : index
    %c24 = arith.constant 24 : index
    %48 = vector.load %arg20[%c0_62, %c24] : memref<64x36xbf16, #tpu.memory_space<vmem>>, vector<64x4xbf16>
    tpu.vector_store %arg20[%c0_62, %c24], %47 {strides = array<i32>} : memref<64x36xbf16, #tpu.memory_space<vmem>>, vector<64x4xbf16>,
    %c2_63 = arith.constant 2 : index
    %c1_64 = arith.constant 1 : index
    %c0_65 = arith.constant 0 : index
    %49 = vector.load %arg18[%c2_63, %c1_64, %c0_65] : memref<10x10x4xf32, #tpu.memory_space<vmem>>, vector<8x8x4xf32>
    %50 = vector.shape_cast %49 : vector<8x8x4xf32> to vector<64x4xf32>
    %51 = arith.truncf %50 : vector<64x4xf32> to vector<64x4xbf16>
    %c0_66 = arith.constant 0 : index
    %c28 = arith.constant 28 : index
    %52 = vector.load %arg20[%c0_66, %c28] : memref<64x36xbf16, #tpu.memory_space<vmem>>, vector<64x4xbf16>
    tpu.vector_store %arg20[%c0_66, %c28], %51 {strides = array<i32>} : memref<64x36xbf16, #tpu.memory_space<vmem>>, vector<64x4xbf16>,
    %c2_67 = arith.constant 2 : index
    %c2_68 = arith.constant 2 : index
    %c0_69 = arith.constant 0 : index
    %53 = vector.load %arg18[%c2_67, %c2_68, %c0_69] : memref<10x10x4xf32, #tpu.memory_space<vmem>>, vector<8x8x4xf32>
    %54 = vector.shape_cast %53 : vector<8x8x4xf32> to vector<64x4xf32>
    %55 = arith.truncf %54 : vector<64x4xf32> to vector<64x4xbf16>
    %c0_70 = arith.constant 0 : index
    %c32 = arith.constant 32 : index
    %56 = vector.load %arg20[%c0_70, %c32] : memref<64x36xbf16, #tpu.memory_space<vmem>>, vector<64x4xbf16>
    tpu.vector_store %arg20[%c0_70, %c32], %55 {strides = array<i32>} : memref<64x36xbf16, #tpu.memory_space<vmem>>, vector<64x4xbf16>,
    %c0_71 = arith.constant 0 : index
    %c0_72 = arith.constant 0 : index
    %57 = vector.load %arg20[%c0_71, %c0_72] : memref<64x36xbf16, #tpu.memory_space<vmem>>, vector<64x36xbf16>
    %c0_73 = arith.constant 0 : index
    %c0_74 = arith.constant 0 : index
    %58 = vector.load %arg4[%c0_73, %c0_74] : memref<36x4xbf16, #tpu.memory_space<vmem>>, vector<36x4xbf16>
    %cst_75 = arith.constant dense<0.000000e+00> : vector<64x4xf32>
    %59 = tpu.matmul %57, %58, %cst_75 {dimension_numbers = #tpu.dot_dimension_numbers<[1], [0], [0], [1], [0, 0, 1, 1], [], []>} : vector<64x36xbf16>, vector<36x4xbf16>, vector<64x4xf32> -> vector<64x4xf32>
    %60 = vector.shape_cast %59 : vector<64x4xf32> to vector<1x64x4xf32>
    %cst_76 = arith.constant dense<0.000000e+00> : vector<1xf32>
    %61 = vector.multi_reduction <add>, %60, %cst_76 [1, 2] : vector<1x64x4xf32> to vector<1xf32>
    %62 = vector.shape_cast %61 : vector<1xf32> to vector<1x1x1xf32>
    %63 = vector.extract %62[0, 0, 0] : f32 from vector<1x1x1xf32>
    %64 = arith.mulf %59, %59 : vector<64x4xf32>
    %65 = vector.shape_cast %64 : vector<64x4xf32> to vector<1x64x4xf32>
    %cst_77 = arith.constant dense<0.000000e+00> : vector<1xf32>
    %66 = vector.multi_reduction <add>, %65, %cst_77 [1, 2] : vector<1x64x4xf32> to vector<1xf32>
    %67 = vector.shape_cast %66 : vector<1xf32> to vector<1x1x1xf32>
    %68 = vector.extract %67[0, 0, 0] : f32 from vector<1x1x1xf32>
    %cst_78 = arith.constant 2.560000e+02 : f32
    %69 = arith.divf %63, %cst_78 : f32
    %cst_79 = arith.constant 2.560000e+02 : f32
    %70 = arith.divf %68, %cst_79 : f32
    %71 = arith.mulf %69, %69 : f32
    %72 = arith.subf %70, %71 : f32
    %cst_80 = arith.constant 0.000000e+00 : f32
    %73 = arith.maximumf %72, %cst_80 : f32
    %cst_81 = arith.constant 9.99999974E-6 : f32
    %74 = arith.addf %73, %cst_81 : f32
    %75 = math.rsqrt %74 : f32
    %76 = vector.broadcast %69 : f32 to vector<64x4xf32>
    %77 = arith.subf %59, %76 : vector<64x4xf32>
    %78 = vector.broadcast %75 : f32 to vector<64x4xf32>
    %79 = arith.mulf %77, %78 : vector<64x4xf32>
    %c0_82 = arith.constant 0 : index
    %c0_83 = arith.constant 0 : index
    %80 = vector.load %arg5[%c0_82, %c0_83] : memref<1x4xf32, #tpu.memory_space<vmem>>, vector<1x4xf32>
    %81 = vector.broadcast %80 : vector<1x4xf32> to vector<64x4xf32>
    %82 = arith.mulf %79, %81 : vector<64x4xf32>
    %c0_84 = arith.constant 0 : index
    %c0_85 = arith.constant 0 : index
    %83 = vector.load %arg6[%c0_84, %c0_85] : memref<1x4xf32, #tpu.memory_space<vmem>>, vector<1x4xf32>
    %84 = vector.broadcast %83 : vector<1x4xf32> to vector<64x4xf32>
    %85 = arith.addf %82, %84 : vector<64x4xf32>
    %cst_86 = arith.constant 5.000000e-01 : f32
    %86 = vector.broadcast %cst_86 : f32 to vector<64x4xf32>
    %87 = arith.mulf %86, %85 : vector<64x4xf32>
    %cst_87 = arith.constant 4.471500e-02 : f32
    %88 = vector.broadcast %cst_87 : f32 to vector<64x4xf32>
    %89 = arith.mulf %88, %85 : vector<64x4xf32>
    %90 = arith.mulf %89, %85 : vector<64x4xf32>
    %91 = arith.mulf %90, %85 : vector<64x4xf32>
    %92 = arith.addf %85, %91 : vector<64x4xf32>
    %cst_88 = arith.constant 0.797884583 : f32
    %93 = vector.broadcast %cst_88 : f32 to vector<64x4xf32>
    %94 = arith.mulf %93, %92 : vector<64x4xf32>
    %95 = math.tanh %94 : vector<64x4xf32>
    %cst_89 = arith.constant 1.000000e+00 : f32
    %96 = vector.broadcast %cst_89 : f32 to vector<64x4xf32>
    %97 = arith.addf %96, %95 : vector<64x4xf32>
    %98 = arith.mulf %87, %97 : vector<64x4xf32>
    %99 = vector.shape_cast %98 : vector<64x4xf32> to vector<8x8x4xf32>
    %c1_90 = arith.constant 1 : index
    %c1_91 = arith.constant 1 : index
    %c0_92 = arith.constant 0 : index
    %100 = vector.load %arg18[%c1_90, %c1_91, %c0_92] : memref<10x10x4xf32, #tpu.memory_space<vmem>>, vector<8x8x4xf32>
    tpu.vector_store %arg18[%c1_90, %c1_91, %c0_92], %99 {strides = array<i32>} : memref<10x10x4xf32, #tpu.memory_space<vmem>>, vector<8x8x4xf32>,
    %c0_93 = arith.constant 0 : index
    %c0_94 = arith.constant 0 : index
    %c0_95 = arith.constant 0 : index
    %101 = vector.load %arg18[%c0_93, %c0_94, %c0_95] : memref<10x10x4xf32, #tpu.memory_space<vmem>>, vector<8x8x4xf32>
    %102 = vector.shape_cast %101 : vector<8x8x4xf32> to vector<64x4xf32>
    %103 = arith.truncf %102 : vector<64x4xf32> to vector<64x4xbf16>
    %c0_96 = arith.constant 0 : index
    %c0_97 = arith.constant 0 : index
    %104 = vector.load %arg20[%c0_96, %c0_97] : memref<64x36xbf16, #tpu.memory_space<vmem>>, vector<64x4xbf16>
    tpu.vector_store %arg20[%c0_96, %c0_97], %103 {strides = array<i32>} : memref<64x36xbf16, #tpu.memory_space<vmem>>, vector<64x4xbf16>,
    %c0_98 = arith.constant 0 : index
    %c1_99 = arith.constant 1 : index
    %c0_100 = arith.constant 0 : index
    %105 = vector.load %arg18[%c0_98, %c1_99, %c0_100] : memref<10x10x4xf32, #tpu.memory_space<vmem>>, vector<8x8x4xf32>
    %106 = vector.shape_cast %105 : vector<8x8x4xf32> to vector<64x4xf32>
    %107 = arith.truncf %106 : vector<64x4xf32> to vector<64x4xbf16>
    %c0_101 = arith.constant 0 : index
    %c4_102 = arith.constant 4 : index
    %108 = vector.load %arg20[%c0_101, %c4_102] : memref<64x36xbf16, #tpu.memory_space<vmem>>, vector<64x4xbf16>
    tpu.vector_store %arg20[%c0_101, %c4_102], %107 {strides = array<i32>} : memref<64x36xbf16, #tpu.memory_space<vmem>>, vector<64x4xbf16>,
    %c0_103 = arith.constant 0 : index
    %c2_104 = arith.constant 2 : index
    %c0_105 = arith.constant 0 : index
    %109 = vector.load %arg18[%c0_103, %c2_104, %c0_105] : memref<10x10x4xf32, #tpu.memory_space<vmem>>, vector<8x8x4xf32>
    %110 = vector.shape_cast %109 : vector<8x8x4xf32> to vector<64x4xf32>
    %111 = arith.truncf %110 : vector<64x4xf32> to vector<64x4xbf16>
    %c0_106 = arith.constant 0 : index
    %c8_107 = arith.constant 8 : index
    %112 = vector.load %arg20[%c0_106, %c8_107] : memref<64x36xbf16, #tpu.memory_space<vmem>>, vector<64x4xbf16>
    tpu.vector_store %arg20[%c0_106, %c8_107], %111 {strides = array<i32>} : memref<64x36xbf16, #tpu.memory_space<vmem>>, vector<64x4xbf16>,
    %c1_108 = arith.constant 1 : index
    %c0_109 = arith.constant 0 : index
    %c0_110 = arith.constant 0 : index
    %113 = vector.load %arg18[%c1_108, %c0_109, %c0_110] : memref<10x10x4xf32, #tpu.memory_space<vmem>>, vector<8x8x4xf32>
    %114 = vector.shape_cast %113 : vector<8x8x4xf32> to vector<64x4xf32>
    %115 = arith.truncf %114 : vector<64x4xf32> to vector<64x4xbf16>
    %c0_111 = arith.constant 0 : index
    %c12_112 = arith.constant 12 : index
    %116 = vector.load %arg20[%c0_111, %c12_112] : memref<64x36xbf16, #tpu.memory_space<vmem>>, vector<64x4xbf16>
    tpu.vector_store %arg20[%c0_111, %c12_112], %115 {strides = array<i32>} : memref<64x36xbf16, #tpu.memory_space<vmem>>, vector<64x4xbf16>,
    %c1_113 = arith.constant 1 : index
    %c1_114 = arith.constant 1 : index
    %c0_115 = arith.constant 0 : index
    %117 = vector.load %arg18[%c1_113, %c1_114, %c0_115] : memref<10x10x4xf32, #tpu.memory_space<vmem>>, vector<8x8x4xf32>
    %118 = vector.shape_cast %117 : vector<8x8x4xf32> to vector<64x4xf32>
    %119 = arith.truncf %118 : vector<64x4xf32> to vector<64x4xbf16>
    %c0_116 = arith.constant 0 : index
    %c16_117 = arith.constant 16 : index
    %120 = vector.load %arg20[%c0_116, %c16_117] : memref<64x36xbf16, #tpu.memory_space<vmem>>, vector<64x4xbf16>
    tpu.vector_store %arg20[%c0_116, %c16_117], %119 {strides = array<i32>} : memref<64x36xbf16, #tpu.memory_space<vmem>>, vector<64x4xbf16>,
    %c1_118 = arith.constant 1 : index
    %c2_119 = arith.constant 2 : index
    %c0_120 = arith.constant 0 : index
    %121 = vector.load %arg18[%c1_118, %c2_119, %c0_120] : memref<10x10x4xf32, #tpu.memory_space<vmem>>, vector<8x8x4xf32>
    %122 = vector.shape_cast %121 : vector<8x8x4xf32> to vector<64x4xf32>
    %123 = arith.truncf %122 : vector<64x4xf32> to vector<64x4xbf16>
    %c0_121 = arith.constant 0 : index
    %c20_122 = arith.constant 20 : index
    %124 = vector.load %arg20[%c0_121, %c20_122] : memref<64x36xbf16, #tpu.memory_space<vmem>>, vector<64x4xbf16>
    tpu.vector_store %arg20[%c0_121, %c20_122], %123 {strides = array<i32>} : memref<64x36xbf16, #tpu.memory_space<vmem>>, vector<64x4xbf16>,
    %c2_123 = arith.constant 2 : index
    %c0_124 = arith.constant 0 : index
    %c0_125 = arith.constant 0 : index
    %125 = vector.load %arg18[%c2_123, %c0_124, %c0_125] : memref<10x10x4xf32, #tpu.memory_space<vmem>>, vector<8x8x4xf32>
    %126 = vector.shape_cast %125 : vector<8x8x4xf32> to vector<64x4xf32>
    %127 = arith.truncf %126 : vector<64x4xf32> to vector<64x4xbf16>
    %c0_126 = arith.constant 0 : index
    %c24_127 = arith.constant 24 : index
    %128 = vector.load %arg20[%c0_126, %c24_127] : memref<64x36xbf16, #tpu.memory_space<vmem>>, vector<64x4xbf16>
    tpu.vector_store %arg20[%c0_126, %c24_127], %127 {strides = array<i32>} : memref<64x36xbf16, #tpu.memory_space<vmem>>, vector<64x4xbf16>,
    %c2_128 = arith.constant 2 : index
    %c1_129 = arith.constant 1 : index
    %c0_130 = arith.constant 0 : index
    %129 = vector.load %arg18[%c2_128, %c1_129, %c0_130] : memref<10x10x4xf32, #tpu.memory_space<vmem>>, vector<8x8x4xf32>
    %130 = vector.shape_cast %129 : vector<8x8x4xf32> to vector<64x4xf32>
    %131 = arith.truncf %130 : vector<64x4xf32> to vector<64x4xbf16>
    %c0_131 = arith.constant 0 : index
    %c28_132 = arith.constant 28 : index
    %132 = vector.load %arg20[%c0_131, %c28_132] : memref<64x36xbf16, #tpu.memory_space<vmem>>, vector<64x4xbf16>
    tpu.vector_store %arg20[%c0_131, %c28_132], %131 {strides = array<i32>} : memref<64x36xbf16, #tpu.memory_space<vmem>>, vector<64x4xbf16>,
    %c2_133 = arith.constant 2 : index
    %c2_134 = arith.constant 2 : index
    %c0_135 = arith.constant 0 : index
    %133 = vector.load %arg18[%c2_133, %c2_134, %c0_135] : memref<10x10x4xf32, #tpu.memory_space<vmem>>, vector<8x8x4xf32>
    %134 = vector.shape_cast %133 : vector<8x8x4xf32> to vector<64x4xf32>
    %135 = arith.truncf %134 : vector<64x4xf32> to vector<64x4xbf16>
    %c0_136 = arith.constant 0 : index
    %c32_137 = arith.constant 32 : index
    %136 = vector.load %arg20[%c0_136, %c32_137] : memref<64x36xbf16, #tpu.memory_space<vmem>>, vector<64x4xbf16>
    tpu.vector_store %arg20[%c0_136, %c32_137], %135 {strides = array<i32>} : memref<64x36xbf16, #tpu.memory_space<vmem>>, vector<64x4xbf16>,
    %c0_138 = arith.constant 0 : index
    %c0_139 = arith.constant 0 : index
    %137 = vector.load %arg20[%c0_138, %c0_139] : memref<64x36xbf16, #tpu.memory_space<vmem>>, vector<64x36xbf16>
    %c0_140 = arith.constant 0 : index
    %c0_141 = arith.constant 0 : index
    %138 = vector.load %arg7[%c0_140, %c0_141] : memref<36x4xbf16, #tpu.memory_space<vmem>>, vector<36x4xbf16>
    %cst_142 = arith.constant dense<0.000000e+00> : vector<64x4xf32>
    %139 = tpu.matmul %137, %138, %cst_142 {dimension_numbers = #tpu.dot_dimension_numbers<[1], [0], [0], [1], [0, 0, 1, 1], [], []>} : vector<64x36xbf16>, vector<36x4xbf16>, vector<64x4xf32> -> vector<64x4xf32>
    %140 = vector.shape_cast %139 : vector<64x4xf32> to vector<1x64x4xf32>
    %cst_143 = arith.constant dense<0.000000e+00> : vector<1xf32>
    %141 = vector.multi_reduction <add>, %140, %cst_143 [1, 2] : vector<1x64x4xf32> to vector<1xf32>
    %142 = vector.shape_cast %141 : vector<1xf32> to vector<1x1x1xf32>
    %143 = vector.extract %142[0, 0, 0] : f32 from vector<1x1x1xf32>
    %144 = arith.mulf %139, %139 : vector<64x4xf32>
    %145 = vector.shape_cast %144 : vector<64x4xf32> to vector<1x64x4xf32>
    %cst_144 = arith.constant dense<0.000000e+00> : vector<1xf32>
    %146 = vector.multi_reduction <add>, %145, %cst_144 [1, 2] : vector<1x64x4xf32> to vector<1xf32>
    %147 = vector.shape_cast %146 : vector<1xf32> to vector<1x1x1xf32>
    %148 = vector.extract %147[0, 0, 0] : f32 from vector<1x1x1xf32>
    %cst_145 = arith.constant 2.560000e+02 : f32
    %149 = arith.divf %143, %cst_145 : f32
    %cst_146 = arith.constant 2.560000e+02 : f32
    %150 = arith.divf %148, %cst_146 : f32
    %151 = arith.mulf %149, %149 : f32
    %152 = arith.subf %150, %151 : f32
    %cst_147 = arith.constant 0.000000e+00 : f32
    %153 = arith.maximumf %152, %cst_147 : f32
    %cst_148 = arith.constant 9.99999974E-6 : f32
    %154 = arith.addf %153, %cst_148 : f32
    %155 = math.rsqrt %154 : f32
    %156 = vector.broadcast %149 : f32 to vector<64x4xf32>
    %157 = arith.subf %139, %156 : vector<64x4xf32>
    %158 = vector.broadcast %155 : f32 to vector<64x4xf32>
    %159 = arith.mulf %157, %158 : vector<64x4xf32>
    %c0_149 = arith.constant 0 : index
    %c0_150 = arith.constant 0 : index
    %160 = vector.load %arg8[%c0_149, %c0_150] : memref<1x4xf32, #tpu.memory_space<vmem>>, vector<1x4xf32>
    %161 = vector.broadcast %160 : vector<1x4xf32> to vector<64x4xf32>
    %162 = arith.mulf %159, %161 : vector<64x4xf32>
    %c0_151 = arith.constant 0 : index
    %c0_152 = arith.constant 0 : index
    %163 = vector.load %arg9[%c0_151, %c0_152] : memref<1x4xf32, #tpu.memory_space<vmem>>, vector<1x4xf32>
    %164 = vector.broadcast %163 : vector<1x4xf32> to vector<64x4xf32>
    %165 = arith.addf %162, %164 : vector<64x4xf32>
    %166 = arith.addf %18, %165 : vector<64x4xf32>
    %cst_153 = arith.constant 5.000000e-01 : f32
    %167 = vector.broadcast %cst_153 : f32 to vector<64x4xf32>
    %168 = arith.mulf %167, %166 : vector<64x4xf32>
    %cst_154 = arith.constant 4.471500e-02 : f32
    %169 = vector.broadcast %cst_154 : f32 to vector<64x4xf32>
    %170 = arith.mulf %169, %166 : vector<64x4xf32>
    %171 = arith.mulf %170, %166 : vector<64x4xf32>
    %172 = arith.mulf %171, %166 : vector<64x4xf32>
    %173 = arith.addf %166, %172 : vector<64x4xf32>
    %cst_155 = arith.constant 0.797884583 : f32
    %174 = vector.broadcast %cst_155 : f32 to vector<64x4xf32>
    %175 = arith.mulf %174, %173 : vector<64x4xf32>
    %176 = math.tanh %175 : vector<64x4xf32>
    %cst_156 = arith.constant 1.000000e+00 : f32
    %177 = vector.broadcast %cst_156 : f32 to vector<64x4xf32>
    %178 = arith.addf %177, %176 : vector<64x4xf32>
    %179 = arith.mulf %168, %178 : vector<64x4xf32>
    %180 = vector.shape_cast %179 : vector<64x4xf32> to vector<8x8x4xf32>
    %c1_157 = arith.constant 1 : index
    %c1_158 = arith.constant 1 : index
    %c0_159 = arith.constant 0 : index
    %181 = vector.load %arg18[%c1_157, %c1_158, %c0_159] : memref<10x10x4xf32, #tpu.memory_space<vmem>>, vector<8x8x4xf32>
    tpu.vector_store %arg18[%c1_157, %c1_158, %c0_159], %180 {strides = array<i32>} : memref<10x10x4xf32, #tpu.memory_space<vmem>>, vector<8x8x4xf32>,
    %c0_160 = arith.constant 0 : index
    %c0_161 = arith.constant 0 : index
    %c0_162 = arith.constant 0 : index
    %182 = vector.load %arg18[%c0_160, %c0_161, %c0_162] : memref<10x10x4xf32, #tpu.memory_space<vmem>>, vector<8x8x4xf32>
    %183 = vector.shape_cast %182 : vector<8x8x4xf32> to vector<64x4xf32>
    %184 = arith.truncf %183 : vector<64x4xf32> to vector<64x4xbf16>
    %c0_163 = arith.constant 0 : index
    %c0_164 = arith.constant 0 : index
    %185 = vector.load %arg20[%c0_163, %c0_164] : memref<64x36xbf16, #tpu.memory_space<vmem>>, vector<64x4xbf16>
    tpu.vector_store %arg20[%c0_163, %c0_164], %184 {strides = array<i32>} : memref<64x36xbf16, #tpu.memory_space<vmem>>, vector<64x4xbf16>,
    %c0_165 = arith.constant 0 : index
    %c1_166 = arith.constant 1 : index
    %c0_167 = arith.constant 0 : index
    %186 = vector.load %arg18[%c0_165, %c1_166, %c0_167] : memref<10x10x4xf32, #tpu.memory_space<vmem>>, vector<8x8x4xf32>
    %187 = vector.shape_cast %186 : vector<8x8x4xf32> to vector<64x4xf32>
    %188 = arith.truncf %187 : vector<64x4xf32> to vector<64x4xbf16>
    %c0_168 = arith.constant 0 : index
    %c4_169 = arith.constant 4 : index
    %189 = vector.load %arg20[%c0_168, %c4_169] : memref<64x36xbf16, #tpu.memory_space<vmem>>, vector<64x4xbf16>
    tpu.vector_store %arg20[%c0_168, %c4_169], %188 {strides = array<i32>} : memref<64x36xbf16, #tpu.memory_space<vmem>>, vector<64x4xbf16>,
    %c0_170 = arith.constant 0 : index
    %c2_171 = arith.constant 2 : index
    %c0_172 = arith.constant 0 : index
    %190 = vector.load %arg18[%c0_170, %c2_171, %c0_172] : memref<10x10x4xf32, #tpu.memory_space<vmem>>, vector<8x8x4xf32>
    %191 = vector.shape_cast %190 : vector<8x8x4xf32> to vector<64x4xf32>
    %192 = arith.truncf %191 : vector<64x4xf32> to vector<64x4xbf16>
    %c0_173 = arith.constant 0 : index
    %c8_174 = arith.constant 8 : index
    %193 = vector.load %arg20[%c0_173, %c8_174] : memref<64x36xbf16, #tpu.memory_space<vmem>>, vector<64x4xbf16>
    tpu.vector_store %arg20[%c0_173, %c8_174], %192 {strides = array<i32>} : memref<64x36xbf16, #tpu.memory_space<vmem>>, vector<64x4xbf16>,
    %c1_175 = arith.constant 1 : index
    %c0_176 = arith.constant 0 : index
    %c0_177 = arith.constant 0 : index
    %194 = vector.load %arg18[%c1_175, %c0_176, %c0_177] : memref<10x10x4xf32, #tpu.memory_space<vmem>>, vector<8x8x4xf32>
    %195 = vector.shape_cast %194 : vector<8x8x4xf32> to vector<64x4xf32>
    %196 = arith.truncf %195 : vector<64x4xf32> to vector<64x4xbf16>
    %c0_178 = arith.constant 0 : index
    %c12_179 = arith.constant 12 : index
    %197 = vector.load %arg20[%c0_178, %c12_179] : memref<64x36xbf16, #tpu.memory_space<vmem>>, vector<64x4xbf16>
    tpu.vector_store %arg20[%c0_178, %c12_179], %196 {strides = array<i32>} : memref<64x36xbf16, #tpu.memory_space<vmem>>, vector<64x4xbf16>,
    %c1_180 = arith.constant 1 : index
    %c1_181 = arith.constant 1 : index
    %c0_182 = arith.constant 0 : index
    %198 = vector.load %arg18[%c1_180, %c1_181, %c0_182] : memref<10x10x4xf32, #tpu.memory_space<vmem>>, vector<8x8x4xf32>
    %199 = vector.shape_cast %198 : vector<8x8x4xf32> to vector<64x4xf32>
    %200 = arith.truncf %199 : vector<64x4xf32> to vector<64x4xbf16>
    %c0_183 = arith.constant 0 : index
    %c16_184 = arith.constant 16 : index
    %201 = vector.load %arg20[%c0_183, %c16_184] : memref<64x36xbf16, #tpu.memory_space<vmem>>, vector<64x4xbf16>
    tpu.vector_store %arg20[%c0_183, %c16_184], %200 {strides = array<i32>} : memref<64x36xbf16, #tpu.memory_space<vmem>>, vector<64x4xbf16>,
    %c1_185 = arith.constant 1 : index
    %c2_186 = arith.constant 2 : index
    %c0_187 = arith.constant 0 : index
    %202 = vector.load %arg18[%c1_185, %c2_186, %c0_187] : memref<10x10x4xf32, #tpu.memory_space<vmem>>, vector<8x8x4xf32>
    %203 = vector.shape_cast %202 : vector<8x8x4xf32> to vector<64x4xf32>
    %204 = arith.truncf %203 : vector<64x4xf32> to vector<64x4xbf16>
    %c0_188 = arith.constant 0 : index
    %c20_189 = arith.constant 20 : index
    %205 = vector.load %arg20[%c0_188, %c20_189] : memref<64x36xbf16, #tpu.memory_space<vmem>>, vector<64x4xbf16>
    tpu.vector_store %arg20[%c0_188, %c20_189], %204 {strides = array<i32>} : memref<64x36xbf16, #tpu.memory_space<vmem>>, vector<64x4xbf16>,
    %c2_190 = arith.constant 2 : index
    %c0_191 = arith.constant 0 : index
    %c0_192 = arith.constant 0 : index
    %206 = vector.load %arg18[%c2_190, %c0_191, %c0_192] : memref<10x10x4xf32, #tpu.memory_space<vmem>>, vector<8x8x4xf32>
    %207 = vector.shape_cast %206 : vector<8x8x4xf32> to vector<64x4xf32>
    %208 = arith.truncf %207 : vector<64x4xf32> to vector<64x4xbf16>
    %c0_193 = arith.constant 0 : index
    %c24_194 = arith.constant 24 : index
    %209 = vector.load %arg20[%c0_193, %c24_194] : memref<64x36xbf16, #tpu.memory_space<vmem>>, vector<64x4xbf16>
    tpu.vector_store %arg20[%c0_193, %c24_194], %208 {strides = array<i32>} : memref<64x36xbf16, #tpu.memory_space<vmem>>, vector<64x4xbf16>,
    %c2_195 = arith.constant 2 : index
    %c1_196 = arith.constant 1 : index
    %c0_197 = arith.constant 0 : index
    %210 = vector.load %arg18[%c2_195, %c1_196, %c0_197] : memref<10x10x4xf32, #tpu.memory_space<vmem>>, vector<8x8x4xf32>
    %211 = vector.shape_cast %210 : vector<8x8x4xf32> to vector<64x4xf32>
    %212 = arith.truncf %211 : vector<64x4xf32> to vector<64x4xbf16>
    %c0_198 = arith.constant 0 : index
    %c28_199 = arith.constant 28 : index
    %213 = vector.load %arg20[%c0_198, %c28_199] : memref<64x36xbf16, #tpu.memory_space<vmem>>, vector<64x4xbf16>
    tpu.vector_store %arg20[%c0_198, %c28_199], %212 {strides = array<i32>} : memref<64x36xbf16, #tpu.memory_space<vmem>>, vector<64x4xbf16>,
    %c2_200 = arith.constant 2 : index
    %c2_201 = arith.constant 2 : index
    %c0_202 = arith.constant 0 : index
    %214 = vector.load %arg18[%c2_200, %c2_201, %c0_202] : memref<10x10x4xf32, #tpu.memory_space<vmem>>, vector<8x8x4xf32>
    %215 = vector.shape_cast %214 : vector<8x8x4xf32> to vector<64x4xf32>
    %216 = arith.truncf %215 : vector<64x4xf32> to vector<64x4xbf16>
    %c0_203 = arith.constant 0 : index
    %c32_204 = arith.constant 32 : index
    %217 = vector.load %arg20[%c0_203, %c32_204] : memref<64x36xbf16, #tpu.memory_space<vmem>>, vector<64x4xbf16>
    tpu.vector_store %arg20[%c0_203, %c32_204], %216 {strides = array<i32>} : memref<64x36xbf16, #tpu.memory_space<vmem>>, vector<64x4xbf16>,
    %c0_205 = arith.constant 0 : index
    %c0_206 = arith.constant 0 : index
    %218 = vector.load %arg20[%c0_205, %c0_206] : memref<64x36xbf16, #tpu.memory_space<vmem>>, vector<64x36xbf16>
    %c0_207 = arith.constant 0 : index
    %c0_208 = arith.constant 0 : index
    %219 = vector.load %arg10[%c0_207, %c0_208] : memref<36x8xbf16, #tpu.memory_space<vmem>>, vector<36x8xbf16>
    %cst_209 = arith.constant dense<0.000000e+00> : vector<64x8xf32>
    %220 = tpu.matmul %218, %219, %cst_209 {dimension_numbers = #tpu.dot_dimension_numbers<[1], [0], [0], [1], [0, 0, 1, 1], [], []>} : vector<64x36xbf16>, vector<36x8xbf16>, vector<64x8xf32> -> vector<64x8xf32>
    %221 = vector.shape_cast %220 : vector<64x8xf32> to vector<1x64x8xf32>
    %cst_210 = arith.constant dense<0.000000e+00> : vector<1xf32>
    %222 = vector.multi_reduction <add>, %221, %cst_210 [1, 2] : vector<1x64x8xf32> to vector<1xf32>
    %223 = vector.shape_cast %222 : vector<1xf32> to vector<1x1x1xf32>
    %224 = vector.extract %223[0, 0, 0] : f32 from vector<1x1x1xf32>
    %225 = arith.mulf %220, %220 : vector<64x8xf32>
    %226 = vector.shape_cast %225 : vector<64x8xf32> to vector<1x64x8xf32>
    %cst_211 = arith.constant dense<0.000000e+00> : vector<1xf32>
    %227 = vector.multi_reduction <add>, %226, %cst_211 [1, 2] : vector<1x64x8xf32> to vector<1xf32>
    %228 = vector.shape_cast %227 : vector<1xf32> to vector<1x1x1xf32>
    %229 = vector.extract %228[0, 0, 0] : f32 from vector<1x1x1xf32>
    %cst_212 = arith.constant 5.120000e+02 : f32
    %230 = arith.divf %224, %cst_212 : f32
    %cst_213 = arith.constant 5.120000e+02 : f32
    %231 = arith.divf %229, %cst_213 : f32
    %232 = arith.mulf %230, %230 : f32
    %233 = arith.subf %231, %232 : f32
    %cst_214 = arith.constant 0.000000e+00 : f32
    %234 = arith.maximumf %233, %cst_214 : f32
    %cst_215 = arith.constant 9.99999974E-6 : f32
    %235 = arith.addf %234, %cst_215 : f32
    %236 = math.rsqrt %235 : f32
    %237 = vector.broadcast %230 : f32 to vector<64x8xf32>
    %238 = arith.subf %220, %237 : vector<64x8xf32>
    %239 = vector.broadcast %236 : f32 to vector<64x8xf32>
    %240 = arith.mulf %238, %239 : vector<64x8xf32>
    %c0_216 = arith.constant 0 : index
    %c0_217 = arith.constant 0 : index
    %241 = vector.load %arg11[%c0_216, %c0_217] : memref<1x8xf32, #tpu.memory_space<vmem>>, vector<1x8xf32>
    %242 = vector.broadcast %241 : vector<1x8xf32> to vector<64x8xf32>
    %243 = arith.mulf %240, %242 : vector<64x8xf32>
    %c0_218 = arith.constant 0 : index
    %c0_219 = arith.constant 0 : index
    %244 = vector.load %arg12[%c0_218, %c0_219] : memref<1x8xf32, #tpu.memory_space<vmem>>, vector<1x8xf32>
    %245 = vector.broadcast %244 : vector<1x8xf32> to vector<64x8xf32>
    %246 = arith.addf %243, %245 : vector<64x8xf32>
    %cst_220 = arith.constant 5.000000e-01 : f32
    %247 = vector.broadcast %cst_220 : f32 to vector<64x8xf32>
    %248 = arith.mulf %247, %246 : vector<64x8xf32>
    %cst_221 = arith.constant 4.471500e-02 : f32
    %249 = vector.broadcast %cst_221 : f32 to vector<64x8xf32>
    %250 = arith.mulf %249, %246 : vector<64x8xf32>
    %251 = arith.mulf %250, %246 : vector<64x8xf32>
    %252 = arith.mulf %251, %246 : vector<64x8xf32>
    %253 = arith.addf %246, %252 : vector<64x8xf32>
    %cst_222 = arith.constant 0.797884583 : f32
    %254 = vector.broadcast %cst_222 : f32 to vector<64x8xf32>
    %255 = arith.mulf %254, %253 : vector<64x8xf32>
    %256 = math.tanh %255 : vector<64x8xf32>
    %cst_223 = arith.constant 1.000000e+00 : f32
    %257 = vector.broadcast %cst_223 : f32 to vector<64x8xf32>
    %258 = arith.addf %257, %256 : vector<64x8xf32>
    %259 = arith.mulf %248, %258 : vector<64x8xf32>
    %260 = vector.shape_cast %259 : vector<64x8xf32> to vector<8x8x8xf32>
    %c1_224 = arith.constant 1 : index
    %c1_225 = arith.constant 1 : index
    %c0_226 = arith.constant 0 : index
    %261 = vector.load %arg19[%c1_224, %c1_225, %c0_226] : memref<10x10x8xf32, #tpu.memory_space<vmem>>, vector<8x8x8xf32>
    tpu.vector_store %arg19[%c1_224, %c1_225, %c0_226], %260 {strides = array<i32>} : memref<10x10x8xf32, #tpu.memory_space<vmem>>, vector<8x8x8xf32>,
    %c0_227 = arith.constant 0 : index
    %c0_228 = arith.constant 0 : index
    %c0_229 = arith.constant 0 : index
    %262 = vector.load %arg19[%c0_227, %c0_228, %c0_229] : memref<10x10x8xf32, #tpu.memory_space<vmem>>, vector<8x8x8xf32>
    %263 = vector.shape_cast %262 : vector<8x8x8xf32> to vector<64x8xf32>
    %264 = arith.truncf %263 : vector<64x8xf32> to vector<64x8xbf16>
    %c0_230 = arith.constant 0 : index
    %c0_231 = arith.constant 0 : index
    %265 = vector.load %arg21[%c0_230, %c0_231] : memref<64x72xbf16, #tpu.memory_space<vmem>>, vector<64x8xbf16>
    tpu.vector_store %arg21[%c0_230, %c0_231], %264 {strides = array<i32>} : memref<64x72xbf16, #tpu.memory_space<vmem>>, vector<64x8xbf16>,
    %c0_232 = arith.constant 0 : index
    %c1_233 = arith.constant 1 : index
    %c0_234 = arith.constant 0 : index
    %266 = vector.load %arg19[%c0_232, %c1_233, %c0_234] : memref<10x10x8xf32, #tpu.memory_space<vmem>>, vector<8x8x8xf32>
    %267 = vector.shape_cast %266 : vector<8x8x8xf32> to vector<64x8xf32>
    %268 = arith.truncf %267 : vector<64x8xf32> to vector<64x8xbf16>
    %c0_235 = arith.constant 0 : index
    %c8_236 = arith.constant 8 : index
    %269 = vector.load %arg21[%c0_235, %c8_236] : memref<64x72xbf16, #tpu.memory_space<vmem>>, vector<64x8xbf16>
    tpu.vector_store %arg21[%c0_235, %c8_236], %268 {strides = array<i32>} : memref<64x72xbf16, #tpu.memory_space<vmem>>, vector<64x8xbf16>,
    %c0_237 = arith.constant 0 : index
    %c2_238 = arith.constant 2 : index
    %c0_239 = arith.constant 0 : index
    %270 = vector.load %arg19[%c0_237, %c2_238, %c0_239] : memref<10x10x8xf32, #tpu.memory_space<vmem>>, vector<8x8x8xf32>
    %271 = vector.shape_cast %270 : vector<8x8x8xf32> to vector<64x8xf32>
    %272 = arith.truncf %271 : vector<64x8xf32> to vector<64x8xbf16>
    %c0_240 = arith.constant 0 : index
    %c16_241 = arith.constant 16 : index
    %273 = vector.load %arg21[%c0_240, %c16_241] : memref<64x72xbf16, #tpu.memory_space<vmem>>, vector<64x8xbf16>
    tpu.vector_store %arg21[%c0_240, %c16_241], %272 {strides = array<i32>} : memref<64x72xbf16, #tpu.memory_space<vmem>>, vector<64x8xbf16>,
    %c1_242 = arith.constant 1 : index
    %c0_243 = arith.constant 0 : index
    %c0_244 = arith.constant 0 : index
    %274 = vector.load %arg19[%c1_242, %c0_243, %c0_244] : memref<10x10x8xf32, #tpu.memory_space<vmem>>, vector<8x8x8xf32>
    %275 = vector.shape_cast %274 : vector<8x8x8xf32> to vector<64x8xf32>
    %276 = arith.truncf %275 : vector<64x8xf32> to vector<64x8xbf16>
    %c0_245 = arith.constant 0 : index
    %c24_246 = arith.constant 24 : index
    %277 = vector.load %arg21[%c0_245, %c24_246] : memref<64x72xbf16, #tpu.memory_space<vmem>>, vector<64x8xbf16>
    tpu.vector_store %arg21[%c0_245, %c24_246], %276 {strides = array<i32>} : memref<64x72xbf16, #tpu.memory_space<vmem>>, vector<64x8xbf16>,
    %c1_247 = arith.constant 1 : index
    %c1_248 = arith.constant 1 : index
    %c0_249 = arith.constant 0 : index
    %278 = vector.load %arg19[%c1_247, %c1_248, %c0_249] : memref<10x10x8xf32, #tpu.memory_space<vmem>>, vector<8x8x8xf32>
    %279 = vector.shape_cast %278 : vector<8x8x8xf32> to vector<64x8xf32>
    %280 = arith.truncf %279 : vector<64x8xf32> to vector<64x8xbf16>
    %c0_250 = arith.constant 0 : index
    %c32_251 = arith.constant 32 : index
    %281 = vector.load %arg21[%c0_250, %c32_251] : memref<64x72xbf16, #tpu.memory_space<vmem>>, vector<64x8xbf16>
    tpu.vector_store %arg21[%c0_250, %c32_251], %280 {strides = array<i32>} : memref<64x72xbf16, #tpu.memory_space<vmem>>, vector<64x8xbf16>,
    %c1_252 = arith.constant 1 : index
    %c2_253 = arith.constant 2 : index
    %c0_254 = arith.constant 0 : index
    %282 = vector.load %arg19[%c1_252, %c2_253, %c0_254] : memref<10x10x8xf32, #tpu.memory_space<vmem>>, vector<8x8x8xf32>
    %283 = vector.shape_cast %282 : vector<8x8x8xf32> to vector<64x8xf32>
    %284 = arith.truncf %283 : vector<64x8xf32> to vector<64x8xbf16>
    %c0_255 = arith.constant 0 : index
    %c40 = arith.constant 40 : index
    %285 = vector.load %arg21[%c0_255, %c40] : memref<64x72xbf16, #tpu.memory_space<vmem>>, vector<64x8xbf16>
    tpu.vector_store %arg21[%c0_255, %c40], %284 {strides = array<i32>} : memref<64x72xbf16, #tpu.memory_space<vmem>>, vector<64x8xbf16>,
    %c2_256 = arith.constant 2 : index
    %c0_257 = arith.constant 0 : index
    %c0_258 = arith.constant 0 : index
    %286 = vector.load %arg19[%c2_256, %c0_257, %c0_258] : memref<10x10x8xf32, #tpu.memory_space<vmem>>, vector<8x8x8xf32>
    %287 = vector.shape_cast %286 : vector<8x8x8xf32> to vector<64x8xf32>
    %288 = arith.truncf %287 : vector<64x8xf32> to vector<64x8xbf16>
    %c0_259 = arith.constant 0 : index
    %c48 = arith.constant 48 : index
    %289 = vector.load %arg21[%c0_259, %c48] : memref<64x72xbf16, #tpu.memory_space<vmem>>, vector<64x8xbf16>
    tpu.vector_store %arg21[%c0_259, %c48], %288 {strides = array<i32>} : memref<64x72xbf16, #tpu.memory_space<vmem>>, vector<64x8xbf16>,
    %c2_260 = arith.constant 2 : index
    %c1_261 = arith.constant 1 : index
    %c0_262 = arith.constant 0 : index
    %290 = vector.load %arg19[%c2_260, %c1_261, %c0_262] : memref<10x10x8xf32, #tpu.memory_space<vmem>>, vector<8x8x8xf32>
    %291 = vector.shape_cast %290 : vector<8x8x8xf32> to vector<64x8xf32>
    %292 = arith.truncf %291 : vector<64x8xf32> to vector<64x8xbf16>
    %c0_263 = arith.constant 0 : index
    %c56 = arith.constant 56 : index
    %293 = vector.load %arg21[%c0_263, %c56] : memref<64x72xbf16, #tpu.memory_space<vmem>>, vector<64x8xbf16>
    tpu.vector_store %arg21[%c0_263, %c56], %292 {strides = array<i32>} : memref<64x72xbf16, #tpu.memory_space<vmem>>, vector<64x8xbf16>,
    %c2_264 = arith.constant 2 : index
    %c2_265 = arith.constant 2 : index
    %c0_266 = arith.constant 0 : index
    %294 = vector.load %arg19[%c2_264, %c2_265, %c0_266] : memref<10x10x8xf32, #tpu.memory_space<vmem>>, vector<8x8x8xf32>
    %295 = vector.shape_cast %294 : vector<8x8x8xf32> to vector<64x8xf32>
    %296 = arith.truncf %295 : vector<64x8xf32> to vector<64x8xbf16>
    %c0_267 = arith.constant 0 : index
    %c64 = arith.constant 64 : index
    %297 = vector.load %arg21[%c0_267, %c64] : memref<64x72xbf16, #tpu.memory_space<vmem>>, vector<64x8xbf16>
    tpu.vector_store %arg21[%c0_267, %c64], %296 {strides = array<i32>} : memref<64x72xbf16, #tpu.memory_space<vmem>>, vector<64x8xbf16>,
    %c0_268 = arith.constant 0 : index
    %c0_269 = arith.constant 0 : index
    %298 = vector.load %arg21[%c0_268, %c0_269] : memref<64x72xbf16, #tpu.memory_space<vmem>>, vector<64x72xbf16>
    %c0_270 = arith.constant 0 : index
    %c0_271 = arith.constant 0 : index
    %299 = vector.load %arg13[%c0_270, %c0_271] : memref<72x8xbf16, #tpu.memory_space<vmem>>, vector<72x8xbf16>
    %cst_272 = arith.constant dense<0.000000e+00> : vector<64x8xf32>
    %300 = tpu.matmul %298, %299, %cst_272 {dimension_numbers = #tpu.dot_dimension_numbers<[1], [0], [0], [1], [0, 0, 1, 1], [], []>} : vector<64x72xbf16>, vector<72x8xbf16>, vector<64x8xf32> -> vector<64x8xf32>
    %301 = vector.shape_cast %300 : vector<64x8xf32> to vector<1x64x8xf32>
    %cst_273 = arith.constant dense<0.000000e+00> : vector<1xf32>
    %302 = vector.multi_reduction <add>, %301, %cst_273 [1, 2] : vector<1x64x8xf32> to vector<1xf32>
    %303 = vector.shape_cast %302 : vector<1xf32> to vector<1x1x1xf32>
    %304 = vector.extract %303[0, 0, 0] : f32 from vector<1x1x1xf32>
    %305 = arith.mulf %300, %300 : vector<64x8xf32>
    %306 = vector.shape_cast %305 : vector<64x8xf32> to vector<1x64x8xf32>
    %cst_274 = arith.constant dense<0.000000e+00> : vector<1xf32>
    %307 = vector.multi_reduction <add>, %306, %cst_274 [1, 2] : vector<1x64x8xf32> to vector<1xf32>
    %308 = vector.shape_cast %307 : vector<1xf32> to vector<1x1x1xf32>
    %309 = vector.extract %308[0, 0, 0] : f32 from vector<1x1x1xf32>
    %cst_275 = arith.constant 5.120000e+02 : f32
    %310 = arith.divf %304, %cst_275 : f32
    %cst_276 = arith.constant 5.120000e+02 : f32
    %311 = arith.divf %309, %cst_276 : f32
    %312 = arith.mulf %310, %310 : f32
    %313 = arith.subf %311, %312 : f32
    %cst_277 = arith.constant 0.000000e+00 : f32
    %314 = arith.maximumf %313, %cst_277 : f32
    %cst_278 = arith.constant 9.99999974E-6 : f32
    %315 = arith.addf %314, %cst_278 : f32
    %316 = math.rsqrt %315 : f32
    %317 = vector.broadcast %310 : f32 to vector<64x8xf32>
    %318 = arith.subf %300, %317 : vector<64x8xf32>
    %319 = vector.broadcast %316 : f32 to vector<64x8xf32>
    %320 = arith.mulf %318, %319 : vector<64x8xf32>
    %c0_279 = arith.constant 0 : index
    %c0_280 = arith.constant 0 : index
    %321 = vector.load %arg14[%c0_279, %c0_280] : memref<1x8xf32, #tpu.memory_space<vmem>>, vector<1x8xf32>
    %322 = vector.broadcast %321 : vector<1x8xf32> to vector<64x8xf32>
    %323 = arith.mulf %320, %322 : vector<64x8xf32>
    %c0_281 = arith.constant 0 : index
    %c0_282 = arith.constant 0 : index
    %324 = vector.load %arg15[%c0_281, %c0_282] : memref<1x8xf32, #tpu.memory_space<vmem>>, vector<1x8xf32>
    %325 = vector.broadcast %324 : vector<1x8xf32> to vector<64x8xf32>
    %326 = arith.addf %323, %325 : vector<64x8xf32>
    %cst_283 = arith.constant 5.000000e-01 : f32
    %327 = vector.broadcast %cst_283 : f32 to vector<64x8xf32>
    %328 = arith.mulf %327, %326 : vector<64x8xf32>
    %cst_284 = arith.constant 4.471500e-02 : f32
    %329 = vector.broadcast %cst_284 : f32 to vector<64x8xf32>
    %330 = arith.mulf %329, %326 : vector<64x8xf32>
    %331 = arith.mulf %330, %326 : vector<64x8xf32>
    %332 = arith.mulf %331, %326 : vector<64x8xf32>
    %333 = arith.addf %326, %332 : vector<64x8xf32>
    %cst_285 = arith.constant 0.797884583 : f32
    %334 = vector.broadcast %cst_285 : f32 to vector<64x8xf32>
    %335 = arith.mulf %334, %333 : vector<64x8xf32>
    %336 = math.tanh %335 : vector<64x8xf32>
    %cst_286 = arith.constant 1.000000e+00 : f32
    %337 = vector.broadcast %cst_286 : f32 to vector<64x8xf32>
    %338 = arith.addf %337, %336 : vector<64x8xf32>
    %339 = arith.mulf %328, %338 : vector<64x8xf32>
    %c0_287 = arith.constant 0 : index
    %c0_288 = arith.constant 0 : index
    %c0_289 = arith.constant 0 : index
    %340 = vector.load %arg16[%c0_287, %c0_288, %c0_289] : memref<1x1x8xf32, #tpu.memory_space<vmem>>, vector<1x1x8xf32>
    %341 = vector.shape_cast %340 : vector<1x1x8xf32> to vector<1x8xf32>
    %342 = vector.broadcast %341 : vector<1x8xf32> to vector<64x8xf32>
    %343 = arith.addf %339, %342 : vector<64x8xf32>
    %344 = vector.shape_cast %343 : vector<64x8xf32> to vector<8x8x8xf32>
    %c0_290 = arith.constant 0 : index
    %c0_291 = arith.constant 0 : index
    %c0_292 = arith.constant 0 : index
    %c0_293 = arith.constant 0 : index
    %345 = vector.load %arg17[%c0_290, %c0_291, %c0_292, %c0_293] : memref<1x8x8x8xf32, #tpu.memory_space<vmem>>, vector<1x8x8x8xf32>
    %346 = vector.shape_cast %345 : vector<1x8x8x8xf32> to vector<8x8x8xf32>
    %347 = vector.shape_cast %344 : vector<8x8x8xf32> to vector<1x8x8x8xf32>
    tpu.vector_store %arg17[%c0_290, %c0_291, %c0_292, %c0_293], %347 {strides = array<i32>} : memref<1x8x8x8xf32, #tpu.memory_space<vmem>>, vector<1x8x8x8xf32>,
    return
  }
  func.func @transform_0(%arg0: i32) -> (i32, i32, i32) {
    %c0_i32 = arith.constant 0 : i32
    %c0_i32_0 = arith.constant 0 : i32
    %c0_i32_1 = arith.constant 0 : i32
    return %arg0, %c0_i32, %c0_i32_0 : i32, i32, i32
  }
  func.func @transform_1(%arg0: i32) -> (i32, i32) {
    %c0_i32 = arith.constant 0 : i32
    %c0_i32_0 = arith.constant 0 : i32
    %c0_i32_1 = arith.constant 0 : i32
    return %c0_i32, %c0_i32_0 : i32, i32
  }
  func.func @transform_2(%arg0: i32) -> (i32, i32) {
    %c0_i32 = arith.constant 0 : i32
    %c0_i32_0 = arith.constant 0 : i32
    %c0_i32_1 = arith.constant 0 : i32
    return %c0_i32, %c0_i32_0 : i32, i32
  }
  func.func @transform_3(%arg0: i32) -> (i32, i32) {
    %c0_i32 = arith.constant 0 : i32
    %c0_i32_0 = arith.constant 0 : i32
    %c0_i32_1 = arith.constant 0 : i32
    return %c0_i32, %c0_i32_0 : i32, i32
  }
  func.func @transform_4(%arg0: i32) -> (i32, i32) {
    %c0_i32 = arith.constant 0 : i32
    %c0_i32_0 = arith.constant 0 : i32
    %c0_i32_1 = arith.constant 0 : i32
    return %c0_i32, %c0_i32_0 : i32, i32
  }
  func.func @transform_5(%arg0: i32) -> (i32, i32) {
    %c0_i32 = arith.constant 0 : i32
    %c0_i32_0 = arith.constant 0 : i32
    %c0_i32_1 = arith.constant 0 : i32
    return %c0_i32, %c0_i32_0 : i32, i32
  }
  func.func @transform_6(%arg0: i32) -> (i32, i32) {
    %c0_i32 = arith.constant 0 : i32
    %c0_i32_0 = arith.constant 0 : i32
    %c0_i32_1 = arith.constant 0 : i32
    return %c0_i32, %c0_i32_0 : i32, i32
  }
  func.func @transform_7(%arg0: i32) -> (i32, i32) {
    %c0_i32 = arith.constant 0 : i32
    %c0_i32_0 = arith.constant 0 : i32
    %c0_i32_1 = arith.constant 0 : i32
    return %c0_i32, %c0_i32_0 : i32, i32
  }
  func.func @transform_8(%arg0: i32) -> (i32, i32) {
    %c0_i32 = arith.constant 0 : i32
    %c0_i32_0 = arith.constant 0 : i32
    %c0_i32_1 = arith.constant 0 : i32
    return %c0_i32, %c0_i32_0 : i32, i32
  }
  func.func @transform_9(%arg0: i32) -> (i32, i32) {
    %c0_i32 = arith.constant 0 : i32
    %c0_i32_0 = arith.constant 0 : i32
    %c0_i32_1 = arith.constant 0 : i32
    return %c0_i32, %c0_i32_0 : i32, i32
  }
  func.func @transform_10(%arg0: i32) -> (i32, i32) {
    %c0_i32 = arith.constant 0 : i32
    %c0_i32_0 = arith.constant 0 : i32
    %c0_i32_1 = arith.constant 0 : i32
    return %c0_i32, %c0_i32_0 : i32, i32
  }
  func.func @transform_11(%arg0: i32) -> (i32, i32) {
    %c0_i32 = arith.constant 0 : i32
    %c0_i32_0 = arith.constant 0 : i32
    %c0_i32_1 = arith.constant 0 : i32
    return %c0_i32, %c0_i32_0 : i32, i32
  }
  func.func @transform_12(%arg0: i32) -> (i32, i32) {
    %c0_i32 = arith.constant 0 : i32
    %c0_i32_0 = arith.constant 0 : i32
    %c0_i32_1 = arith.constant 0 : i32
    return %c0_i32, %c0_i32_0 : i32, i32
  }
  func.func @transform_13(%arg0: i32) -> (i32, i32) {
    %c0_i32 = arith.constant 0 : i32
    %c0_i32_0 = arith.constant 0 : i32
    %c0_i32_1 = arith.constant 0 : i32
    return %c0_i32, %c0_i32_0 : i32, i32
  }
  func.func @transform_14(%arg0: i32) -> (i32, i32) {
    %c0_i32 = arith.constant 0 : i32
    %c0_i32_0 = arith.constant 0 : i32
    %c0_i32_1 = arith.constant 0 : i32
    return %c0_i32, %c0_i32_0 : i32, i32
  }
  func.func @transform_15(%arg0: i32) -> (i32, i32, i32) {
    %c0_i32 = arith.constant 0 : i32
    %c0_i32_0 = arith.constant 0 : i32
    %c0_i32_1 = arith.constant 0 : i32
    return %arg0, %c0_i32, %c0_i32_0 : i32, i32, i32
  }
  func.func @transform_16(%arg0: i32) -> (i32, i32, i32, i32) {
    %c0_i32 = arith.constant 0 : i32
    %c0_i32_0 = arith.constant 0 : i32
    %c0_i32_1 = arith.constant 0 : i32
    %c0_i32_2 = arith.constant 0 : i32
    return %arg0, %c0_i32, %c0_i32_0, %c0_i32_1 : i32, i32, i32, i32
  }
}

</mosaic_0001>

<llo_original>
// kernel: down_forward.1
$region0: #{down_forward.1}
  #allocation0 [shape = 'u32[]', space=smem, size = 0x4, offset = 0x4, fixed_abs, tag = 'smem constant byte address 0x4 - core index']
  #allocation1 [shape = 'u32[144,128]{1,0:T(1,128)}', space=vmem, size = 0x12000, scoped, tag = 'internal scratch']
  #allocation2 [shape = 'f32[10,10,4]{2,1,0:T(8,128)}', space=vmem, size = 0x14000, scoped, tag = 'scratch operand']
  #allocation3 [shape = 'f32[10,10,8]{2,1,0:T(8,128)}', space=vmem, size = 0x14000, scoped, tag = 'scratch operand']
  #allocation4 [shape = 'bf16[64,36]{1,0:T(16,128)(2,1)}', space=vmem, size = 0x4000, scoped, tag = 'scratch operand']
  #allocation5 [shape = 'bf16[64,72]{1,0:T(16,128)(2,1)}', space=vmem, size = 0x4000, scoped, tag = 'scratch operand']
  %s0 = inlined_call_operand.vmem [shape: bf16[2,64,16], index: 0, kind: input, shape index: {}]
  %s1 = inlined_call_operand.vmem [shape: bf16[16,4], index: 1, kind: input, shape index: {}]
  %s2 = inlined_call_operand.vmem [shape: f32[1,4], index: 2, kind: input, shape index: {}]
  %s3 = inlined_call_operand.vmem [shape: bf16[36,4], index: 3, kind: input, shape index: {}]
  %s4 = inlined_call_operand.vmem [shape: f32[1,4], index: 4, kind: input, shape index: {}]
  %s5 = inlined_call_operand.vmem [shape: f32[1,4], index: 5, kind: input, shape index: {}]
  %s6 = inlined_call_operand.vmem [shape: bf16[36,4], index: 6, kind: input, shape index: {}]
  %s7 = inlined_call_operand.vmem [shape: f32[1,4], index: 7, kind: input, shape index: {}]
  %s8 = inlined_call_operand.vmem [shape: f32[1,4], index: 8, kind: input, shape index: {}]
  %s9 = inlined_call_operand.vmem [shape: bf16[36,8], index: 9, kind: input, shape index: {}]
  %s10 = inlined_call_operand.vmem [shape: f32[1,8], index: 10, kind: input, shape index: {}]
  %s11 = inlined_call_operand.vmem [shape: f32[1,8], index: 11, kind: input, shape index: {}]
  %s12 = inlined_call_operand.vmem [shape: bf16[72,8], index: 12, kind: input, shape index: {}]
  %s13 = inlined_call_operand.vmem [shape: f32[1,8], index: 13, kind: input, shape index: {}]
  %s14 = inlined_call_operand.vmem [shape: f32[1,8], index: 14, kind: input, shape index: {}]
  %s15 = inlined_call_operand.vmem [shape: f32[2,1,8], index: 15, kind: input, shape index: {}]
  %s16 = inlined_call_operand.vmem [shape: f32[2,8,8,8], index: 16, kind: output, shape index: {}]
  %s17 = sld [smem:[#allocation0]]
  $region97: #{down_forward.1} parent=0
    _
  %s19 = ssub.s32 1, %s17
  %s20 = scalar_select 0, %s19, %s17
  loop: start=0, step=1, limit=4
  $region2: #{down_forward.1} parent=0 // loop_pre_header
    _
  $region3: #{down_forward.1} parent=0 // loop_header
    %s22 = sphi 0, %s26
    %p23 = scmp.ge.s32.totalorder %s22, 4
    %s32 = sphi 0, %s34
    %s35 = sphi 0, %s32
    %s36 = sphi 0, %s35
    %s52 = sphi 0, %s36
    %s56 = sphi 0, %s56
    %s58 = sphi 0, %s56
    %s59 = sphi 0, %s58
    %s73 = sphi 0, %s59
    %s77 = sphi 0, %s77
    %s79 = sphi 0, %s77
    %s80 = sphi 0, %s79
    %s94 = sphi 0, %s80
    %s98 = sphi 0, %s98
    %s100 = sphi 0, %s98
    %s101 = sphi 0, %s100
    %s115 = sphi 0, %s101
    %s119 = sphi 0, %s119
    %s121 = sphi 0, %s119
    %s122 = sphi 0, %s121
    %s136 = sphi 0, %s122
    %s140 = sphi 0, %s140
    %s142 = sphi 0, %s140
    %s143 = sphi 0, %s142
    %s157 = sphi 0, %s143
    %s161 = sphi 0, %s161
    %s163 = sphi 0, %s161
    %s164 = sphi 0, %s163
    %s178 = sphi 0, %s164
    %s182 = sphi 0, %s182
    %s184 = sphi 0, %s182
    %s185 = sphi 0, %s184
    %s199 = sphi 0, %s185
    %s203 = sphi 0, %s203
    %s205 = sphi 0, %s203
    %s206 = sphi 0, %s205
    %s220 = sphi 0, %s206
    %s224 = sphi 0, %s224
    %s226 = sphi 0, %s224
    %s227 = sphi 0, %s226
    %s241 = sphi 0, %s227
    %s245 = sphi 0, %s245
    %s247 = sphi 0, %s245
    %s248 = sphi 0, %s247
    %s262 = sphi 0, %s248
    %s266 = sphi 0, %s266
    %s268 = sphi 0, %s266
    %s269 = sphi 0, %s268
    %s283 = sphi 0, %s269
    %s287 = sphi 0, %s287
    %s289 = sphi 0, %s287
    %s290 = sphi 0, %s289
    %s304 = sphi 0, %s290
    %s308 = sphi 0, %s308
    %s310 = sphi 0, %s308
    %s311 = sphi 0, %s310
    %s325 = sphi 0, %s311
    %s329 = sphi 0, %s329
    %s331 = sphi 0, %s329
    %s332 = sphi 0, %s331
    %s346 = sphi 0, %s332
    %s352 = sphi 0, %s354
    %s355 = sphi 0, %s352
    %s356 = sphi 0, %s355
    %s372 = sphi 0, %s356
    %s378 = sphi 0, %s380
    %s381 = sphi 0, %s378
    %s382 = sphi 0, %s381
    %s398 = sphi 0, %s382
  $region4: #{down_forward.1} parent=0 // loop_header_branch
    %25 = sbr.rel (%p23) target = $region8
  $region5: #{down_forward.1} parent=0 // loop_body
    %s27 = ssub.s32 %s22, 1
    %s28 = ssub.s32 %s22, 2
    %s29 = sadd.s32 %s22, 1
    %s30 = ssub.s32 %s22, %s29
    %p31 = scmp.eq.s32.totalorder %s30, 0
    %s33 = sadd.s32 %s32, 1
    %s34 = scalar_select %p31, %s32, %s33
    %p37 = pneg %p31
    %p38 = scmp.eq.s32.totalorder %s22, 1
    %p39 = por %p37, %p38
    %p40 = scmp.ne.s32.totalorder %s32, %s35
    %p41 = scmp.eq.s32.totalorder %s22, 0
    %p42 = por %p40, %p41
    %p43 = scmp.ne.s32.totalorder %s32, %s35
    %p44 = scmp.eq.s32.totalorder %s27, 1
    %p45 = por %p43, %p44
    %p46 = scmp.ne.s32.totalorder %s35, %s36
    %p47 = scmp.eq.s32.totalorder %s27, 0
    %p48 = por %p46, %p47
    %p49 = scmp.ne.s32.totalorder %s35, %s36
    %p50 = scmp.eq.s32.totalorder %s28, 1
    %p51 = por %p49, %p50
    %p53 = scmp.ne.s32.totalorder %s36, %s52
    %p54 = scmp.eq.s32.totalorder %s28, 0
    %p55 = por %p53, %p54
    %s57 = sadd.s32 %s56, 1
    %p60 = scmp.eq.s32.totalorder %s22, 1
    %p61 = scmp.ne.s32.totalorder %s56, %s58
    %p62 = scmp.eq.s32.totalorder %s22, 0
    %p63 = por %p61, %p62
    %p64 = scmp.ne.s32.totalorder %s56, %s58
    %p65 = scmp.eq.s32.totalorder %s27, 1
    %p66 = por %p64, %p65
    %p67 = scmp.ne.s32.totalorder %s58, %s59
    %p68 = scmp.eq.s32.totalorder %s27, 0
    %p69 = por %p67, %p68
    %p70 = scmp.ne.s32.totalorder %s58, %s59
    %p71 = scmp.eq.s32.totalorder %s28, 1
    %p72 = por %p70, %p71
    %p74 = scmp.ne.s32.totalorder %s59, %s73
    %p75 = scmp.eq.s32.totalorder %s28, 0
    %p76 = por %p74, %p75
    %s78 = sadd.s32 %s77, 1
    %p81 = scmp.eq.s32.totalorder %s22, 1
    %p82 = scmp.ne.s32.totalorder %s77, %s79
    %p83 = scmp.eq.s32.totalorder %s22, 0
    %p84 = por %p82, %p83
    %p85 = scmp.ne.s32.totalorder %s77, %s79
    %p86 = scmp.eq.s32.totalorder %s27, 1
    %p87 = por %p85, %p86
    %p88 = scmp.ne.s32.totalorder %s79, %s80
    %p89 = scmp.eq.s32.totalorder %s27, 0
    %p90 = por %p88, %p89
    %p91 = scmp.ne.s32.totalorder %s79, %s80
    %p92 = scmp.eq.s32.totalorder %s28, 1
    %p93 = por %p91, %p92
    %p95 = scmp.ne.s32.totalorder %s80, %s94
    %p96 = scmp.eq.s32.totalorder %s28, 0
    %p97 = por %p95, %p96
    %s99 = sadd.s32 %s98, 1
    %p102 = scmp.eq.s32.totalorder %s22, 1
    %p103 = scmp.ne.s32.totalorder %s98, %s100
    %p104 = scmp.eq.s32.totalorder %s22, 0
    %p105 = por %p103, %p104
    %p106 = scmp.ne.s32.totalorder %s98, %s100
    %p107 = scmp.eq.s32.totalorder %s27, 1
    %p108 = por %p106, %p107
    %p109 = scmp.ne.s32.totalorder %s100, %s101
    %p110 = scmp.eq.s32.totalorder %s27, 0
    %p111 = por %p109, %p110
    %p112 = scmp.ne.s32.totalorder %s100, %s101
    %p113 = scmp.eq.s32.totalorder %s28, 1
    %p114 = por %p112, %p113
    %p116 = scmp.ne.s32.totalorder %s101, %s115
    %p117 = scmp.eq.s32.totalorder %s28, 0
    %p118 = por %p116, %p117
    %s120 = sadd.s32 %s119, 1
    %p123 = scmp.eq.s32.totalorder %s22, 1
    %p124 = scmp.ne.s32.totalorder %s119, %s121
    %p125 = scmp.eq.s32.totalorder %s22, 0
    %p126 = por %p124, %p125
    %p127 = scmp.ne.s32.totalorder %s119, %s121
    %p128 = scmp.eq.s32.totalorder %s27, 1
    %p129 = por %p127, %p128
    %p130 = scmp.ne.s32.totalorder %s121, %s122
    %p131 = scmp.eq.s32.totalorder %s27, 0
    %p132 = por %p130, %p131
    %p133 = scmp.ne.s32.totalorder %s121, %s122
    %p134 = scmp.eq.s32.totalorder %s28, 1
    %p135 = por %p133, %p134
    %p137 = scmp.ne.s32.totalorder %s122, %s136
    %p138 = scmp.eq.s32.totalorder %s28, 0
    %p139 = por %p137, %p138
    %s141 = sadd.s32 %s140, 1
    %p144 = scmp.eq.s32.totalorder %s22, 1
    %p145 = scmp.ne.s32.totalorder %s140, %s142
    %p146 = scmp.eq.s32.totalorder %s22, 0
    %p147 = por %p145, %p146
    %p148 = scmp.ne.s32.totalorder %s140, %s142
    %p149 = scmp.eq.s32.totalorder %s27, 1
    %p150 = por %p148, %p149
    %p151 = scmp.ne.s32.totalorder %s142, %s143
    %p152 = scmp.eq.s32.totalorder %s27, 0
    %p153 = por %p151, %p152
    %p154 = scmp.ne.s32.totalorder %s142, %s143
    %p155 = scmp.eq.s32.totalorder %s28, 1
    %p156 = por %p154, %p155
    %p158 = scmp.ne.s32.totalorder %s143, %s157
    %p159 = scmp.eq.s32.totalorder %s28, 0
    %p160 = por %p158, %p159
    %s162 = sadd.s32 %s161, 1
    %p165 = scmp.eq.s32.totalorder %s22, 1
    %p166 = scmp.ne.s32.totalorder %s161, %s163
    %p167 = scmp.eq.s32.totalorder %s22, 0
    %p168 = por %p166, %p167
    %p169 = scmp.ne.s32.totalorder %s161, %s163
    %p170 = scmp.eq.s32.totalorder %s27, 1
    %p171 = por %p169, %p170
    %p172 = scmp.ne.s32.totalorder %s163, %s164
    %p173 = scmp.eq.s32.totalorder %s27, 0
    %p174 = por %p172, %p173
    %p175 = scmp.ne.s32.totalorder %s163, %s164
    %p176 = scmp.eq.s32.totalorder %s28, 1
    %p177 = por %p175, %p176
    %p179 = scmp.ne.s32.totalorder %s164, %s178
    %p180 = scmp.eq.s32.totalorder %s28, 0
    %p181 = por %p179, %p180
    %s183 = sadd.s32 %s182, 1
    %p186 = scmp.eq.s32.totalorder %s22, 1
    %p187 = scmp.ne.s32.totalorder %s182, %s184
    %p188 = scmp.eq.s32.totalorder %s22, 0
    %p189 = por %p187, %p188
    %p190 = scmp.ne.s32.totalorder %s182, %s184
    %p191 = scmp.eq.s32.totalorder %s27, 1
    %p192 = por %p190, %p191
    %p193 = scmp.ne.s32.totalorder %s184, %s185
    %p194 = scmp.eq.s32.totalorder %s27, 0
    %p195 = por %p193, %p194
    %p196 = scmp.ne.s32.totalorder %s184, %s185
    %p197 = scmp.eq.s32.totalorder %s28, 1
    %p198 = por %p196, %p197
    %p200 = scmp.ne.s32.totalorder %s185, %s199
    %p201 = scmp.eq.s32.totalorder %s28, 0
    %p202 = por %p200, %p201
    %s204 = sadd.s32 %s203, 1
    %p207 = scmp.eq.s32.totalorder %s22, 1
    %p208 = scmp.ne.s32.totalorder %s203, %s205
    %p209 = scmp.eq.s32.totalorder %s22, 0
    %p210 = por %p208, %p209
    %p211 = scmp.ne.s32.totalorder %s203, %s205
    %p212 = scmp.eq.s32.totalorder %s27, 1
    %p213 = por %p211, %p212
    %p214 = scmp.ne.s32.totalorder %s205, %s206
    %p215 = scmp.eq.s32.totalorder %s27, 0
    %p216 = por %p214, %p215
    %p217 = scmp.ne.s32.totalorder %s205, %s206
    %p218 = scmp.eq.s32.totalorder %s28, 1
    %p219 = por %p217, %p218
    %p221 = scmp.ne.s32.totalorder %s206, %s220
    %p222 = scmp.eq.s32.totalorder %s28, 0
    %p223 = por %p221, %p222
    %s225 = sadd.s32 %s224, 1
    %p228 = scmp.eq.s32.totalorder %s22, 1
    %p229 = scmp.ne.s32.totalorder %s224, %s226
    %p230 = scmp.eq.s32.totalorder %s22, 0
    %p231 = por %p229, %p230
    %p232 = scmp.ne.s32.totalorder %s224, %s226
    %p233 = scmp.eq.s32.totalorder %s27, 1
    %p234 = por %p232, %p233
    %p235 = scmp.ne.s32.totalorder %s226, %s227
    %p236 = scmp.eq.s32.totalorder %s27, 0
    %p237 = por %p235, %p236
    %p238 = scmp.ne.s32.totalorder %s226, %s227
    %p239 = scmp.eq.s32.totalorder %s28, 1
    %p240 = por %p238, %p239
    %p242 = scmp.ne.s32.totalorder %s227, %s241
    %p243 = scmp.eq.s32.totalorder %s28, 0
    %p244 = por %p242, %p243
    %s246 = sadd.s32 %s245, 1
    %p249 = scmp.eq.s32.totalorder %s22, 1
    %p250 = scmp.ne.s32.totalorder %s245, %s247
    %p251 = scmp.eq.s32.totalorder %s22, 0
    %p252 = por %p250, %p251
    %p253 = scmp.ne.s32.totalorder %s245, %s247
    %p254 = scmp.eq.s32.totalorder %s27, 1
    %p255 = por %p253, %p254
    %p256 = scmp.ne.s32.totalorder %s247, %s248
    %p257 = scmp.eq.s32.totalorder %s27, 0
    %p258 = por %p256, %p257
    %p259 = scmp.ne.s32.totalorder %s247, %s248
    %p260 = scmp.eq.s32.totalorder %s28, 1
    %p261 = por %p259, %p260
    %p263 = scmp.ne.s32.totalorder %s248, %s262
    %p264 = scmp.eq.s32.totalorder %s28, 0
    %p265 = por %p263, %p264
    %s267 = sadd.s32 %s266, 1
    %p270 = scmp.eq.s32.totalorder %s22, 1
    %p271 = scmp.ne.s32.totalorder %s266, %s268
    %p272 = scmp.eq.s32.totalorder %s22, 0
    %p273 = por %p271, %p272
    %p274 = scmp.ne.s32.totalorder %s266, %s268
    %p275 = scmp.eq.s32.totalorder %s27, 1
    %p276 = por %p274, %p275
    %p277 = scmp.ne.s32.totalorder %s268, %s269
    %p278 = scmp.eq.s32.totalorder %s27, 0
    %p279 = por %p277, %p278
    %p280 = scmp.ne.s32.totalorder %s268, %s269
    %p281 = scmp.eq.s32.totalorder %s28, 1
    %p282 = por %p280, %p281
    %p284 = scmp.ne.s32.totalorder %s269, %s283
    %p285 = scmp.eq.s32.totalorder %s28, 0
    %p286 = por %p284, %p285
    %s288 = sadd.s32 %s287, 1
    %p291 = scmp.eq.s32.totalorder %s22, 1
    %p292 = scmp.ne.s32.totalorder %s287, %s289
    %p293 = scmp.eq.s32.totalorder %s22, 0
    %p294 = por %p292, %p293
    %p295 = scmp.ne.s32.totalorder %s287, %s289
    %p296 = scmp.eq.s32.totalorder %s27, 1
    %p297 = por %p295, %p296
    %p298 = scmp.ne.s32.totalorder %s289, %s290
    %p299 = scmp.eq.s32.totalorder %s27, 0
    %p300 = por %p298, %p299
    %p301 = scmp.ne.s32.totalorder %s289, %s290
    %p302 = scmp.eq.s32.totalorder %s28, 1
    %p303 = por %p301, %p302
    %p305 = scmp.ne.s32.totalorder %s290, %s304
    %p306 = scmp.eq.s32.totalorder %s28, 0
    %p307 = por %p305, %p306
    %s309 = sadd.s32 %s308, 1
    %p312 = scmp.eq.s32.totalorder %s22, 1
    %p313 = scmp.ne.s32.totalorder %s308, %s310
    %p314 = scmp.eq.s32.totalorder %s22, 0
    %p315 = por %p313, %p314
    %p316 = scmp.ne.s32.totalorder %s308, %s310
    %p317 = scmp.eq.s32.totalorder %s27, 1
    %p318 = por %p316, %p317
    %p319 = scmp.ne.s32.totalorder %s310, %s311
    %p320 = scmp.eq.s32.totalorder %s27, 0
    %p321 = por %p319, %p320
    %p322 = scmp.ne.s32.totalorder %s310, %s311
    %p323 = scmp.eq.s32.totalorder %s28, 1
    %p324 = por %p322, %p323
    %p326 = scmp.ne.s32.totalorder %s311, %s325
    %p327 = scmp.eq.s32.totalorder %s28, 0
    %p328 = por %p326, %p327
    %s330 = sadd.s32 %s329, 1
    %p333 = scmp.eq.s32.totalorder %s22, 1
    %p334 = scmp.ne.s32.totalorder %s329, %s331
    %p335 = scmp.eq.s32.totalorder %s22, 0
    %p336 = por %p334, %p335
    %p337 = scmp.ne.s32.totalorder %s329, %s331
    %p338 = scmp.eq.s32.totalorder %s27, 1
    %p339 = por %p337, %p338
    %p340 = scmp.ne.s32.totalorder %s331, %s332
    %p341 = scmp.eq.s32.totalorder %s27, 0
    %p342 = por %p340, %p341
    %p343 = scmp.ne.s32.totalorder %s331, %s332
    %p344 = scmp.eq.s32.totalorder %s28, 1
    %p345 = por %p343, %p344
    %p347 = scmp.ne.s32.totalorder %s332, %s346
    %p348 = scmp.eq.s32.totalorder %s28, 0
    %p349 = por %p347, %p348
    %s350 = ssub.s32 %s22, %s29
    %p351 = scmp.eq.s32.totalorder %s350, 0
    %s353 = sadd.s32 %s352, 1
    %s354 = scalar_select %p351, %s352, %s353
    %p357 = pneg %p351
    %p358 = scmp.eq.s32.totalorder %s22, 1
    %p359 = por %p357, %p358
    %p360 = scmp.ne.s32.totalorder %s352, %s355
    %p361 = scmp.eq.s32.totalorder %s22, 0
    %p362 = por %p360, %p361
    %p363 = scmp.ne.s32.totalorder %s352, %s355
    %p364 = scmp.eq.s32.totalorder %s27, 1
    %p365 = por %p363, %p364
    %p366 = scmp.ne.s32.totalorder %s355, %s356
    %p367 = scmp.eq.s32.totalorder %s27, 0
    %p368 = por %p366, %p367
    %p369 = scmp.ne.s32.totalorder %s355, %s356
    %p370 = scmp.eq.s32.totalorder %s28, 1
    %p371 = por %p369, %p370
    %p373 = scmp.ne.s32.totalorder %s356, %s372
    %p374 = scmp.eq.s32.totalorder %s28, 0
    %p375 = por %p373, %p374
    %s376 = ssub.s32 %s22, %s29
    %p377 = scmp.eq.s32.totalorder %s376, 0
    %s379 = sadd.s32 %s378, 1
    %s380 = scalar_select %p377, %s378, %s379
    %p383 = pneg %p377
    %p384 = scmp.eq.s32.totalorder %s22, 1
    %p385 = por %p383, %p384
    %p386 = scmp.ne.s32.totalorder %s378, %s381
    %p387 = scmp.eq.s32.totalorder %s22, 0
    %p388 = por %p386, %p387
    %p389 = scmp.ne.s32.totalorder %s378, %s381
    %p390 = scmp.eq.s32.totalorder %s27, 1
    %p391 = por %p389, %p390
    %p392 = scmp.ne.s32.totalorder %s381, %s382
    %p393 = scmp.eq.s32.totalorder %s27, 0
    %p394 = por %p392, %p393
    %p395 = scmp.ne.s32.totalorder %s381, %s382
    %p396 = scmp.eq.s32.totalorder %s28, 1
    %p397 = por %p395, %p396
    %p399 = scmp.ne.s32.totalorder %s382, %s398
    %p400 = scmp.eq.s32.totalorder %s28, 0
    %p401 = por %p399, %p400
    %p402 = scmp.le.s32.totalorder 1, %s22
    %p403 = scmp.lt.s32.totalorder %s22, 3
    %p404 = pnand %p402, %p403
    %p405 = pneg %p404
    // Predicated region
    $region9: #{down_forward.1} parent=5 // pred_check
      _
    $region10: #{down_forward.1} parent=5 // pred_check_branch
      %407 = sbr.rel (%p404) target = $region12
    $region11: #{down_forward.1} parent=5 // pred_region
      %s408 = ssub.s32 %s22, 1
      // Predicated region
      $region13: #{down_forward.1} parent=11 // pred_check
        %p409 = pneg %p69
      $region14: #{down_forward.1} parent=11 // pred_check_branch
        %411 = sbr.rel (%p409) target = $region16
      $region15: #{down_forward.1} parent=11 // pred_region
        _
      $region16: #{down_forward.1} parent=11 // pred_fallthru
        _
      // Predicated region
      $region17: #{down_forward.1} parent=11 // pred_check
        %p412 = pneg %p90
      $region18: #{down_forward.1} parent=11 // pred_check_branch
        %414 = sbr.rel (%p412) target = $region20
      $region19: #{down_forward.1} parent=11 // pred_region
        _
      $region20: #{down_forward.1} parent=11 // pred_fallthru
        _
      // Predicated region
      $region21: #{down_forward.1} parent=11 // pred_check
        %p415 = pneg %p111
      $region22: #{down_forward.1} parent=11 // pred_check_branch
        %417 = sbr.rel (%p415) target = $region24
      $region23: #{down_forward.1} parent=11 // pred_region
        _
      $region24: #{down_forward.1} parent=11 // pred_fallthru
        _
      // Predicated region
      $region25: #{down_forward.1} parent=11 // pred_check
        %p418 = pneg %p132
      $region26: #{down_forward.1} parent=11 // pred_check_branch
        %420 = sbr.rel (%p418) target = $region28
      $region27: #{down_forward.1} parent=11 // pred_region
        _
      $region28: #{down_forward.1} parent=11 // pred_fallthru
        _
      // Predicated region
      $region29: #{down_forward.1} parent=11 // pred_check
        %p421 = pneg %p153
      $region30: #{down_forward.1} parent=11 // pred_check_branch
        %423 = sbr.rel (%p421) target = $region32
      $region31: #{down_forward.1} parent=11 // pred_region
        _
      $region32: #{down_forward.1} parent=11 // pred_fallthru
        _
      // Predicated region
      $region33: #{down_forward.1} parent=11 // pred_check
        %p424 = pneg %p174
      $region34: #{down_forward.1} parent=11 // pred_check_branch
        %426 = sbr.rel (%p424) target = $region36
      $region35: #{down_forward.1} parent=11 // pred_region
        _
      $region36: #{down_forward.1} parent=11 // pred_fallthru
        _
      // Predicated region
      $region37: #{down_forward.1} parent=11 // pred_check
        %p427 = pneg %p195
      $region38: #{down_forward.1} parent=11 // pred_check_branch
        %429 = sbr.rel (%p427) target = $region40
      $region39: #{down_forward.1} parent=11 // pred_region
        _
      $region40: #{down_forward.1} parent=11 // pred_fallthru
        _
      // Predicated region
      $region41: #{down_forward.1} parent=11 // pred_check
        %p430 = pneg %p216
      $region42: #{down_forward.1} parent=11 // pred_check_branch
        %432 = sbr.rel (%p430) target = $region44
      $region43: #{down_forward.1} parent=11 // pred_region
        _
      $region44: #{down_forward.1} parent=11 // pred_fallthru
        _
      // Predicated region
      $region45: #{down_forward.1} parent=11 // pred_check
        %p433 = pneg %p237
      $region46: #{down_forward.1} parent=11 // pred_check_branch
        %435 = sbr.rel (%p433) target = $region48
      $region47: #{down_forward.1} parent=11 // pred_region
        _
      $region48: #{down_forward.1} parent=11 // pred_fallthru
        _
      // Predicated region
      $region49: #{down_forward.1} parent=11 // pred_check
        %p436 = pneg %p258
      $region50: #{down_forward.1} parent=11 // pred_check_branch
        %438 = sbr.rel (%p436) target = $region52
      $region51: #{down_forward.1} parent=11 // pred_region
        _
      $region52: #{down_forward.1} parent=11 // pred_fallthru
        _
      // Predicated region
      $region53: #{down_forward.1} parent=11 // pred_check
        %p439 = pneg %p279
      $region54: #{down_forward.1} parent=11 // pred_check_branch
        %441 = sbr.rel (%p439) target = $region56
      $region55: #{down_forward.1} parent=11 // pred_region
        _
      $region56: #{down_forward.1} parent=11 // pred_fallthru
        _
      // Predicated region
      $region57: #{down_forward.1} parent=11 // pred_check
        %p442 = pneg %p300
      $region58: #{down_forward.1} parent=11 // pred_check_branch
        %444 = sbr.rel (%p442) target = $region60
      $region59: #{down_forward.1} parent=11 // pred_region
        _
      $region60: #{down_forward.1} parent=11 // pred_fallthru
        _
      // Predicated region
      $region61: #{down_forward.1} parent=11 // pred_check
        %p445 = pneg %p321
      $region62: #{down_forward.1} parent=11 // pred_check_branch
        %447 = sbr.rel (%p445) target = $region64
      $region63: #{down_forward.1} parent=11 // pred_region
        _
      $region64: #{down_forward.1} parent=11 // pred_fallthru
        _
      // Predicated region
      $region65: #{down_forward.1} parent=11 // pred_check
        %p448 = pneg %p342
      $region66: #{down_forward.1} parent=11 // pred_check_branch
        %450 = sbr.rel (%p448) target = $region68
      $region67: #{down_forward.1} parent=11 // pred_region
        _
      $region68: #{down_forward.1} parent=11 // pred_fallthru
        _
    $region12: #{down_forward.1} parent=5 // pred_fallthru
      _
    %p451 = scmp.lt.s32.totalorder %s22, 2
    // Predicated region
    $region69: #{down_forward.1} parent=5 // pred_check
      %p452 = pneg %p451
    $region70: #{down_forward.1} parent=5 // pred_check_branch
      %454 = sbr.rel (%p452) target = $region72
    $region71: #{down_forward.1} parent=5 // pred_region
      // Predicated region
      $region73: #{down_forward.1} parent=71 // pred_check
        %p455 = pneg %p42
      $region74: #{down_forward.1} parent=71 // pred_check_branch
        %457 = sbr.rel (%p455) target = $region76
      $region75: #{down_forward.1} parent=71 // pred_region
        %p458 = scmp.lt.s32.totalorder %s22, 1
        %s459 = scalar_select %p458, %s22, 1
        %s460 = smul.addr %s459, 8
        %s461 = smul.addr %s460, 4
        %s462 = scalar_lea.vmem %s0, %s461
      $region76: #{down_forward.1} parent=71 // pred_fallthru
        _
      // Predicated region
      $region77: #{down_forward.1} parent=71 // pred_check
        %p463 = pneg %p362
      $region78: #{down_forward.1} parent=71 // pred_check_branch
        %465 = sbr.rel (%p463) target = $region80
      $region79: #{down_forward.1} parent=71 // pred_region
        %p466 = scmp.lt.s32.totalorder %s22, 1
        %s467 = scalar_select %p466, %s22, 1
        %s468 = scalar_lea.vmem %s15, %s467
      $region80: #{down_forward.1} parent=71 // pred_fallthru
        _
    $region72: #{down_forward.1} parent=5 // pred_fallthru
      _
    %p469 = scmp.le.s32.totalorder 1, %s22
    %p470 = scmp.lt.s32.totalorder %s22, 3
    %p471 = pnand %p469, %p470
    %p472 = pneg %p471
    // Predicated region
    $region81: #{down_forward.1} parent=5 // pred_check
      _
    $region82: #{down_forward.1} parent=5 // pred_check_branch
      %474 = sbr.rel (%p471) target = $region84
    $region83: #{down_forward.1} parent=5 // pred_region
      %s475 = ssub.s32 %s22, 1
      %p476 = scmp.lt.s32.totalorder %s27, 1
      %s477 = scalar_select %p476, %s27, 1
      %s478 = smul.addr %s477, 8
      %s479 = smul.addr %s478, 4
      %s480 = scalar_lea.vmem %s0, %s479
      %p481 = pneg %p48
      %p482 = pneg %p45
      %p483 = pneg %p69
      %p484 = pneg %p66
      %p485 = pneg %p90
      %p486 = pneg %p87
      %p487 = pneg %p111
      %p488 = pneg %p108
      %p489 = pneg %p132
      %p490 = pneg %p129
      %p491 = pneg %p153
      %p492 = pneg %p150
      %p493 = pneg %p174
      %p494 = pneg %p171
      %p495 = pneg %p195
      %p496 = pneg %p192
      %p497 = pneg %p216
      %p498 = pneg %p213
      %p499 = pneg %p237
      %p500 = pneg %p234
      %p501 = pneg %p258
      %p502 = pneg %p255
      %p503 = pneg %p279
      %p504 = pneg %p276
      %p505 = pneg %p300
      %p506 = pneg %p297
      %p507 = pneg %p321
      %p508 = pneg %p318
      %p509 = pneg %p342
      %p510 = pneg %p339
      %p511 = scmp.lt.s32.totalorder %s27, 1
      %s512 = scalar_select %p511, %s27, 1
      %s513 = scalar_lea.vmem %s15, %s512
      %p514 = pneg %p368
      %p515 = pneg %p365
      %p516 = pneg %p394
      %p517 = pneg %p391
      %p518 = scmp.lt.s32.totalorder %s27, 1
      %s519 = scalar_select %p518, %s27, 1
      %s520 = smul.addr %s519, 8
      %s521 = smul.addr %s520, 8
      %s522 = scalar_lea.vmem %s16, %s521
      %p523 = scmp.lt.s32.totalorder %s27, 1
      %s524 = scalar_select %p523, %s27, 1
      %s525 = smul.addr %s524, 8
      %s526 = smul.addr %s525, 4
      %s527 = scalar_lea.vmem %s0, %s526
      %p528 = scmp.lt.s32.totalorder %s27, 1
      %s529 = scalar_select %p528, %s27, 1
      %s530 = scalar_lea.vmem %s15, %s529
      %p531 = scmp.lt.s32.totalorder %s27, 1
      %s532 = scalar_select %p531, %s27, 1
      %s533 = smul.addr %s532, 8
      %s534 = smul.addr %s533, 8
      %s535 = scalar_lea.vmem %s16, %s534
      %vm537 = vcmask 31744
      %538 = vst.msk [vmem:[#allocation2] sm:$0xff] %vm537, 0.0
      %vm539 = vcmask 25600
      %540 = vst.msk [vmem:[#allocation2 + $0x8] sm:$0x3] %vm539, 0.0
      %s541 = scalar_lea.vmem [#allocation2], 144
      %542 = vst.msk [vmem:[%s541] sm:$0xff] %vm537, 0.0
      %543 = vst.msk [vmem:[%s541 + $0x8] sm:$0x3] %vm539, 0.0
      %vm544 = vcmask 24576
      %545 = vst.msk [vmem:[#allocation2] sm:$0x1] %vm544, 0.0
      %546 = vst.msk [vmem:[#allocation2 + $0x10] sm:$0x1] %vm544, 0.0
      %547 = vst.msk [vmem:[#allocation2 + $0x20] sm:$0x1] %vm544, 0.0
      %548 = vst.msk [vmem:[#allocation2 + $0x30] sm:$0x1] %vm544, 0.0
      %549 = vst.msk [vmem:[#allocation2 + $0x40] sm:$0x1] %vm544, 0.0
      %550 = vst.msk [vmem:[#allocation2 + $0x50] sm:$0x1] %vm544, 0.0
      %551 = vst.msk [vmem:[#allocation2 + $0x60] sm:$0x1] %vm544, 0.0
      %552 = vst.msk [vmem:[#allocation2 + $0x70] sm:$0x1] %vm544, 0.0
      %553 = vst.msk [vmem:[#allocation2 + $0x80] sm:$0x1] %vm544, 0.0
      %554 = vst.msk [vmem:[#allocation2 + $0x90] sm:$0x1] %vm544, 0.0
      %555 = vst.msk [vmem:[#allocation2 + $0x9] sm:$0x1] %vm544, 0.0
      %556 = vst.msk [vmem:[#allocation2 + $0x19] sm:$0x1] %vm544, 0.0
      %557 = vst.msk [vmem:[#allocation2 + $0x29] sm:$0x1] %vm544, 0.0
      %558 = vst.msk [vmem:[#allocation2 + $0x39] sm:$0x1] %vm544, 0.0
      %559 = vst.msk [vmem:[#allocation2 + $0x49] sm:$0x1] %vm544, 0.0
      %560 = vst.msk [vmem:[#allocation2 + $0x59] sm:$0x1] %vm544, 0.0
      %561 = vst.msk [vmem:[#allocation2 + $0x69] sm:$0x1] %vm544, 0.0
      %562 = vst.msk [vmem:[#allocation2 + $0x79] sm:$0x1] %vm544, 0.0
      %563 = vst.msk [vmem:[#allocation2 + $0x89] sm:$0x1] %vm544, 0.0
      %564 = vst.msk [vmem:[#allocation2 + $0x99] sm:$0x1] %vm544, 0.0
      %vm565 = vcmask 64512
      %566 = vst.msk [vmem:[#allocation3] sm:$0xff] %vm565, 0.0
      %vm567 = vcmask 58368
      %568 = vst.msk [vmem:[#allocation3 + $0x8] sm:$0x3] %vm567, 0.0
      %s569 = scalar_lea.vmem [#allocation3], 144
      %570 = vst.msk [vmem:[%s569] sm:$0xff] %vm565, 0.0
      %571 = vst.msk [vmem:[%s569 + $0x8] sm:$0x3] %vm567, 0.0
      %vm572 = vcmask 57344
      %573 = vst.msk [vmem:[#allocation3] sm:$0x1] %vm572, 0.0
      %574 = vst.msk [vmem:[#allocation3 + $0x10] sm:$0x1] %vm572, 0.0
      %575 = vst.msk [vmem:[#allocation3 + $0x20] sm:$0x1] %vm572, 0.0
      %576 = vst.msk [vmem:[#allocation3 + $0x30] sm:$0x1] %vm572, 0.0
      %577 = vst.msk [vmem:[#allocation3 + $0x40] sm:$0x1] %vm572, 0.0
      %578 = vst.msk [vmem:[#allocation3 + $0x50] sm:$0x1] %vm572, 0.0
      %579 = vst.msk [vmem:[#allocation3 + $0x60] sm:$0x1] %vm572, 0.0
      %580 = vst.msk [vmem:[#allocation3 + $0x70] sm:$0x1] %vm572, 0.0
      %581 = vst.msk [vmem:[#allocation3 + $0x80] sm:$0x1] %vm572, 0.0
      %582 = vst.msk [vmem:[#allocation3 + $0x90] sm:$0x1] %vm572, 0.0
      %583 = vst.msk [vmem:[#allocation3 + $0x9] sm:$0x1] %vm572, 0.0
      %584 = vst.msk [vmem:[#allocation3 + $0x19] sm:$0x1] %vm572, 0.0
      %585 = vst.msk [vmem:[#allocation3 + $0x29] sm:$0x1] %vm572, 0.0
      %586 = vst.msk [vmem:[#allocation3 + $0x39] sm:$0x1] %vm572, 0.0
      %587 = vst.msk [vmem:[#allocation3 + $0x49] sm:$0x1] %vm572, 0.0
      %588 = vst.msk [vmem:[#allocation3 + $0x59] sm:$0x1] %vm572, 0.0
      %589 = vst.msk [vmem:[#allocation3 + $0x69] sm:$0x1] %vm572, 0.0
      %590 = vst.msk [vmem:[#allocation3 + $0x79] sm:$0x1] %vm572, 0.0
      %591 = vst.msk [vmem:[#allocation3 + $0x89] sm:$0x1] %vm572, 0.0
      %592 = vst.msk [vmem:[#allocation3 + $0x99] sm:$0x1] %vm572, 0.0
      %v593 = vld [vmem:[%s527] sm:$0xf]
      %v594 = vld [vmem:[%s527 + $0x4] sm:$0xf]
      %v595 = vld [vmem:[%s527 + $0x8] sm:$0xf]
      %v596 = vld [vmem:[%s527 + $0xc] sm:$0xf]
      %v597 = vld [vmem:[%s527 + $0x10] sm:$0xf]
      %v598 = vld [vmem:[%s527 + $0x14] sm:$0xf]
      %v599 = vld [vmem:[%s527 + $0x18] sm:$0xf]
      %v600 = vld [vmem:[%s527 + $0x1c] sm:$0xf]
      %v601 = vld [vmem:[%s1] sm:$0xf]
      %v602 = vld [vmem:[%s1 + $0x4] sm:$0xf]
      %v603 = vld [vmem:[%s2] sm:$0x1]
      %v605 = vlaneseq
      %v606 = vshrl.u32 %v605, 7
      %v607 = vsub.s32 0, %v606
      %v608 = vrot.slane %v603, %v607
      %v618 = vunpack.c.l.b16 %v593
      %v619 = vunpack.c.l.b16 %v594
      %v620 = vunpack.c.l.b16 %v595
      %v621 = vunpack.c.l.b16 %v596
      %v622 = vunpack.c.l.b16 %v597
      %v623 = vunpack.c.l.b16 %v598
      %v624 = vunpack.c.l.b16 %v599
      %v625 = vunpack.c.l.b16 %v600
      %v626 = vpack.c.b16 %v619, %v618
      %v627 = vpack.c.b16 %v621, %v620
      %v628 = vpack.c.b16 %v623, %v622
      %v629 = vpack.c.b16 %v625, %v624
      %v632 = vunpack.c.l.b16 %v601
      %v633 = vunpack.c.l.b16 %v602
      %v634 = vpack.c.b16 %v633, %v632
      %vm636 = vcmask 130048
      %v638 = vsel %vm636, %v626, 0
      %v641 = vsel %vm636, %v627, 0
      %v644 = vsel %vm636, %v628, 0
      %v647 = vsel %vm636, %v629, 0
      %649 = vmatprep.subr.bf16.mxu0 0
      %650 = vmatpush1.bf16.msra.mxu0 %v634
      %651 = vmatprep.subr.bf16.mxu0 0
      %652 = vmatpush1.bf16.msra.mxu0 0
      %653 = vmatprep.subr.bf16.mxu0 0
      %654 = vmatpush1.bf16.msra.mxu0 0
      %655 = vmatprep.subr.bf16.mxu0 0
      %656 = vmatpush1.bf16.msra.mxu0 0
      %657 = vmatprep.subr.bf16.mxu0 0
      %658 = vmatpush1.bf16.msra.mxu0 0
      %659 = vmatprep.subr.bf16.mxu0 0
      %660 = vmatpush1.bf16.msra.mxu0 0
      %661 = vmatprep.subr.bf16.mxu0 0
      %662 = vmatpush1.bf16.msra.mxu0 0
      %663 = vmatprep.subr.bf16.mxu0 0
      %664 = vmatpush1.bf16.msra.mxu0 0
      %665 = vmatprep.subr.bf16.mxu0 0
      %666 = vmatpush1.bf16.msra.mxu0 0
      %667 = vmatprep.subr.bf16.mxu0 0
      %668 = vmatpush1.bf16.msra.mxu0 0
      %669 = vmatprep.subr.bf16.mxu0 0
      %670 = vmatpush1.bf16.msra.mxu0 0
      %671 = vmatprep.subr.bf16.mxu0 0
      %672 = vmatpush1.bf16.msra.mxu0 0
      %673 = vmatprep.subr.bf16.mxu0 0
      %674 = vmatpush1.bf16.msra.mxu0 0
      %675 = vmatprep.subr.bf16.mxu0 0
      %676 = vmatpush1.bf16.msra.mxu0 0
      %677 = vmatprep.subr.bf16.mxu0 0
      %678 = vmatpush1.bf16.msra.mxu0 0
      %679 = vmatprep.subr.bf16.mxu0 0
      %680 = vmatpush1.bf16.msra.mxu0 0
      %681 = vmatprep.mubr.bf16.mxu0 0
      %682 = vmatmul.mubr.bf16.gmra.mrb[0].mxu0 %v638
      %v683 = vpop.f32.mrb[0].mxu0
      %v684 = vadd.f32 %v608, %v683
      %v685 = vpop.f32.mrb[0].mxu0
      %v686 = vpop.f32.mrb[0].mxu0
      %v687 = vadd.f32 %v608, %v686
      %v688 = vpop.f32.mrb[0].mxu0
      %689 = vmatprep.mubr.bf16.mxu0 0
      %690 = vmatmul.mubr.bf16.gmra.mrb[0].mxu0 %v641
      %v691 = vpop.f32.mrb[0].mxu0
      %v692 = vadd.f32 %v608, %v691
      %v693 = vpop.f32.mrb[0].mxu0
      %v694 = vpop.f32.mrb[0].mxu0
      %v695 = vadd.f32 %v608, %v694
      %v696 = vpop.f32.mrb[0].mxu0
      %697 = vmatprep.mubr.bf16.mxu0 0
      %698 = vmatmul.mubr.bf16.gmra.mrb[0].mxu0 %v644
      %v699 = vpop.f32.mrb[0].mxu0
      %v700 = vadd.f32 %v608, %v699
      %v701 = vpop.f32.mrb[0].mxu0
      %v702 = vpop.f32.mrb[0].mxu0
      %v703 = vadd.f32 %v608, %v702
      %v704 = vpop.f32.mrb[0].mxu0
      %705 = vmatprep.mubr.bf16.mxu0 0
      %706 = vmatmul.mubr.bf16.gmra.mrb[0].mxu0 %v647
      %v707 = vpop.f32.mrb[0].mxu0
      %v708 = vadd.f32 %v608, %v707
      %v709 = vpop.f32.mrb[0].mxu0
      %v710 = vpop.f32.mrb[0].mxu0
      %v711 = vadd.f32 %v608, %v710
      %v712 = vpop.f32.mrb[0].mxu0
      %713 = vdwg.mxu0
      %s714 = scalar_lea.vmem [#allocation2], 16
      %715 = vst.msk [vmem:[%s714 + $0x1] sm:$0xff] %vm537, %v684
      %716 = vst.msk [vmem:[%s714 + $0x11] sm:$0xff] %vm537, %v687
      %717 = vst.msk [vmem:[%s714 + $0x21] sm:$0xff] %vm537, %v692
      %718 = vst.msk [vmem:[%s714 + $0x31] sm:$0xff] %vm537, %v695
      %719 = vst.msk [vmem:[%s714 + $0x41] sm:$0xff] %vm537, %v700
      %720 = vst.msk [vmem:[%s714 + $0x51] sm:$0xff] %vm537, %v703
      %721 = vst.msk [vmem:[%s714 + $0x61] sm:$0xff] %vm537, %v708
      %722 = vst.msk [vmem:[%s714 + $0x71] sm:$0xff] %vm537, %v711
      %v723 = vld [vmem:[#allocation2] sm:$0xff]
      %v724 = vld [vmem:[#allocation2 + $0x10] sm:$0xff]
      %v725 = vld [vmem:[#allocation2 + $0x20] sm:$0xff]
      %v726 = vld [vmem:[#allocation2 + $0x30] sm:$0xff]
      %v727 = vld [vmem:[#allocation2 + $0x40] sm:$0xff]
      %v728 = vld [vmem:[#allocation2 + $0x50] sm:$0xff]
      %v729 = vld [vmem:[#allocation2 + $0x60] sm:$0xff]
      %v730 = vld [vmem:[#allocation2 + $0x70] sm:$0xff]
      %v731 = vpack.c.bf16 %v724, %v723
      %v732 = vpack.c.bf16 %v726, %v725
      %v733 = vpack.c.bf16 %v728, %v727
      %v734 = vpack.c.bf16 %v730, %v729
      %735 = vst.msk [vmem:[#allocation4] sm:$0xff] %vm537, %v731
      %736 = vst.msk [vmem:[#allocation4 + $0x8] sm:$0xff] %vm537, %v732
      %737 = vst.msk [vmem:[#allocation4 + $0x10] sm:$0xff] %vm537, %v733
      %738 = vst.msk [vmem:[#allocation4 + $0x18] sm:$0xff] %vm537, %v734
      %v739 = vld [vmem:[#allocation2 + $0x1] sm:$0xff]
      %v740 = vld [vmem:[#allocation2 + $0x11] sm:$0xff]
      %v741 = vld [vmem:[#allocation2 + $0x21] sm:$0xff]
      %v742 = vld [vmem:[#allocation2 + $0x31] sm:$0xff]
      %v743 = vld [vmem:[#allocation2 + $0x41] sm:$0xff]
      %v744 = vld [vmem:[#allocation2 + $0x51] sm:$0xff]
      %v745 = vld [vmem:[#allocation2 + $0x61] sm:$0xff]
      %v746 = vld [vmem:[#allocation2 + $0x71] sm:$0xff]
      %v747 = vpack.c.bf16 %v740, %v739
      %v748 = vpack.c.bf16 %v742, %v741
      %v749 = vpack.c.bf16 %v744, %v743
      %v750 = vpack.c.bf16 %v746, %v745
      %755 = vrot.lane.b32.xlu0 %v747, 4
      %v756 = vpop.permute.xlu0 %755
      %757 = vrot.lane.b32.xlu0 %v748, 4
      %v758 = vpop.permute.xlu0 %757
      %759 = vrot.lane.b32.xlu0 %v749, 4
      %v760 = vpop.permute.xlu0 %759
      %761 = vrot.lane.b32.xlu0 %v750, 4
      %v762 = vpop.permute.xlu0 %761
      %vm767 = vcmask 64544
      %768 = vst.msk [vmem:[#allocation4] sm:$0xff] %vm767, %v756
      %769 = vst.msk [vmem:[#allocation4 + $0x8] sm:$0xff] %vm767, %v758
      %770 = vst.msk [vmem:[#allocation4 + $0x10] sm:$0xff] %vm767, %v760
      %771 = vst.msk [vmem:[#allocation4 + $0x18] sm:$0xff] %vm767, %v762
      %v772 = vld [vmem:[#allocation2 + $0x2] sm:$0xff]
      %v773 = vld [vmem:[#allocation2 + $0x12] sm:$0xff]
      %v774 = vld [vmem:[#allocation2 + $0x22] sm:$0xff]
      %v775 = vld [vmem:[#allocation2 + $0x32] sm:$0xff]
      %v776 = vld [vmem:[#allocation2 + $0x42] sm:$0xff]
      %v777 = vld [vmem:[#allocation2 + $0x52] sm:$0xff]
      %v778 = vld [vmem:[#allocation2 + $0x62] sm:$0xff]
      %v779 = vld [vmem:[#allocation2 + $0x72] sm:$0xff]
      %v780 = vpack.c.bf16 %v773, %v772
      %v781 = vpack.c.bf16 %v775, %v774
      %v782 = vpack.c.bf16 %v777, %v776
      %v783 = vpack.c.bf16 %v779, %v778
      %788 = vrot.lane.b32.xlu0 %v780, 8
      %v789 = vpop.permute.xlu0 %788
      %790 = vrot.lane.b32.xlu0 %v781, 8
      %v791 = vpop.permute.xlu0 %790
      %792 = vrot.lane.b32.xlu0 %v782, 8
      %v793 = vpop.permute.xlu0 %792
      %794 = vrot.lane.b32.xlu0 %v783, 8
      %v795 = vpop.permute.xlu0 %794
      %vm800 = vcmask 97344
      %801 = vst.msk [vmem:[#allocation4] sm:$0xff] %vm800, %v789
      %802 = vst.msk [vmem:[#allocation4 + $0x8] sm:$0xff] %vm800, %v791
      %803 = vst.msk [vmem:[#allocation4 + $0x10] sm:$0xff] %vm800, %v793
      %804 = vst.msk [vmem:[#allocation4 + $0x18] sm:$0xff] %vm800, %v795
      %v805 = vld [vmem:[%s714] sm:$0xff]
      %v806 = vld [vmem:[%s714 + $0x10] sm:$0xff]
      %v807 = vld [vmem:[%s714 + $0x20] sm:$0xff]
      %v808 = vld [vmem:[%s714 + $0x30] sm:$0xff]
      %v809 = vld [vmem:[%s714 + $0x40] sm:$0xff]
      %v810 = vld [vmem:[%s714 + $0x50] sm:$0xff]
      %v811 = vld [vmem:[%s714 + $0x60] sm:$0xff]
      %v812 = vld [vmem:[%s714 + $0x70] sm:$0xff]
      %v813 = vpack.c.bf16 %v806, %v805
      %v814 = vpack.c.bf16 %v808, %v807
      %v815 = vpack.c.bf16 %v810, %v809
      %v816 = vpack.c.bf16 %v812, %v811
      %821 = vrot.lane.b32.xlu0 %v813, 12
      %v822 = vpop.permute.xlu0 %821
      %823 = vrot.lane.b32.xlu0 %v814, 12
      %v824 = vpop.permute.xlu0 %823
      %825 = vrot.lane.b32.xlu0 %v815, 12
      %v826 = vpop.permute.xlu0 %825
      %827 = vrot.lane.b32.xlu0 %v816, 12
      %v828 = vpop.permute.xlu0 %827
      %vm833 = vcmask 130144
      %834 = vst.msk [vmem:[#allocation4] sm:$0xff] %vm833, %v822
      %835 = vst.msk [vmem:[#allocation4 + $0x8] sm:$0xff] %vm833, %v824
      %836 = vst.msk [vmem:[#allocation4 + $0x10] sm:$0xff] %vm833, %v826
      %837 = vst.msk [vmem:[#allocation4 + $0x18] sm:$0xff] %vm833, %v828
      %v838 = vld [vmem:[%s714 + $0x1] sm:$0xff]
      %v839 = vld [vmem:[%s714 + $0x11] sm:$0xff]
      %v840 = vld [vmem:[%s714 + $0x21] sm:$0xff]
      %v841 = vld [vmem:[%s714 + $0x31] sm:$0xff]
      %v842 = vld [vmem:[%s714 + $0x41] sm:$0xff]
      %v843 = vld [vmem:[%s714 + $0x51] sm:$0xff]
      %v844 = vld [vmem:[%s714 + $0x61] sm:$0xff]
      %v845 = vld [vmem:[%s714 + $0x71] sm:$0xff]
      %v846 = vpack.c.bf16 %v839, %v838
      %v847 = vpack.c.bf16 %v841, %v840
      %v848 = vpack.c.bf16 %v843, %v842
      %v849 = vpack.c.bf16 %v845, %v844
      %854 = vrot.lane.b32.xlu0 %v846, 16
      %v855 = vpop.permute.xlu0 %854
      %856 = vrot.lane.b32.xlu0 %v847, 16
      %v857 = vpop.permute.xlu0 %856
      %858 = vrot.lane.b32.xlu0 %v848, 16
      %v859 = vpop.permute.xlu0 %858
      %860 = vrot.lane.b32.xlu0 %v849, 16
      %v861 = vpop.permute.xlu0 %860
      %vm866 = vcmask 162944
      %867 = vst.msk [vmem:[#allocation4] sm:$0xff] %vm866, %v855
      %868 = vst.msk [vmem:[#allocation4 + $0x8] sm:$0xff] %vm866, %v857
      %869 = vst.msk [vmem:[#allocation4 + $0x10] sm:$0xff] %vm866, %v859
      %870 = vst.msk [vmem:[#allocation4 + $0x18] sm:$0xff] %vm866, %v861
      %v871 = vld [vmem:[%s714 + $0x2] sm:$0xff]
      %v872 = vld [vmem:[%s714 + $0x12] sm:$0xff]
      %v873 = vld [vmem:[%s714 + $0x22] sm:$0xff]
      %v874 = vld [vmem:[%s714 + $0x32] sm:$0xff]
      %v875 = vld [vmem:[%s714 + $0x42] sm:$0xff]
      %v876 = vld [vmem:[%s714 + $0x52] sm:$0xff]
      %v877 = vld [vmem:[%s714 + $0x62] sm:$0xff]
      %v878 = vld [vmem:[%s714 + $0x72] sm:$0xff]
      %v879 = vpack.c.bf16 %v872, %v871
      %v880 = vpack.c.bf16 %v874, %v873
      %v881 = vpack.c.bf16 %v876, %v875
      %v882 = vpack.c.bf16 %v878, %v877
      %887 = vrot.lane.b32.xlu0 %v879, 20
      %v888 = vpop.permute.xlu0 %887
      %889 = vrot.lane.b32.xlu0 %v880, 20
      %v890 = vpop.permute.xlu0 %889
      %891 = vrot.lane.b32.xlu0 %v881, 20
      %v892 = vpop.permute.xlu0 %891
      %893 = vrot.lane.b32.xlu0 %v882, 20
      %v894 = vpop.permute.xlu0 %893
      %vm899 = vcmask 195744
      %900 = vst.msk [vmem:[#allocation4] sm:$0xff] %vm899, %v888
      %901 = vst.msk [vmem:[#allocation4 + $0x8] sm:$0xff] %vm899, %v890
      %902 = vst.msk [vmem:[#allocation4 + $0x10] sm:$0xff] %vm899, %v892
      %903 = vst.msk [vmem:[#allocation4 + $0x18] sm:$0xff] %vm899, %v894
      %s904 = scalar_lea.vmem [#allocation2], 32
      %v905 = vld [vmem:[%s904] sm:$0xff]
      %v906 = vld [vmem:[%s904 + $0x10] sm:$0xff]
      %v907 = vld [vmem:[%s904 + $0x20] sm:$0xff]
      %v908 = vld [vmem:[%s904 + $0x30] sm:$0xff]
      %v909 = vld [vmem:[%s904 + $0x40] sm:$0xff]
      %v910 = vld [vmem:[%s904 + $0x50] sm:$0xff]
      %v911 = vld [vmem:[%s904 + $0x60] sm:$0xff]
      %v912 = vld [vmem:[%s904 + $0x70] sm:$0xff]
      %v913 = vpack.c.bf16 %v906, %v905
      %v914 = vpack.c.bf16 %v908, %v907
      %v915 = vpack.c.bf16 %v910, %v909
      %v916 = vpack.c.bf16 %v912, %v911
      %921 = vrot.lane.b32.xlu0 %v913, 24
      %v922 = vpop.permute.xlu0 %921
      %923 = vrot.lane.b32.xlu0 %v914, 24
      %v924 = vpop.permute.xlu0 %923
      %925 = vrot.lane.b32.xlu0 %v915, 24
      %v926 = vpop.permute.xlu0 %925
      %927 = vrot.lane.b32.xlu0 %v916, 24
      %v928 = vpop.permute.xlu0 %927
      %vm933 = vcmask 228544
      %934 = vst.msk [vmem:[#allocation4] sm:$0xff] %vm933, %v922
      %935 = vst.msk [vmem:[#allocation4 + $0x8] sm:$0xff] %vm933, %v924
      %936 = vst.msk [vmem:[#allocation4 + $0x10] sm:$0xff] %vm933, %v926
      %937 = vst.msk [vmem:[#allocation4 + $0x18] sm:$0xff] %vm933, %v928
      %v938 = vld [vmem:[%s904 + $0x1] sm:$0xff]
      %v939 = vld [vmem:[%s904 + $0x11] sm:$0xff]
      %v940 = vld [vmem:[%s904 + $0x21] sm:$0xff]
      %v941 = vld [vmem:[%s904 + $0x31] sm:$0xff]
      %v942 = vld [vmem:[%s904 + $0x41] sm:$0xff]
      %v943 = vld [vmem:[%s904 + $0x51] sm:$0xff]
      %v944 = vld [vmem:[%s904 + $0x61] sm:$0xff]
      %v945 = vld [vmem:[%s904 + $0x71] sm:$0xff]
      %v946 = vpack.c.bf16 %v939, %v938
      %v947 = vpack.c.bf16 %v941, %v940
      %v948 = vpack.c.bf16 %v943, %v942
      %v949 = vpack.c.bf16 %v945, %v944
      %954 = vrot.lane.b32.xlu0 %v946, 28
      %v955 = vpop.permute.xlu0 %954
      %956 = vrot.lane.b32.xlu0 %v947, 28
      %v957 = vpop.permute.xlu0 %956
      %958 = vrot.lane.b32.xlu0 %v948, 28
      %v959 = vpop.permute.xlu0 %958
      %960 = vrot.lane.b32.xlu0 %v949, 28
      %v961 = vpop.permute.xlu0 %960
      %vm966 = vcmask 261344
      %967 = vst.msk [vmem:[#allocation4] sm:$0xff] %vm966, %v955
      %968 = vst.msk [vmem:[#allocation4 + $0x8] sm:$0xff] %vm966, %v957
      %969 = vst.msk [vmem:[#allocation4 + $0x10] sm:$0xff] %vm966, %v959
      %970 = vst.msk [vmem:[#allocation4 + $0x18] sm:$0xff] %vm966, %v961
      %v971 = vld [vmem:[%s904 + $0x2] sm:$0xff]
      %v972 = vld [vmem:[%s904 + $0x12] sm:$0xff]
      %v973 = vld [vmem:[%s904 + $0x22] sm:$0xff]
      %v974 = vld [vmem:[%s904 + $0x32] sm:$0xff]
      %v975 = vld [vmem:[%s904 + $0x42] sm:$0xff]
      %v976 = vld [vmem:[%s904 + $0x52] sm:$0xff]
      %v977 = vld [vmem:[%s904 + $0x62] sm:$0xff]
      %v978 = vld [vmem:[%s904 + $0x72] sm:$0xff]
      %v979 = vpack.c.bf16 %v972, %v971
      %v980 = vpack.c.bf16 %v974, %v973
      %v981 = vpack.c.bf16 %v976, %v975
      %v982 = vpack.c.bf16 %v978, %v977
      %987 = vrot.lane.b32.xlu0 %v979, 32
      %v988 = vpop.permute.xlu0 %987
      %989 = vrot.lane.b32.xlu0 %v980, 32
      %v990 = vpop.permute.xlu0 %989
      %991 = vrot.lane.b32.xlu0 %v981, 32
      %v992 = vpop.permute.xlu0 %991
      %993 = vrot.lane.b32.xlu0 %v982, 32
      %v994 = vpop.permute.xlu0 %993
      %vm999 = vcmask 294144
      %1000 = vst.msk [vmem:[#allocation4] sm:$0xff] %vm999, %v988
      %1001 = vst.msk [vmem:[#allocation4 + $0x8] sm:$0xff] %vm999, %v990
      %1002 = vst.msk [vmem:[#allocation4 + $0x10] sm:$0xff] %vm999, %v992
      %1003 = vst.msk [vmem:[#allocation4 + $0x18] sm:$0xff] %vm999, %v994
      %v1004 = vld [vmem:[#allocation4] sm:$0xff]
      %v1005 = vld [vmem:[#allocation4 + $0x8] sm:$0xff]
      %v1006 = vld [vmem:[#allocation4 + $0x10] sm:$0xff]
      %v1007 = vld [vmem:[#allocation4 + $0x18] sm:$0xff]
      %v1008 = vld [vmem:[%s3] sm:$0xf]
      %v1009 = vld [vmem:[%s3 + $0x4] sm:$0xf]
      %v1010 = vld [vmem:[%s3 + $0x8] sm:$0xf]
      %v1011 = vld [vmem:[%s3 + $0xc] sm:$0xf]
      %v1012 = vld [vmem:[%s3 + $0x10] sm:$0x3]
      %v1018 = vunpack.c.l.b16 %v1008
      %v1019 = vunpack.c.l.b16 %v1009
      %v1020 = vunpack.c.l.b16 %v1010
      %v1021 = vunpack.c.l.b16 %v1011
      %v1022 = vunpack.c.l.b16 %v1012
      %v1023 = vpack.c.b16 %v1019, %v1018
      %v1024 = vpack.c.b16 %v1021, %v1020
      %v1025 = vpack.c.b16 %v1022, %v1022
      %vm1028 = vcmask 293888
      %v1030 = vsel %vm1028, %v1004, 0
      %v1033 = vsel %vm1028, %v1005, 0
      %v1036 = vsel %vm1028, %v1006, 0
      %v1039 = vsel %vm1028, %v1007, 0
      %vm1041 = vcmask 1041408
      %v1043 = vsel %vm1041, %v1025, 0
      %1045 = vmatprep.subr.bf16.mxu0 0
      %1046 = vmatpush1.bf16.msra.mxu0 %v1023
      %1047 = vmatprep.subr.bf16.mxu0 0
      %1048 = vmatpush1.bf16.msra.mxu0 %v1024
      %1049 = vmatprep.subr.bf16.mxu0 0
      %1050 = vmatpush1.bf16.msra.mxu0 %v1043
      %1051 = vmatprep.subr.bf16.mxu0 0
      %1052 = vmatpush1.bf16.msra.mxu0 0
      %1053 = vmatprep.subr.bf16.mxu0 0
      %1054 = vmatpush1.bf16.msra.mxu0 0
      %1055 = vmatprep.subr.bf16.mxu0 0
      %1056 = vmatpush1.bf16.msra.mxu0 0
      %1057 = vmatprep.subr.bf16.mxu0 0
      %1058 = vmatpush1.bf16.msra.mxu0 0
      %1059 = vmatprep.subr.bf16.mxu0 0
      %1060 = vmatpush1.bf16.msra.mxu0 0
      %1061 = vmatprep.subr.bf16.mxu0 0
      %1062 = vmatpush1.bf16.msra.mxu0 0
      %1063 = vmatprep.subr.bf16.mxu0 0
      %1064 = vmatpush1.bf16.msra.mxu0 0
      %1065 = vmatprep.subr.bf16.mxu0 0
      %1066 = vmatpush1.bf16.msra.mxu0 0
      %1067 = vmatprep.subr.bf16.mxu0 0
      %1068 = vmatpush1.bf16.msra.mxu0 0
      %1069 = vmatprep.subr.bf16.mxu0 0
      %1070 = vmatpush1.bf16.msra.mxu0 0
      %1071 = vmatprep.subr.bf16.mxu0 0
      %1072 = vmatpush1.bf16.msra.mxu0 0
      %1073 = vmatprep.subr.bf16.mxu0 0
      %1074 = vmatpush1.bf16.msra.mxu0 0
      %1075 = vmatprep.subr.bf16.mxu0 0
      %1076 = vmatpush1.bf16.msra.mxu0 0
      %1077 = vmatprep.mubr.bf16.mxu0 0
      %1078 = vmatmul.mubr.bf16.gmra.mrb[0].mxu0 %v1030
      %v1079 = vpop.f32.mrb[0].mxu0
      %v1080 = vadd.f32 0.0, %v1079
      %v1081 = vpop.f32.mrb[0].mxu0
      %v1082 = vpop.f32.mrb[0].mxu0
      %v1083 = vadd.f32 0.0, %v1082
      %v1084 = vpop.f32.mrb[0].mxu0
      %1085 = vmatprep.mubr.bf16.mxu0 0
      %1086 = vmatmul.mubr.bf16.gmra.mrb[0].mxu0 %v1033
      %v1087 = vpop.f32.mrb[0].mxu0
      %v1088 = vadd.f32 0.0, %v1087
      %v1089 = vpop.f32.mrb[0].mxu0
      %v1090 = vpop.f32.mrb[0].mxu0
      %v1091 = vadd.f32 0.0, %v1090
      %v1092 = vpop.f32.mrb[0].mxu0
      %1093 = vmatprep.mubr.bf16.mxu0 0
      %1094 = vmatmul.mubr.bf16.gmra.mrb[0].mxu0 %v1036
      %v1095 = vpop.f32.mrb[0].mxu0
      %v1096 = vadd.f32 0.0, %v1095
      %v1097 = vpop.f32.mrb[0].mxu0
      %v1098 = vpop.f32.mrb[0].mxu0
      %v1099 = vadd.f32 0.0, %v1098
      %v1100 = vpop.f32.mrb[0].mxu0
      %1101 = vmatprep.mubr.bf16.mxu0 0
      %1102 = vmatmul.mubr.bf16.gmra.mrb[0].mxu0 %v1039
      %v1103 = vpop.f32.mrb[0].mxu0
      %v1104 = vadd.f32 0.0, %v1103
      %v1105 = vpop.f32.mrb[0].mxu0
      %v1106 = vpop.f32.mrb[0].mxu0
      %v1107 = vadd.f32 0.0, %v1106
      %v1108 = vpop.f32.mrb[0].mxu0
      %1109 = vdwg.mxu0
      %v1110 = vsel %vm537, %v1080, 0.0
      %v1111 = vsel %vm537, %v1083, 0.0
      %v1112 = vadd.f32 %v1110, %v1111
      %v1113 = vsel %vm537, %v1088, 0.0
      %v1114 = vadd.f32 %v1112, %v1113
      %v1115 = vsel %vm537, %v1091, 0.0
      %v1116 = vadd.f32 %v1114, %v1115
      %v1117 = vsel %vm537, %v1096, 0.0
      %v1118 = vadd.f32 %v1116, %v1117
      %v1119 = vsel %vm537, %v1099, 0.0
      %v1120 = vadd.f32 %v1118, %v1119
      %v1121 = vsel %vm537, %v1104, 0.0
      %v1122 = vadd.f32 %v1120, %v1121
      %v1123 = vsel %vm537, %v1107, 0.0
      %v1124 = vadd.f32 %v1122, %v1123
      %1125 = vadd.xlane.f32.xlu0 %v1124
      %v1126 = vpop.xlane.xlu0 %1125
      %v1127 = vrot.slane %v1126, 4
      %v1128 = vadd.f32 %v1126, %v1127
      %v1129 = vrot.slane %v1128, 2
      %v1130 = vadd.f32 %v1128, %v1129
      %v1131 = vrot.slane %v1130, 1
      %v1132 = vadd.f32 %v1130, %v1131
      %s1133 = vtos %v1132
      %v1134 = vmul.f32 %v1080, %v1080
      %v1135 = vmul.f32 %v1083, %v1083
      %v1136 = vmul.f32 %v1088, %v1088
      %v1137 = vmul.f32 %v1091, %v1091
      %v1138 = vmul.f32 %v1096, %v1096
      %v1139 = vmul.f32 %v1099, %v1099
      %v1140 = vmul.f32 %v1104, %v1104
      %v1141 = vmul.f32 %v1107, %v1107
      %v1142 = vsel %vm537, %v1134, 0.0
      %v1143 = vsel %vm537, %v1135, 0.0
      %v1144 = vadd.f32 %v1142, %v1143
      %v1145 = vsel %vm537, %v1136, 0.0
      %v1146 = vadd.f32 %v1144, %v1145
      %v1147 = vsel %vm537, %v1137, 0.0
      %v1148 = vadd.f32 %v1146, %v1147
      %v1149 = vsel %vm537, %v1138, 0.0
      %v1150 = vadd.f32 %v1148, %v1149
      %v1151 = vsel %vm537, %v1139, 0.0
      %v1152 = vadd.f32 %v1150, %v1151
      %v1153 = vsel %vm537, %v1140, 0.0
      %v1154 = vadd.f32 %v1152, %v1153
      %v1155 = vsel %vm537, %v1141, 0.0
      %v1156 = vadd.f32 %v1154, %v1155
      %1157 = vadd.xlane.f32.xlu0 %v1156
      %v1158 = vpop.xlane.xlu0 %1157
      %v1159 = vrot.slane %v1158, 4
      %v1160 = vadd.f32 %v1158, %v1159
      %v1161 = vrot.slane %v1160, 2
      %v1162 = vadd.f32 %v1160, %v1161
      %v1163 = vrot.slane %v1162, 1
      %v1164 = vadd.f32 %v1162, %v1163
      %s1165 = vtos %v1164
      %v1166 = vrcp.pop 256.0
      %s1167 = vtos %v1166
      %s1168 = smul.f32 %s1133, %s1167
      %v1169 = vrcp.pop 256.0
      %s1170 = vtos %v1169
      %s1171 = smul.f32 %s1165, %s1170
      %s1172 = smul.f32 %s1168, %s1168
      %s1173 = ssub.f32 %s1171, %s1172
      %s1174 = smax.f32 %s1173, 0.0
      %s1175 = sadd.f32 %s1174, 1e-05
      %v1176 = vstv %s1175
      %v1177 = vrsqrt.pop %v1176
      %s1178 = vtos %v1177
      %v1179 = vstv %s1168
      %v1180 = vsub.f32 %v1080, %v1179
      %v1181 = vsub.f32 %v1083, %v1179
      %v1182 = vsub.f32 %v1088, %v1179
      %v1183 = vsub.f32 %v1091, %v1179
      %v1184 = vsub.f32 %v1096, %v1179
      %v1185 = vsub.f32 %v1099, %v1179
      %v1186 = vsub.f32 %v1104, %v1179
      %v1187 = vsub.f32 %v1107, %v1179
      %v1188 = vstv %s1178
      %v1189 = vmul.f32 %v1180, %v1188
      %v1190 = vmul.f32 %v1181, %v1188
      %v1191 = vmul.f32 %v1182, %v1188
      %v1192 = vmul.f32 %v1183, %v1188
      %v1193 = vmul.f32 %v1184, %v1188
      %v1194 = vmul.f32 %v1185, %v1188
      %v1195 = vmul.f32 %v1186, %v1188
      %v1196 = vmul.f32 %v1187, %v1188
      %v1197 = vld [vmem:[%s4] sm:$0x1]
      %v1199 = vlaneseq
      %v1200 = vshrl.u32 %v1199, 7
      %v1201 = vsub.s32 0, %v1200
      %v1202 = vrot.slane %v1197, %v1201
      %v1204 = vmul.f32 %v1189, %v1202
      %v1205 = vmul.f32 %v1190, %v1202
      %v1206 = vmul.f32 %v1191, %v1202
      %v1207 = vmul.f32 %v1192, %v1202
      %v1208 = vmul.f32 %v1193, %v1202
      %v1209 = vmul.f32 %v1194, %v1202
      %v1210 = vmul.f32 %v1195, %v1202
      %v1211 = vmul.f32 %v1196, %v1202
      %v1212 = vld [vmem:[%s5] sm:$0x1]
      %v1214 = vlaneseq
      %v1215 = vshrl.u32 %v1214, 7
      %v1216 = vsub.s32 0, %v1215
      %v1217 = vrot.slane %v1212, %v1216
      %v1219 = vadd.f32 %v1204, %v1217
      %v1220 = vadd.f32 %v1205, %v1217
      %v1221 = vadd.f32 %v1206, %v1217
      %v1222 = vadd.f32 %v1207, %v1217
      %v1223 = vadd.f32 %v1208, %v1217
      %v1224 = vadd.f32 %v1209, %v1217
      %v1225 = vadd.f32 %v1210, %v1217
      %v1226 = vadd.f32 %v1211, %v1217
      %v1227 = vmul.f32 %v1219, 0.5
      %v1228 = vmul.f32 %v1220, 0.5
      %v1229 = vmul.f32 %v1221, 0.5
      %v1230 = vmul.f32 %v1222, 0.5
      %v1231 = vmul.f32 %v1223, 0.5
      %v1232 = vmul.f32 %v1224, 0.5
      %v1233 = vmul.f32 %v1225, 0.5
      %v1234 = vmul.f32 %v1226, 0.5
      %v1235 = vmul.f32 %v1219, 0.044715
      %v1236 = vmul.f32 %v1220, 0.044715
      %v1237 = vmul.f32 %v1221, 0.044715
      %v1238 = vmul.f32 %v1222, 0.044715
      %v1239 = vmul.f32 %v1223, 0.044715
      %v1240 = vmul.f32 %v1224, 0.044715
      %v1241 = vmul.f32 %v1225, 0.044715
      %v1242 = vmul.f32 %v1226, 0.044715
      %v1243 = vmul.f32 %v1235, %v1219
      %v1244 = vmul.f32 %v1236, %v1220
      %v1245 = vmul.f32 %v1237, %v1221
      %v1246 = vmul.f32 %v1238, %v1222
      %v1247 = vmul.f32 %v1239, %v1223
      %v1248 = vmul.f32 %v1240, %v1224
      %v1249 = vmul.f32 %v1241, %v1225
      %v1250 = vmul.f32 %v1242, %v1226
      %v1251 = vmul.f32 %v1243, %v1219
      %v1252 = vmul.f32 %v1244, %v1220
      %v1253 = vmul.f32 %v1245, %v1221
      %v1254 = vmul.f32 %v1246, %v1222
      %v1255 = vmul.f32 %v1247, %v1223
      %v1256 = vmul.f32 %v1248, %v1224
      %v1257 = vmul.f32 %v1249, %v1225
      %v1258 = vmul.f32 %v1250, %v1226
      %v1259 = vadd.f32 %v1219, %v1251
      %v1260 = vadd.f32 %v1220, %v1252
      %v1261 = vadd.f32 %v1221, %v1253
      %v1262 = vadd.f32 %v1222, %v1254
      %v1263 = vadd.f32 %v1223, %v1255
      %v1264 = vadd.f32 %v1224, %v1256
      %v1265 = vadd.f32 %v1225, %v1257
      %v1266 = vadd.f32 %v1226, %v1258
      %v1267 = vmul.f32 %v1259, 0.7978846
      %v1268 = vmul.f32 %v1260, 0.7978846
      %v1269 = vmul.f32 %v1261, 0.7978846
      %v1270 = vmul.f32 %v1262, 0.7978846
      %v1271 = vmul.f32 %v1263, 0.7978846
      %v1272 = vmul.f32 %v1264, 0.7978846
      %v1273 = vmul.f32 %v1265, 0.7978846
      %v1274 = vmul.f32 %v1266, 0.7978846
      %v1275 = vtanh.pop %v1267
      %v1276 = vtanh.pop %v1268
      %v1277 = vtanh.pop %v1269
      %v1278 = vtanh.pop %v1270
      %v1279 = vtanh.pop %v1271
      %v1280 = vtanh.pop %v1272
      %v1281 = vtanh.pop %v1273
      %v1282 = vtanh.pop %v1274
      %v1283 = vadd.f32 %v1275, 1.0
      %v1284 = vadd.f32 %v1276, 1.0
      %v1285 = vadd.f32 %v1277, 1.0
      %v1286 = vadd.f32 %v1278, 1.0
      %v1287 = vadd.f32 %v1279, 1.0
      %v1288 = vadd.f32 %v1280, 1.0
      %v1289 = vadd.f32 %v1281, 1.0
      %v1290 = vadd.f32 %v1282, 1.0
      %v1291 = vmul.f32 %v1227, %v1283
      %v1292 = vmul.f32 %v1228, %v1284
      %v1293 = vmul.f32 %v1229, %v1285
      %v1294 = vmul.f32 %v1230, %v1286
      %v1295 = vmul.f32 %v1231, %v1287
      %v1296 = vmul.f32 %v1232, %v1288
      %v1297 = vmul.f32 %v1233, %v1289
      %v1298 = vmul.f32 %v1234, %v1290
      %1299 = vst.msk [vmem:[%s714 + $0x1] sm:$0xff] %vm537, %v1291
      %1300 = vst.msk [vmem:[%s714 + $0x11] sm:$0xff] %vm537, %v1292
      %1301 = vst.msk [vmem:[%s714 + $0x21] sm:$0xff] %vm537, %v1293
      %1302 = vst.msk [vmem:[%s714 + $0x31] sm:$0xff] %vm537, %v1294
      %1303 = vst.msk [vmem:[%s714 + $0x41] sm:$0xff] %vm537, %v1295
      %1304 = vst.msk [vmem:[%s714 + $0x51] sm:$0xff] %vm537, %v1296
      %1305 = vst.msk [vmem:[%s714 + $0x61] sm:$0xff] %vm537, %v1297
      %1306 = vst.msk [vmem:[%s714 + $0x71] sm:$0xff] %vm537, %v1298
      %v1307 = vld [vmem:[#allocation2] sm:$0xff]
      %v1308 = vld [vmem:[#allocation2 + $0x10] sm:$0xff]
      %v1309 = vld [vmem:[#allocation2 + $0x20] sm:$0xff]
      %v1310 = vld [vmem:[#allocation2 + $0x30] sm:$0xff]
      %v1311 = vld [vmem:[#allocation2 + $0x40] sm:$0xff]
      %v1312 = vld [vmem:[#allocation2 + $0x50] sm:$0xff]
      %v1313 = vld [vmem:[#allocation2 + $0x60] sm:$0xff]
      %v1314 = vld [vmem:[#allocation2 + $0x70] sm:$0xff]
      %v1315 = vpack.c.bf16 %v1308, %v1307
      %v1316 = vpack.c.bf16 %v1310, %v1309
      %v1317 = vpack.c.bf16 %v1312, %v1311
      %v1318 = vpack.c.bf16 %v1314, %v1313
      %1319 = vst.msk [vmem:[#allocation4] sm:$0xff] %vm537, %v1315
      %1320 = vst.msk [vmem:[#allocation4 + $0x8] sm:$0xff] %vm537, %v1316
      %1321 = vst.msk [vmem:[#allocation4 + $0x10] sm:$0xff] %vm537, %v1317
      %1322 = vst.msk [vmem:[#allocation4 + $0x18] sm:$0xff] %vm537, %v1318
      %v1323 = vld [vmem:[#allocation2 + $0x1] sm:$0xff]
      %v1324 = vld [vmem:[#allocation2 + $0x11] sm:$0xff]
      %v1325 = vld [vmem:[#allocation2 + $0x21] sm:$0xff]
      %v1326 = vld [vmem:[#allocation2 + $0x31] sm:$0xff]
      %v1327 = vld [vmem:[#allocation2 + $0x41] sm:$0xff]
      %v1328 = vld [vmem:[#allocation2 + $0x51] sm:$0xff]
      %v1329 = vld [vmem:[#allocation2 + $0x61] sm:$0xff]
      %v1330 = vld [vmem:[#allocation2 + $0x71] sm:$0xff]
      %v1331 = vpack.c.bf16 %v1324, %v1323
      %v1332 = vpack.c.bf16 %v1326, %v1325
      %v1333 = vpack.c.bf16 %v1328, %v1327
      %v1334 = vpack.c.bf16 %v1330, %v1329
      %1339 = vrot.lane.b32.xlu0 %v1331, 4
      %v1340 = vpop.permute.xlu0 %1339
      %1341 = vrot.lane.b32.xlu0 %v1332, 4
      %v1342 = vpop.permute.xlu0 %1341
      %1343 = vrot.lane.b32.xlu0 %v1333, 4
      %v1344 = vpop.permute.xlu0 %1343
      %1345 = vrot.lane.b32.xlu0 %v1334, 4
      %v1346 = vpop.permute.xlu0 %1345
      %1351 = vst.msk [vmem:[#allocation4] sm:$0xff] %vm767, %v1340
      %1352 = vst.msk [vmem:[#allocation4 + $0x8] sm:$0xff] %vm767, %v1342
      %1353 = vst.msk [vmem:[#allocation4 + $0x10] sm:$0xff] %vm767, %v1344
      %1354 = vst.msk [vmem:[#allocation4 + $0x18] sm:$0xff] %vm767, %v1346
      %v1355 = vld [vmem:[#allocation2 + $0x2] sm:$0xff]
      %v1356 = vld [vmem:[#allocation2 + $0x12] sm:$0xff]
      %v1357 = vld [vmem:[#allocation2 + $0x22] sm:$0xff]
      %v1358 = vld [vmem:[#allocation2 + $0x32] sm:$0xff]
      %v1359 = vld [vmem:[#allocation2 + $0x42] sm:$0xff]
      %v1360 = vld [vmem:[#allocation2 + $0x52] sm:$0xff]
      %v1361 = vld [vmem:[#allocation2 + $0x62] sm:$0xff]
      %v1362 = vld [vmem:[#allocation2 + $0x72] sm:$0xff]
      %v1363 = vpack.c.bf16 %v1356, %v1355
      %v1364 = vpack.c.bf16 %v1358, %v1357
      %v1365 = vpack.c.bf16 %v1360, %v1359
      %v1366 = vpack.c.bf16 %v1362, %v1361
      %1371 = vrot.lane.b32.xlu0 %v1363, 8
      %v1372 = vpop.permute.xlu0 %1371
      %1373 = vrot.lane.b32.xlu0 %v1364, 8
      %v1374 = vpop.permute.xlu0 %1373
      %1375 = vrot.lane.b32.xlu0 %v1365, 8
      %v1376 = vpop.permute.xlu0 %1375
      %1377 = vrot.lane.b32.xlu0 %v1366, 8
      %v1378 = vpop.permute.xlu0 %1377
      %1383 = vst.msk [vmem:[#allocation4] sm:$0xff] %vm800, %v1372
      %1384 = vst.msk [vmem:[#allocation4 + $0x8] sm:$0xff] %vm800, %v1374
      %1385 = vst.msk [vmem:[#allocation4 + $0x10] sm:$0xff] %vm800, %v1376
      %1386 = vst.msk [vmem:[#allocation4 + $0x18] sm:$0xff] %vm800, %v1378
      %v1387 = vld [vmem:[%s714] sm:$0xff]
      %v1388 = vld [vmem:[%s714 + $0x10] sm:$0xff]
      %v1389 = vld [vmem:[%s714 + $0x20] sm:$0xff]
      %v1390 = vld [vmem:[%s714 + $0x30] sm:$0xff]
      %v1391 = vld [vmem:[%s714 + $0x40] sm:$0xff]
      %v1392 = vld [vmem:[%s714 + $0x50] sm:$0xff]
      %v1393 = vld [vmem:[%s714 + $0x60] sm:$0xff]
      %v1394 = vld [vmem:[%s714 + $0x70] sm:$0xff]
      %v1395 = vpack.c.bf16 %v1388, %v1387
      %v1396 = vpack.c.bf16 %v1390, %v1389
      %v1397 = vpack.c.bf16 %v1392, %v1391
      %v1398 = vpack.c.bf16 %v1394, %v1393
      %1403 = vrot.lane.b32.xlu0 %v1395, 12
      %v1404 = vpop.permute.xlu0 %1403
      %1405 = vrot.lane.b32.xlu0 %v1396, 12
      %v1406 = vpop.permute.xlu0 %1405
      %1407 = vrot.lane.b32.xlu0 %v1397, 12
      %v1408 = vpop.permute.xlu0 %1407
      %1409 = vrot.lane.b32.xlu0 %v1398, 12
      %v1410 = vpop.permute.xlu0 %1409
      %1415 = vst.msk [vmem:[#allocation4] sm:$0xff] %vm833, %v1404
      %1416 = vst.msk [vmem:[#allocation4 + $0x8] sm:$0xff] %vm833, %v1406
      %1417 = vst.msk [vmem:[#allocation4 + $0x10] sm:$0xff] %vm833, %v1408
      %1418 = vst.msk [vmem:[#allocation4 + $0x18] sm:$0xff] %vm833, %v1410
      %v1419 = vld [vmem:[%s714 + $0x1] sm:$0xff]
      %v1420 = vld [vmem:[%s714 + $0x11] sm:$0xff]
      %v1421 = vld [vmem:[%s714 + $0x21] sm:$0xff]
      %v1422 = vld [vmem:[%s714 + $0x31] sm:$0xff]
      %v1423 = vld [vmem:[%s714 + $0x41] sm:$0xff]
      %v1424 = vld [vmem:[%s714 + $0x51] sm:$0xff]
      %v1425 = vld [vmem:[%s714 + $0x61] sm:$0xff]
      %v1426 = vld [vmem:[%s714 + $0x71] sm:$0xff]
      %v1427 = vpack.c.bf16 %v1420, %v1419
      %v1428 = vpack.c.bf16 %v1422, %v1421
      %v1429 = vpack.c.bf16 %v1424, %v1423
      %v1430 = vpack.c.bf16 %v1426, %v1425
      %1435 = vrot.lane.b32.xlu0 %v1427, 16
      %v1436 = vpop.permute.xlu0 %1435
      %1437 = vrot.lane.b32.xlu0 %v1428, 16
      %v1438 = vpop.permute.xlu0 %1437
      %1439 = vrot.lane.b32.xlu0 %v1429, 16
      %v1440 = vpop.permute.xlu0 %1439
      %1441 = vrot.lane.b32.xlu0 %v1430, 16
      %v1442 = vpop.permute.xlu0 %1441
      %1447 = vst.msk [vmem:[#allocation4] sm:$0xff] %vm866, %v1436
      %1448 = vst.msk [vmem:[#allocation4 + $0x8] sm:$0xff] %vm866, %v1438
      %1449 = vst.msk [vmem:[#allocation4 + $0x10] sm:$0xff] %vm866, %v1440
      %1450 = vst.msk [vmem:[#allocation4 + $0x18] sm:$0xff] %vm866, %v1442
      %v1451 = vld [vmem:[%s714 + $0x2] sm:$0xff]
      %v1452 = vld [vmem:[%s714 + $0x12] sm:$0xff]
      %v1453 = vld [vmem:[%s714 + $0x22] sm:$0xff]
      %v1454 = vld [vmem:[%s714 + $0x32] sm:$0xff]
      %v1455 = vld [vmem:[%s714 + $0x42] sm:$0xff]
      %v1456 = vld [vmem:[%s714 + $0x52] sm:$0xff]
      %v1457 = vld [vmem:[%s714 + $0x62] sm:$0xff]
      %v1458 = vld [vmem:[%s714 + $0x72] sm:$0xff]
      %v1459 = vpack.c.bf16 %v1452, %v1451
      %v1460 = vpack.c.bf16 %v1454, %v1453
      %v1461 = vpack.c.bf16 %v1456, %v1455
      %v1462 = vpack.c.bf16 %v1458, %v1457
      %1467 = vrot.lane.b32.xlu0 %v1459, 20
      %v1468 = vpop.permute.xlu0 %1467
      %1469 = vrot.lane.b32.xlu0 %v1460, 20
      %v1470 = vpop.permute.xlu0 %1469
      %1471 = vrot.lane.b32.xlu0 %v1461, 20
      %v1472 = vpop.permute.xlu0 %1471
      %1473 = vrot.lane.b32.xlu0 %v1462, 20
      %v1474 = vpop.permute.xlu0 %1473
      %1479 = vst.msk [vmem:[#allocation4] sm:$0xff] %vm899, %v1468
      %1480 = vst.msk [vmem:[#allocation4 + $0x8] sm:$0xff] %vm899, %v1470
      %1481 = vst.msk [vmem:[#allocation4 + $0x10] sm:$0xff] %vm899, %v1472
      %1482 = vst.msk [vmem:[#allocation4 + $0x18] sm:$0xff] %vm899, %v1474
      %v1483 = vld [vmem:[%s904] sm:$0xff]
      %v1484 = vld [vmem:[%s904 + $0x10] sm:$0xff]
      %v1485 = vld [vmem:[%s904 + $0x20] sm:$0xff]
      %v1486 = vld [vmem:[%s904 + $0x30] sm:$0xff]
      %v1487 = vld [vmem:[%s904 + $0x40] sm:$0xff]
      %v1488 = vld [vmem:[%s904 + $0x50] sm:$0xff]
      %v1489 = vld [vmem:[%s904 + $0x60] sm:$0xff]
      %v1490 = vld [vmem:[%s904 + $0x70] sm:$0xff]
      %v1491 = vpack.c.bf16 %v1484, %v1483
      %v1492 = vpack.c.bf16 %v1486, %v1485
      %v1493 = vpack.c.bf16 %v1488, %v1487
      %v1494 = vpack.c.bf16 %v1490, %v1489
      %1499 = vrot.lane.b32.xlu0 %v1491, 24
      %v1500 = vpop.permute.xlu0 %1499
      %1501 = vrot.lane.b32.xlu0 %v1492, 24
      %v1502 = vpop.permute.xlu0 %1501
      %1503 = vrot.lane.b32.xlu0 %v1493, 24
      %v1504 = vpop.permute.xlu0 %1503
      %1505 = vrot.lane.b32.xlu0 %v1494, 24
      %v1506 = vpop.permute.xlu0 %1505
      %1511 = vst.msk [vmem:[#allocation4] sm:$0xff] %vm933, %v1500
      %1512 = vst.msk [vmem:[#allocation4 + $0x8] sm:$0xff] %vm933, %v1502
      %1513 = vst.msk [vmem:[#allocation4 + $0x10] sm:$0xff] %vm933, %v1504
      %1514 = vst.msk [vmem:[#allocation4 + $0x18] sm:$0xff] %vm933, %v1506
      %v1515 = vld [vmem:[%s904 + $0x1] sm:$0xff]
      %v1516 = vld [vmem:[%s904 + $0x11] sm:$0xff]
      %v1517 = vld [vmem:[%s904 + $0x21] sm:$0xff]
      %v1518 = vld [vmem:[%s904 + $0x31] sm:$0xff]
      %v1519 = vld [vmem:[%s904 + $0x41] sm:$0xff]
      %v1520 = vld [vmem:[%s904 + $0x51] sm:$0xff]
      %v1521 = vld [vmem:[%s904 + $0x61] sm:$0xff]
      %v1522 = vld [vmem:[%s904 + $0x71] sm:$0xff]
      %v1523 = vpack.c.bf16 %v1516, %v1515
      %v1524 = vpack.c.bf16 %v1518, %v1517
      %v1525 = vpack.c.bf16 %v1520, %v1519
      %v1526 = vpack.c.bf16 %v1522, %v1521
      %1531 = vrot.lane.b32.xlu0 %v1523, 28
      %v1532 = vpop.permute.xlu0 %1531
      %1533 = vrot.lane.b32.xlu0 %v1524, 28
      %v1534 = vpop.permute.xlu0 %1533
      %1535 = vrot.lane.b32.xlu0 %v1525, 28
      %v1536 = vpop.permute.xlu0 %1535
      %1537 = vrot.lane.b32.xlu0 %v1526, 28
      %v1538 = vpop.permute.xlu0 %1537
      %1543 = vst.msk [vmem:[#allocation4] sm:$0xff] %vm966, %v1532
      %1544 = vst.msk [vmem:[#allocation4 + $0x8] sm:$0xff] %vm966, %v1534
      %1545 = vst.msk [vmem:[#allocation4 + $0x10] sm:$0xff] %vm966, %v1536
      %1546 = vst.msk [vmem:[#allocation4 + $0x18] sm:$0xff] %vm966, %v1538
      %v1547 = vld [vmem:[%s904 + $0x2] sm:$0xff]
      %v1548 = vld [vmem:[%s904 + $0x12] sm:$0xff]
      %v1549 = vld [vmem:[%s904 + $0x22] sm:$0xff]
      %v1550 = vld [vmem:[%s904 + $0x32] sm:$0xff]
      %v1551 = vld [vmem:[%s904 + $0x42] sm:$0xff]
      %v1552 = vld [vmem:[%s904 + $0x52] sm:$0xff]
      %v1553 = vld [vmem:[%s904 + $0x62] sm:$0xff]
      %v1554 = vld [vmem:[%s904 + $0x72] sm:$0xff]
      %v1555 = vpack.c.bf16 %v1548, %v1547
      %v1556 = vpack.c.bf16 %v1550, %v1549
      %v1557 = vpack.c.bf16 %v1552, %v1551
      %v1558 = vpack.c.bf16 %v1554, %v1553
      %1563 = vrot.lane.b32.xlu0 %v1555, 32
      %v1564 = vpop.permute.xlu0 %1563
      %1565 = vrot.lane.b32.xlu0 %v1556, 32
      %v1566 = vpop.permute.xlu0 %1565
      %1567 = vrot.lane.b32.xlu0 %v1557, 32
      %v1568 = vpop.permute.xlu0 %1567
      %1569 = vrot.lane.b32.xlu0 %v1558, 32
      %v1570 = vpop.permute.xlu0 %1569
      %1575 = vst.msk [vmem:[#allocation4] sm:$0xff] %vm999, %v1564
      %1576 = vst.msk [vmem:[#allocation4 + $0x8] sm:$0xff] %vm999, %v1566
      %1577 = vst.msk [vmem:[#allocation4 + $0x10] sm:$0xff] %vm999, %v1568
      %1578 = vst.msk [vmem:[#allocation4 + $0x18] sm:$0xff] %vm999, %v1570
      %v1579 = vld [vmem:[#allocation4] sm:$0xff]
      %v1580 = vld [vmem:[#allocation4 + $0x8] sm:$0xff]
      %v1581 = vld [vmem:[#allocation4 + $0x10] sm:$0xff]
      %v1582 = vld [vmem:[#allocation4 + $0x18] sm:$0xff]
      %v1583 = vld [vmem:[%s6] sm:$0xf]
      %v1584 = vld [vmem:[%s6 + $0x4] sm:$0xf]
      %v1585 = vld [vmem:[%s6 + $0x8] sm:$0xf]
      %v1586 = vld [vmem:[%s6 + $0xc] sm:$0xf]
      %v1587 = vld [vmem:[%s6 + $0x10] sm:$0x3]
      %v1593 = vunpack.c.l.b16 %v1583
      %v1594 = vunpack.c.l.b16 %v1584
      %v1595 = vunpack.c.l.b16 %v1585
      %v1596 = vunpack.c.l.b16 %v1586
      %v1597 = vunpack.c.l.b16 %v1587
      %v1598 = vpack.c.b16 %v1594, %v1593
      %v1599 = vpack.c.b16 %v1596, %v1595
      %v1600 = vpack.c.b16 %v1597, %v1597
      %v1604 = vsel %vm1028, %v1579, 0
      %v1607 = vsel %vm1028, %v1580, 0
      %v1610 = vsel %vm1028, %v1581, 0
      %v1613 = vsel %vm1028, %v1582, 0
      %v1616 = vsel %vm1041, %v1600, 0
      %1618 = vmatprep.subr.bf16.mxu0 0
      %1619 = vmatpush1.bf16.msra.mxu0 %v1598
      %1620 = vmatprep.subr.bf16.mxu0 0
      %1621 = vmatpush1.bf16.msra.mxu0 %v1599
      %1622 = vmatprep.subr.bf16.mxu0 0
      %1623 = vmatpush1.bf16.msra.mxu0 %v1616
      %1624 = vmatprep.subr.bf16.mxu0 0
      %1625 = vmatpush1.bf16.msra.mxu0 0
      %1626 = vmatprep.subr.bf16.mxu0 0
      %1627 = vmatpush1.bf16.msra.mxu0 0
      %1628 = vmatprep.subr.bf16.mxu0 0
      %1629 = vmatpush1.bf16.msra.mxu0 0
      %1630 = vmatprep.subr.bf16.mxu0 0
      %1631 = vmatpush1.bf16.msra.mxu0 0
      %1632 = vmatprep.subr.bf16.mxu0 0
      %1633 = vmatpush1.bf16.msra.mxu0 0
      %1634 = vmatprep.subr.bf16.mxu0 0
      %1635 = vmatpush1.bf16.msra.mxu0 0
      %1636 = vmatprep.subr.bf16.mxu0 0
      %1637 = vmatpush1.bf16.msra.mxu0 0
      %1638 = vmatprep.subr.bf16.mxu0 0
      %1639 = vmatpush1.bf16.msra.mxu0 0
      %1640 = vmatprep.subr.bf16.mxu0 0
      %1641 = vmatpush1.bf16.msra.mxu0 0
      %1642 = vmatprep.subr.bf16.mxu0 0
      %1643 = vmatpush1.bf16.msra.mxu0 0
      %1644 = vmatprep.subr.bf16.mxu0 0
      %1645 = vmatpush1.bf16.msra.mxu0 0
      %1646 = vmatprep.subr.bf16.mxu0 0
      %1647 = vmatpush1.bf16.msra.mxu0 0
      %1648 = vmatprep.subr.bf16.mxu0 0
      %1649 = vmatpush1.bf16.msra.mxu0 0
      %1650 = vmatprep.mubr.bf16.mxu0 0
      %1651 = vmatmul.mubr.bf16.gmra.mrb[0].mxu0 %v1604
      %v1652 = vpop.f32.mrb[0].mxu0
      %v1653 = vadd.f32 0.0, %v1652
      %v1654 = vpop.f32.mrb[0].mxu0
      %v1655 = vpop.f32.mrb[0].mxu0
      %v1656 = vadd.f32 0.0, %v1655
      %v1657 = vpop.f32.mrb[0].mxu0
      %1658 = vmatprep.mubr.bf16.mxu0 0
      %1659 = vmatmul.mubr.bf16.gmra.mrb[0].mxu0 %v1607
      %v1660 = vpop.f32.mrb[0].mxu0
      %v1661 = vadd.f32 0.0, %v1660
      %v1662 = vpop.f32.mrb[0].mxu0
      %v1663 = vpop.f32.mrb[0].mxu0
      %v1664 = vadd.f32 0.0, %v1663
      %v1665 = vpop.f32.mrb[0].mxu0
      %1666 = vmatprep.mubr.bf16.mxu0 0
      %1667 = vmatmul.mubr.bf16.gmra.mrb[0].mxu0 %v1610
      %v1668 = vpop.f32.mrb[0].mxu0
      %v1669 = vadd.f32 0.0, %v1668
      %v1670 = vpop.f32.mrb[0].mxu0
      %v1671 = vpop.f32.mrb[0].mxu0
      %v1672 = vadd.f32 0.0, %v1671
      %v1673 = vpop.f32.mrb[0].mxu0
      %1674 = vmatprep.mubr.bf16.mxu0 0
      %1675 = vmatmul.mubr.bf16.gmra.mrb[0].mxu0 %v1613
      %v1676 = vpop.f32.mrb[0].mxu0
      %v1677 = vadd.f32 0.0, %v1676
      %v1678 = vpop.f32.mrb[0].mxu0
      %v1679 = vpop.f32.mrb[0].mxu0
      %v1680 = vadd.f32 0.0, %v1679
      %v1681 = vpop.f32.mrb[0].mxu0
      %1682 = vdwg.mxu0
      %v1683 = vsel %vm537, %v1653, 0.0
      %v1684 = vsel %vm537, %v1656, 0.0
      %v1685 = vadd.f32 %v1683, %v1684
      %v1686 = vsel %vm537, %v1661, 0.0
      %v1687 = vadd.f32 %v1685, %v1686
      %v1688 = vsel %vm537, %v1664, 0.0
      %v1689 = vadd.f32 %v1687, %v1688
      %v1690 = vsel %vm537, %v1669, 0.0
      %v1691 = vadd.f32 %v1689, %v1690
      %v1692 = vsel %vm537, %v1672, 0.0
      %v1693 = vadd.f32 %v1691, %v1692
      %v1694 = vsel %vm537, %v1677, 0.0
      %v1695 = vadd.f32 %v1693, %v1694
      %v1696 = vsel %vm537, %v1680, 0.0
      %v1697 = vadd.f32 %v1695, %v1696
      %1698 = vadd.xlane.f32.xlu0 %v1697
      %v1699 = vpop.xlane.xlu0 %1698
      %v1700 = vrot.slane %v1699, 4
      %v1701 = vadd.f32 %v1699, %v1700
      %v1702 = vrot.slane %v1701, 2
      %v1703 = vadd.f32 %v1701, %v1702
      %v1704 = vrot.slane %v1703, 1
      %v1705 = vadd.f32 %v1703, %v1704
      %s1706 = vtos %v1705
      %v1707 = vmul.f32 %v1653, %v1653
      %v1708 = vmul.f32 %v1656, %v1656
      %v1709 = vmul.f32 %v1661, %v1661
      %v1710 = vmul.f32 %v1664, %v1664
      %v1711 = vmul.f32 %v1669, %v1669
      %v1712 = vmul.f32 %v1672, %v1672
      %v1713 = vmul.f32 %v1677, %v1677
      %v1714 = vmul.f32 %v1680, %v1680
      %v1715 = vsel %vm537, %v1707, 0.0
      %v1716 = vsel %vm537, %v1708, 0.0
      %v1717 = vadd.f32 %v1715, %v1716
      %v1718 = vsel %vm537, %v1709, 0.0
      %v1719 = vadd.f32 %v1717, %v1718
      %v1720 = vsel %vm537, %v1710, 0.0
      %v1721 = vadd.f32 %v1719, %v1720
      %v1722 = vsel %vm537, %v1711, 0.0
      %v1723 = vadd.f32 %v1721, %v1722
      %v1724 = vsel %vm537, %v1712, 0.0
      %v1725 = vadd.f32 %v1723, %v1724
      %v1726 = vsel %vm537, %v1713, 0.0
      %v1727 = vadd.f32 %v1725, %v1726
      %v1728 = vsel %vm537, %v1714, 0.0
      %v1729 = vadd.f32 %v1727, %v1728
      %1730 = vadd.xlane.f32.xlu0 %v1729
      %v1731 = vpop.xlane.xlu0 %1730
      %v1732 = vrot.slane %v1731, 4
      %v1733 = vadd.f32 %v1731, %v1732
      %v1734 = vrot.slane %v1733, 2
      %v1735 = vadd.f32 %v1733, %v1734
      %v1736 = vrot.slane %v1735, 1
      %v1737 = vadd.f32 %v1735, %v1736
      %s1738 = vtos %v1737
      %v1739 = vrcp.pop 256.0
      %s1740 = vtos %v1739
      %s1741 = smul.f32 %s1706, %s1740
      %v1742 = vrcp.pop 256.0
      %s1743 = vtos %v1742
      %s1744 = smul.f32 %s1738, %s1743
      %s1745 = smul.f32 %s1741, %s1741
      %s1746 = ssub.f32 %s1744, %s1745
      %s1747 = smax.f32 %s1746, 0.0
      %s1748 = sadd.f32 %s1747, 1e-05
      %v1749 = vstv %s1748
      %v1750 = vrsqrt.pop %v1749
      %s1751 = vtos %v1750
      %v1752 = vstv %s1741
      %v1753 = vsub.f32 %v1653, %v1752
      %v1754 = vsub.f32 %v1656, %v1752
      %v1755 = vsub.f32 %v1661, %v1752
      %v1756 = vsub.f32 %v1664, %v1752
      %v1757 = vsub.f32 %v1669, %v1752
      %v1758 = vsub.f32 %v1672, %v1752
      %v1759 = vsub.f32 %v1677, %v1752
      %v1760 = vsub.f32 %v1680, %v1752
      %v1761 = vstv %s1751
      %v1762 = vmul.f32 %v1753, %v1761
      %v1763 = vmul.f32 %v1754, %v1761
      %v1764 = vmul.f32 %v1755, %v1761
      %v1765 = vmul.f32 %v1756, %v1761
      %v1766 = vmul.f32 %v1757, %v1761
      %v1767 = vmul.f32 %v1758, %v1761
      %v1768 = vmul.f32 %v1759, %v1761
      %v1769 = vmul.f32 %v1760, %v1761
      %v1770 = vld [vmem:[%s7] sm:$0x1]
      %v1772 = vlaneseq
      %v1773 = vshrl.u32 %v1772, 7
      %v1774 = vsub.s32 0, %v1773
      %v1775 = vrot.slane %v1770, %v1774
      %v1777 = vmul.f32 %v1762, %v1775
      %v1778 = vmul.f32 %v1763, %v1775
      %v1779 = vmul.f32 %v1764, %v1775
      %v1780 = vmul.f32 %v1765, %v1775
      %v1781 = vmul.f32 %v1766, %v1775
      %v1782 = vmul.f32 %v1767, %v1775
      %v1783 = vmul.f32 %v1768, %v1775
      %v1784 = vmul.f32 %v1769, %v1775
      %v1785 = vld [vmem:[%s8] sm:$0x1]
      %v1787 = vlaneseq
      %v1788 = vshrl.u32 %v1787, 7
      %v1789 = vsub.s32 0, %v1788
      %v1790 = vrot.slane %v1785, %v1789
      %v1792 = vadd.f32 %v1777, %v1790
      %v1793 = vadd.f32 %v1778, %v1790
      %v1794 = vadd.f32 %v1779, %v1790
      %v1795 = vadd.f32 %v1780, %v1790
      %v1796 = vadd.f32 %v1781, %v1790
      %v1797 = vadd.f32 %v1782, %v1790
      %v1798 = vadd.f32 %v1783, %v1790
      %v1799 = vadd.f32 %v1784, %v1790
      %v1800 = vadd.f32 %v684, %v1792
      %v1801 = vadd.f32 %v687, %v1793
      %v1802 = vadd.f32 %v692, %v1794
      %v1803 = vadd.f32 %v695, %v1795
      %v1804 = vadd.f32 %v700, %v1796
      %v1805 = vadd.f32 %v703, %v1797
      %v1806 = vadd.f32 %v708, %v1798
      %v1807 = vadd.f32 %v711, %v1799
      %v1808 = vmul.f32 %v1800, 0.5
      %v1809 = vmul.f32 %v1801, 0.5
      %v1810 = vmul.f32 %v1802, 0.5
      %v1811 = vmul.f32 %v1803, 0.5
      %v1812 = vmul.f32 %v1804, 0.5
      %v1813 = vmul.f32 %v1805, 0.5
      %v1814 = vmul.f32 %v1806, 0.5
      %v1815 = vmul.f32 %v1807, 0.5
      %v1816 = vmul.f32 %v1800, 0.044715
      %v1817 = vmul.f32 %v1801, 0.044715
      %v1818 = vmul.f32 %v1802, 0.044715
      %v1819 = vmul.f32 %v1803, 0.044715
      %v1820 = vmul.f32 %v1804, 0.044715
      %v1821 = vmul.f32 %v1805, 0.044715
      %v1822 = vmul.f32 %v1806, 0.044715
      %v1823 = vmul.f32 %v1807, 0.044715
      %v1824 = vmul.f32 %v1816, %v1800
      %v1825 = vmul.f32 %v1817, %v1801
      %v1826 = vmul.f32 %v1818, %v1802
      %v1827 = vmul.f32 %v1819, %v1803
      %v1828 = vmul.f32 %v1820, %v1804
      %v1829 = vmul.f32 %v1821, %v1805
      %v1830 = vmul.f32 %v1822, %v1806
      %v1831 = vmul.f32 %v1823, %v1807
      %v1832 = vmul.f32 %v1824, %v1800
      %v1833 = vmul.f32 %v1825, %v1801
      %v1834 = vmul.f32 %v1826, %v1802
      %v1835 = vmul.f32 %v1827, %v1803
      %v1836 = vmul.f32 %v1828, %v1804
      %v1837 = vmul.f32 %v1829, %v1805
      %v1838 = vmul.f32 %v1830, %v1806
      %v1839 = vmul.f32 %v1831, %v1807
      %v1840 = vadd.f32 %v1800, %v1832
      %v1841 = vadd.f32 %v1801, %v1833
      %v1842 = vadd.f32 %v1802, %v1834
      %v1843 = vadd.f32 %v1803, %v1835
      %v1844 = vadd.f32 %v1804, %v1836
      %v1845 = vadd.f32 %v1805, %v1837
      %v1846 = vadd.f32 %v1806, %v1838
      %v1847 = vadd.f32 %v1807, %v1839
      %v1848 = vmul.f32 %v1840, 0.7978846
      %v1849 = vmul.f32 %v1841, 0.7978846
      %v1850 = vmul.f32 %v1842, 0.7978846
      %v1851 = vmul.f32 %v1843, 0.7978846
      %v1852 = vmul.f32 %v1844, 0.7978846
      %v1853 = vmul.f32 %v1845, 0.7978846
      %v1854 = vmul.f32 %v1846, 0.7978846
      %v1855 = vmul.f32 %v1847, 0.7978846
      %v1856 = vtanh.pop %v1848
      %v1857 = vtanh.pop %v1849
      %v1858 = vtanh.pop %v1850
      %v1859 = vtanh.pop %v1851
      %v1860 = vtanh.pop %v1852
      %v1861 = vtanh.pop %v1853
      %v1862 = vtanh.pop %v1854
      %v1863 = vtanh.pop %v1855
      %v1864 = vadd.f32 %v1856, 1.0
      %v1865 = vadd.f32 %v1857, 1.0
      %v1866 = vadd.f32 %v1858, 1.0
      %v1867 = vadd.f32 %v1859, 1.0
      %v1868 = vadd.f32 %v1860, 1.0
      %v1869 = vadd.f32 %v1861, 1.0
      %v1870 = vadd.f32 %v1862, 1.0
      %v1871 = vadd.f32 %v1863, 1.0
      %v1872 = vmul.f32 %v1808, %v1864
      %v1873 = vmul.f32 %v1809, %v1865
      %v1874 = vmul.f32 %v1810, %v1866
      %v1875 = vmul.f32 %v1811, %v1867
      %v1876 = vmul.f32 %v1812, %v1868
      %v1877 = vmul.f32 %v1813, %v1869
      %v1878 = vmul.f32 %v1814, %v1870
      %v1879 = vmul.f32 %v1815, %v1871
      %1880 = vst.msk [vmem:[%s714 + $0x1] sm:$0xff] %vm537, %v1872
      %1881 = vst.msk [vmem:[%s714 + $0x11] sm:$0xff] %vm537, %v1873
      %1882 = vst.msk [vmem:[%s714 + $0x21] sm:$0xff] %vm537, %v1874
      %1883 = vst.msk [vmem:[%s714 + $0x31] sm:$0xff] %vm537, %v1875
      %1884 = vst.msk [vmem:[%s714 + $0x41] sm:$0xff] %vm537, %v1876
      %1885 = vst.msk [vmem:[%s714 + $0x51] sm:$0xff] %vm537, %v1877
      %1886 = vst.msk [vmem:[%s714 + $0x61] sm:$0xff] %vm537, %v1878
      %1887 = vst.msk [vmem:[%s714 + $0x71] sm:$0xff] %vm537, %v1879
      %v1888 = vld [vmem:[#allocation2] sm:$0xff]
      %v1889 = vld [vmem:[#allocation2 + $0x10] sm:$0xff]
      %v1890 = vld [vmem:[#allocation2 + $0x20] sm:$0xff]
      %v1891 = vld [vmem:[#allocation2 + $0x30] sm:$0xff]
      %v1892 = vld [vmem:[#allocation2 + $0x40] sm:$0xff]
      %v1893 = vld [vmem:[#allocation2 + $0x50] sm:$0xff]
      %v1894 = vld [vmem:[#allocation2 + $0x60] sm:$0xff]
      %v1895 = vld [vmem:[#allocation2 + $0x70] sm:$0xff]
      %v1896 = vpack.c.bf16 %v1889, %v1888
      %v1897 = vpack.c.bf16 %v1891, %v1890
      %v1898 = vpack.c.bf16 %v1893, %v1892
      %v1899 = vpack.c.bf16 %v1895, %v1894
      %1900 = vst.msk [vmem:[#allocation4] sm:$0xff] %vm537, %v1896
      %1901 = vst.msk [vmem:[#allocation4 + $0x8] sm:$0xff] %vm537, %v1897
      %1902 = vst.msk [vmem:[#allocation4 + $0x10] sm:$0xff] %vm537, %v1898
      %1903 = vst.msk [vmem:[#allocation4 + $0x18] sm:$0xff] %vm537, %v1899
      %v1904 = vld [vmem:[#allocation2 + $0x1] sm:$0xff]
      %v1905 = vld [vmem:[#allocation2 + $0x11] sm:$0xff]
      %v1906 = vld [vmem:[#allocation2 + $0x21] sm:$0xff]
      %v1907 = vld [vmem:[#allocation2 + $0x31] sm:$0xff]
      %v1908 = vld [vmem:[#allocation2 + $0x41] sm:$0xff]
      %v1909 = vld [vmem:[#allocation2 + $0x51] sm:$0xff]
      %v1910 = vld [vmem:[#allocation2 + $0x61] sm:$0xff]
      %v1911 = vld [vmem:[#allocation2 + $0x71] sm:$0xff]
      %v1912 = vpack.c.bf16 %v1905, %v1904
      %v1913 = vpack.c.bf16 %v1907, %v1906
      %v1914 = vpack.c.bf16 %v1909, %v1908
      %v1915 = vpack.c.bf16 %v1911, %v1910
      %1920 = vrot.lane.b32.xlu0 %v1912, 4
      %v1921 = vpop.permute.xlu0 %1920
      %1922 = vrot.lane.b32.xlu0 %v1913, 4
      %v1923 = vpop.permute.xlu0 %1922
      %1924 = vrot.lane.b32.xlu0 %v1914, 4
      %v1925 = vpop.permute.xlu0 %1924
      %1926 = vrot.lane.b32.xlu0 %v1915, 4
      %v1927 = vpop.permute.xlu0 %1926
      %1932 = vst.msk [vmem:[#allocation4] sm:$0xff] %vm767, %v1921
      %1933 = vst.msk [vmem:[#allocation4 + $0x8] sm:$0xff] %vm767, %v1923
      %1934 = vst.msk [vmem:[#allocation4 + $0x10] sm:$0xff] %vm767, %v1925
      %1935 = vst.msk [vmem:[#allocation4 + $0x18] sm:$0xff] %vm767, %v1927
      %v1936 = vld [vmem:[#allocation2 + $0x2] sm:$0xff]
      %v1937 = vld [vmem:[#allocation2 + $0x12] sm:$0xff]
      %v1938 = vld [vmem:[#allocation2 + $0x22] sm:$0xff]
      %v1939 = vld [vmem:[#allocation2 + $0x32] sm:$0xff]
      %v1940 = vld [vmem:[#allocation2 + $0x42] sm:$0xff]
      %v1941 = vld [vmem:[#allocation2 + $0x52] sm:$0xff]
      %v1942 = vld [vmem:[#allocation2 + $0x62] sm:$0xff]
      %v1943 = vld [vmem:[#allocation2 + $0x72] sm:$0xff]
      %v1944 = vpack.c.bf16 %v1937, %v1936
      %v1945 = vpack.c.bf16 %v1939, %v1938
      %v1946 = vpack.c.bf16 %v1941, %v1940
      %v1947 = vpack.c.bf16 %v1943, %v1942
      %1952 = vrot.lane.b32.xlu0 %v1944, 8
      %v1953 = vpop.permute.xlu0 %1952
      %1954 = vrot.lane.b32.xlu0 %v1945, 8
      %v1955 = vpop.permute.xlu0 %1954
      %1956 = vrot.lane.b32.xlu0 %v1946, 8
      %v1957 = vpop.permute.xlu0 %1956
      %1958 = vrot.lane.b32.xlu0 %v1947, 8
      %v1959 = vpop.permute.xlu0 %1958
      %1964 = vst.msk [vmem:[#allocation4] sm:$0xff] %vm800, %v1953
      %1965 = vst.msk [vmem:[#allocation4 + $0x8] sm:$0xff] %vm800, %v1955
      %1966 = vst.msk [vmem:[#allocation4 + $0x10] sm:$0xff] %vm800, %v1957
      %1967 = vst.msk [vmem:[#allocation4 + $0x18] sm:$0xff] %vm800, %v1959
      %v1968 = vld [vmem:[%s714] sm:$0xff]
      %v1969 = vld [vmem:[%s714 + $0x10] sm:$0xff]
      %v1970 = vld [vmem:[%s714 + $0x20] sm:$0xff]
      %v1971 = vld [vmem:[%s714 + $0x30] sm:$0xff]
      %v1972 = vld [vmem:[%s714 + $0x40] sm:$0xff]
      %v1973 = vld [vmem:[%s714 + $0x50] sm:$0xff]
      %v1974 = vld [vmem:[%s714 + $0x60] sm:$0xff]
      %v1975 = vld [vmem:[%s714 + $0x70] sm:$0xff]
      %v1976 = vpack.c.bf16 %v1969, %v1968
      %v1977 = vpack.c.bf16 %v1971, %v1970
      %v1978 = vpack.c.bf16 %v1973, %v1972
      %v1979 = vpack.c.bf16 %v1975, %v1974
      %1984 = vrot.lane.b32.xlu0 %v1976, 12
      %v1985 = vpop.permute.xlu0 %1984
      %1986 = vrot.lane.b32.xlu0 %v1977, 12
      %v1987 = vpop.permute.xlu0 %1986
      %1988 = vrot.lane.b32.xlu0 %v1978, 12
      %v1989 = vpop.permute.xlu0 %1988
      %1990 = vrot.lane.b32.xlu0 %v1979, 12
      %v1991 = vpop.permute.xlu0 %1990
      %1996 = vst.msk [vmem:[#allocation4] sm:$0xff] %vm833, %v1985
      %1997 = vst.msk [vmem:[#allocation4 + $0x8] sm:$0xff] %vm833, %v1987
      %1998 = vst.msk [vmem:[#allocation4 + $0x10] sm:$0xff] %vm833, %v1989
      %1999 = vst.msk [vmem:[#allocation4 + $0x18] sm:$0xff] %vm833, %v1991
      %v2000 = vld [vmem:[%s714 + $0x1] sm:$0xff]
      %v2001 = vld [vmem:[%s714 + $0x11] sm:$0xff]
      %v2002 = vld [vmem:[%s714 + $0x21] sm:$0xff]
      %v2003 = vld [vmem:[%s714 + $0x31] sm:$0xff]
      %v2004 = vld [vmem:[%s714 + $0x41] sm:$0xff]
      %v2005 = vld [vmem:[%s714 + $0x51] sm:$0xff]
      %v2006 = vld [vmem:[%s714 + $0x61] sm:$0xff]
      %v2007 = vld [vmem:[%s714 + $0x71] sm:$0xff]
      %v2008 = vpack.c.bf16 %v2001, %v2000
      %v2009 = vpack.c.bf16 %v2003, %v2002
      %v2010 = vpack.c.bf16 %v2005, %v2004
      %v2011 = vpack.c.bf16 %v2007, %v2006
      %2016 = vrot.lane.b32.xlu0 %v2008, 16
      %v2017 = vpop.permute.xlu0 %2016
      %2018 = vrot.lane.b32.xlu0 %v2009, 16
      %v2019 = vpop.permute.xlu0 %2018
      %2020 = vrot.lane.b32.xlu0 %v2010, 16
      %v2021 = vpop.permute.xlu0 %2020
      %2022 = vrot.lane.b32.xlu0 %v2011, 16
      %v2023 = vpop.permute.xlu0 %2022
      %2028 = vst.msk [vmem:[#allocation4] sm:$0xff] %vm866, %v2017
      %2029 = vst.msk [vmem:[#allocation4 + $0x8] sm:$0xff] %vm866, %v2019
      %2030 = vst.msk [vmem:[#allocation4 + $0x10] sm:$0xff] %vm866, %v2021
      %2031 = vst.msk [vmem:[#allocation4 + $0x18] sm:$0xff] %vm866, %v2023
      %v2032 = vld [vmem:[%s714 + $0x2] sm:$0xff]
      %v2033 = vld [vmem:[%s714 + $0x12] sm:$0xff]
      %v2034 = vld [vmem:[%s714 + $0x22] sm:$0xff]
      %v2035 = vld [vmem:[%s714 + $0x32] sm:$0xff]
      %v2036 = vld [vmem:[%s714 + $0x42] sm:$0xff]
      %v2037 = vld [vmem:[%s714 + $0x52] sm:$0xff]
      %v2038 = vld [vmem:[%s714 + $0x62] sm:$0xff]
      %v2039 = vld [vmem:[%s714 + $0x72] sm:$0xff]
      %v2040 = vpack.c.bf16 %v2033, %v2032
      %v2041 = vpack.c.bf16 %v2035, %v2034
      %v2042 = vpack.c.bf16 %v2037, %v2036
      %v2043 = vpack.c.bf16 %v2039, %v2038
      %2048 = vrot.lane.b32.xlu0 %v2040, 20
      %v2049 = vpop.permute.xlu0 %2048
      %2050 = vrot.lane.b32.xlu0 %v2041, 20
      %v2051 = vpop.permute.xlu0 %2050
      %2052 = vrot.lane.b32.xlu0 %v2042, 20
      %v2053 = vpop.permute.xlu0 %2052
      %2054 = vrot.lane.b32.xlu0 %v2043, 20
      %v2055 = vpop.permute.xlu0 %2054
      %2060 = vst.msk [vmem:[#allocation4] sm:$0xff] %vm899, %v2049
      %2061 = vst.msk [vmem:[#allocation4 + $0x8] sm:$0xff] %vm899, %v2051
      %2062 = vst.msk [vmem:[#allocation4 + $0x10] sm:$0xff] %vm899, %v2053
      %2063 = vst.msk [vmem:[#allocation4 + $0x18] sm:$0xff] %vm899, %v2055
      %v2064 = vld [vmem:[%s904] sm:$0xff]
      %v2065 = vld [vmem:[%s904 + $0x10] sm:$0xff]
      %v2066 = vld [vmem:[%s904 + $0x20] sm:$0xff]
      %v2067 = vld [vmem:[%s904 + $0x30] sm:$0xff]
      %v2068 = vld [vmem:[%s904 + $0x40] sm:$0xff]
      %v2069 = vld [vmem:[%s904 + $0x50] sm:$0xff]
      %v2070 = vld [vmem:[%s904 + $0x60] sm:$0xff]
      %v2071 = vld [vmem:[%s904 + $0x70] sm:$0xff]
      %v2072 = vpack.c.bf16 %v2065, %v2064
      %v2073 = vpack.c.bf16 %v2067, %v2066
      %v2074 = vpack.c.bf16 %v2069, %v2068
      %v2075 = vpack.c.bf16 %v2071, %v2070
      %2080 = vrot.lane.b32.xlu0 %v2072, 24
      %v2081 = vpop.permute.xlu0 %2080
      %2082 = vrot.lane.b32.xlu0 %v2073, 24
      %v2083 = vpop.permute.xlu0 %2082
      %2084 = vrot.lane.b32.xlu0 %v2074, 24
      %v2085 = vpop.permute.xlu0 %2084
      %2086 = vrot.lane.b32.xlu0 %v2075, 24
      %v2087 = vpop.permute.xlu0 %2086
      %2092 = vst.msk [vmem:[#allocation4] sm:$0xff] %vm933, %v2081
      %2093 = vst.msk [vmem:[#allocation4 + $0x8] sm:$0xff] %vm933, %v2083
      %2094 = vst.msk [vmem:[#allocation4 + $0x10] sm:$0xff] %vm933, %v2085
      %2095 = vst.msk [vmem:[#allocation4 + $0x18] sm:$0xff] %vm933, %v2087
      %v2096 = vld [vmem:[%s904 + $0x1] sm:$0xff]
      %v2097 = vld [vmem:[%s904 + $0x11] sm:$0xff]
      %v2098 = vld [vmem:[%s904 + $0x21] sm:$0xff]
      %v2099 = vld [vmem:[%s904 + $0x31] sm:$0xff]
      %v2100 = vld [vmem:[%s904 + $0x41] sm:$0xff]
      %v2101 = vld [vmem:[%s904 + $0x51] sm:$0xff]
      %v2102 = vld [vmem:[%s904 + $0x61] sm:$0xff]
      %v2103 = vld [vmem:[%s904 + $0x71] sm:$0xff]
      %v2104 = vpack.c.bf16 %v2097, %v2096
      %v2105 = vpack.c.bf16 %v2099, %v2098
      %v2106 = vpack.c.bf16 %v2101, %v2100
      %v2107 = vpack.c.bf16 %v2103, %v2102
      %2112 = vrot.lane.b32.xlu0 %v2104, 28
      %v2113 = vpop.permute.xlu0 %2112
      %2114 = vrot.lane.b32.xlu0 %v2105, 28
      %v2115 = vpop.permute.xlu0 %2114
      %2116 = vrot.lane.b32.xlu0 %v2106, 28
      %v2117 = vpop.permute.xlu0 %2116
      %2118 = vrot.lane.b32.xlu0 %v2107, 28
      %v2119 = vpop.permute.xlu0 %2118
      %2124 = vst.msk [vmem:[#allocation4] sm:$0xff] %vm966, %v2113
      %2125 = vst.msk [vmem:[#allocation4 + $0x8] sm:$0xff] %vm966, %v2115
      %2126 = vst.msk [vmem:[#allocation4 + $0x10] sm:$0xff] %vm966, %v2117
      %2127 = vst.msk [vmem:[#allocation4 + $0x18] sm:$0xff] %vm966, %v2119
      %v2128 = vld [vmem:[%s904 + $0x2] sm:$0xff]
      %v2129 = vld [vmem:[%s904 + $0x12] sm:$0xff]
      %v2130 = vld [vmem:[%s904 + $0x22] sm:$0xff]
      %v2131 = vld [vmem:[%s904 + $0x32] sm:$0xff]
      %v2132 = vld [vmem:[%s904 + $0x42] sm:$0xff]
      %v2133 = vld [vmem:[%s904 + $0x52] sm:$0xff]
      %v2134 = vld [vmem:[%s904 + $0x62] sm:$0xff]
      %v2135 = vld [vmem:[%s904 + $0x72] sm:$0xff]
      %v2136 = vpack.c.bf16 %v2129, %v2128
      %v2137 = vpack.c.bf16 %v2131, %v2130
      %v2138 = vpack.c.bf16 %v2133, %v2132
      %v2139 = vpack.c.bf16 %v2135, %v2134
      %2144 = vrot.lane.b32.xlu0 %v2136, 32
      %v2145 = vpop.permute.xlu0 %2144
      %2146 = vrot.lane.b32.xlu0 %v2137, 32
      %v2147 = vpop.permute.xlu0 %2146
      %2148 = vrot.lane.b32.xlu0 %v2138, 32
      %v2149 = vpop.permute.xlu0 %2148
      %2150 = vrot.lane.b32.xlu0 %v2139, 32
      %v2151 = vpop.permute.xlu0 %2150
      %2156 = vst.msk [vmem:[#allocation4] sm:$0xff] %vm999, %v2145
      %2157 = vst.msk [vmem:[#allocation4 + $0x8] sm:$0xff] %vm999, %v2147
      %2158 = vst.msk [vmem:[#allocation4 + $0x10] sm:$0xff] %vm999, %v2149
      %2159 = vst.msk [vmem:[#allocation4 + $0x18] sm:$0xff] %vm999, %v2151
      %v2160 = vld [vmem:[#allocation4] sm:$0xff]
      %v2161 = vld [vmem:[#allocation4 + $0x8] sm:$0xff]
      %v2162 = vld [vmem:[#allocation4 + $0x10] sm:$0xff]
      %v2163 = vld [vmem:[#allocation4 + $0x18] sm:$0xff]
      %v2164 = vld [vmem:[%s9] sm:$0xf]
      %v2165 = vld [vmem:[%s9 + $0x4] sm:$0xf]
      %v2166 = vld [vmem:[%s9 + $0x8] sm:$0xf]
      %v2167 = vld [vmem:[%s9 + $0xc] sm:$0xf]
      %v2168 = vld [vmem:[%s9 + $0x10] sm:$0x3]
      %v2174 = vunpack.c.l.b16 %v2164
      %v2175 = vunpack.c.l.b16 %v2165
      %v2176 = vunpack.c.l.b16 %v2166
      %v2177 = vunpack.c.l.b16 %v2167
      %v2178 = vunpack.c.l.b16 %v2168
      %v2179 = vpack.c.b16 %v2175, %v2174
      %v2180 = vpack.c.b16 %v2177, %v2176
      %v2181 = vpack.c.b16 %v2178, %v2178
      %v2185 = vsel %vm1028, %v2160, 0
      %v2188 = vsel %vm1028, %v2161, 0
      %v2191 = vsel %vm1028, %v2162, 0
      %v2194 = vsel %vm1028, %v2163, 0
      %v2197 = vsel %vm1041, %v2181, 0
      %2199 = vmatprep.subr.bf16.mxu0 0
      %2200 = vmatpush1.bf16.msra.mxu0 %v2179
      %2201 = vmatprep.subr.bf16.mxu0 0
      %2202 = vmatpush1.bf16.msra.mxu0 %v2180
      %2203 = vmatprep.subr.bf16.mxu0 0
      %2204 = vmatpush1.bf16.msra.mxu0 %v2197
      %2205 = vmatprep.subr.bf16.mxu0 0
      %2206 = vmatpush1.bf16.msra.mxu0 0
      %2207 = vmatprep.subr.bf16.mxu0 0
      %2208 = vmatpush1.bf16.msra.mxu0 0
      %2209 = vmatprep.subr.bf16.mxu0 0
      %2210 = vmatpush1.bf16.msra.mxu0 0
      %2211 = vmatprep.subr.bf16.mxu0 0
      %2212 = vmatpush1.bf16.msra.mxu0 0
      %2213 = vmatprep.subr.bf16.mxu0 0
      %2214 = vmatpush1.bf16.msra.mxu0 0
      %2215 = vmatprep.subr.bf16.mxu0 0
      %2216 = vmatpush1.bf16.msra.mxu0 0
      %2217 = vmatprep.subr.bf16.mxu0 0
      %2218 = vmatpush1.bf16.msra.mxu0 0
      %2219 = vmatprep.subr.bf16.mxu0 0
      %2220 = vmatpush1.bf16.msra.mxu0 0
      %2221 = vmatprep.subr.bf16.mxu0 0
      %2222 = vmatpush1.bf16.msra.mxu0 0
      %2223 = vmatprep.subr.bf16.mxu0 0
      %2224 = vmatpush1.bf16.msra.mxu0 0
      %2225 = vmatprep.subr.bf16.mxu0 0
      %2226 = vmatpush1.bf16.msra.mxu0 0
      %2227 = vmatprep.subr.bf16.mxu0 0
      %2228 = vmatpush1.bf16.msra.mxu0 0
      %2229 = vmatprep.subr.bf16.mxu0 0
      %2230 = vmatpush1.bf16.msra.mxu0 0
      %2231 = vmatprep.mubr.bf16.mxu0 0
      %2232 = vmatmul.mubr.bf16.gmra.mrb[0].mxu0 %v2185
      %v2233 = vpop.f32.mrb[0].mxu0
      %v2234 = vadd.f32 0.0, %v2233
      %v2235 = vpop.f32.mrb[0].mxu0
      %v2236 = vpop.f32.mrb[0].mxu0
      %v2237 = vadd.f32 0.0, %v2236
      %v2238 = vpop.f32.mrb[0].mxu0
      %2239 = vmatprep.mubr.bf16.mxu0 0
      %2240 = vmatmul.mubr.bf16.gmra.mrb[0].mxu0 %v2188
      %v2241 = vpop.f32.mrb[0].mxu0
      %v2242 = vadd.f32 0.0, %v2241
      %v2243 = vpop.f32.mrb[0].mxu0
      %v2244 = vpop.f32.mrb[0].mxu0
      %v2245 = vadd.f32 0.0, %v2244
      %v2246 = vpop.f32.mrb[0].mxu0
      %2247 = vmatprep.mubr.bf16.mxu0 0
      %2248 = vmatmul.mubr.bf16.gmra.mrb[0].mxu0 %v2191
      %v2249 = vpop.f32.mrb[0].mxu0
      %v2250 = vadd.f32 0.0, %v2249
      %v2251 = vpop.f32.mrb[0].mxu0
      %v2252 = vpop.f32.mrb[0].mxu0
      %v2253 = vadd.f32 0.0, %v2252
      %v2254 = vpop.f32.mrb[0].mxu0
      %2255 = vmatprep.mubr.bf16.mxu0 0
      %2256 = vmatmul.mubr.bf16.gmra.mrb[0].mxu0 %v2194
      %v2257 = vpop.f32.mrb[0].mxu0
      %v2258 = vadd.f32 0.0, %v2257
      %v2259 = vpop.f32.mrb[0].mxu0
      %v2260 = vpop.f32.mrb[0].mxu0
      %v2261 = vadd.f32 0.0, %v2260
      %v2262 = vpop.f32.mrb[0].mxu0
      %2263 = vdwg.mxu0
      %v2264 = vsel %vm565, %v2234, 0.0
      %v2265 = vsel %vm565, %v2237, 0.0
      %v2266 = vadd.f32 %v2264, %v2265
      %v2267 = vsel %vm565, %v2242, 0.0
      %v2268 = vadd.f32 %v2266, %v2267
      %v2269 = vsel %vm565, %v2245, 0.0
      %v2270 = vadd.f32 %v2268, %v2269
      %v2271 = vsel %vm565, %v2250, 0.0
      %v2272 = vadd.f32 %v2270, %v2271
      %v2273 = vsel %vm565, %v2253, 0.0
      %v2274 = vadd.f32 %v2272, %v2273
      %v2275 = vsel %vm565, %v2258, 0.0
      %v2276 = vadd.f32 %v2274, %v2275
      %v2277 = vsel %vm565, %v2261, 0.0
      %v2278 = vadd.f32 %v2276, %v2277
      %2279 = vadd.xlane.f32.xlu0 %v2278
      %v2280 = vpop.xlane.xlu0 %2279
      %v2281 = vrot.slane %v2280, 4
      %v2282 = vadd.f32 %v2280, %v2281
      %v2283 = vrot.slane %v2282, 2
      %v2284 = vadd.f32 %v2282, %v2283
      %v2285 = vrot.slane %v2284, 1
      %v2286 = vadd.f32 %v2284, %v2285
      %s2287 = vtos %v2286
      %v2288 = vmul.f32 %v2234, %v2234
      %v2289 = vmul.f32 %v2237, %v2237
      %v2290 = vmul.f32 %v2242, %v2242
      %v2291 = vmul.f32 %v2245, %v2245
      %v2292 = vmul.f32 %v2250, %v2250
      %v2293 = vmul.f32 %v2253, %v2253
      %v2294 = vmul.f32 %v2258, %v2258
      %v2295 = vmul.f32 %v2261, %v2261
      %v2296 = vsel %vm565, %v2288, 0.0
      %v2297 = vsel %vm565, %v2289, 0.0
      %v2298 = vadd.f32 %v2296, %v2297
      %v2299 = vsel %vm565, %v2290, 0.0
      %v2300 = vadd.f32 %v2298, %v2299
      %v2301 = vsel %vm565, %v2291, 0.0
      %v2302 = vadd.f32 %v2300, %v2301
      %v2303 = vsel %vm565, %v2292, 0.0
      %v2304 = vadd.f32 %v2302, %v2303
      %v2305 = vsel %vm565, %v2293, 0.0
      %v2306 = vadd.f32 %v2304, %v2305
      %v2307 = vsel %vm565, %v2294, 0.0
      %v2308 = vadd.f32 %v2306, %v2307
      %v2309 = vsel %vm565, %v2295, 0.0
      %v2310 = vadd.f32 %v2308, %v2309
      %2311 = vadd.xlane.f32.xlu0 %v2310
      %v2312 = vpop.xlane.xlu0 %2311
      %v2313 = vrot.slane %v2312, 4
      %v2314 = vadd.f32 %v2312, %v2313
      %v2315 = vrot.slane %v2314, 2
      %v2316 = vadd.f32 %v2314, %v2315
      %v2317 = vrot.slane %v2316, 1
      %v2318 = vadd.f32 %v2316, %v2317
      %s2319 = vtos %v2318
      %v2320 = vrcp.pop 512.0
      %s2321 = vtos %v2320
      %s2322 = smul.f32 %s2287, %s2321
      %v2323 = vrcp.pop 512.0
      %s2324 = vtos %v2323
      %s2325 = smul.f32 %s2319, %s2324
      %s2326 = smul.f32 %s2322, %s2322
      %s2327 = ssub.f32 %s2325, %s2326
      %s2328 = smax.f32 %s2327, 0.0
      %s2329 = sadd.f32 %s2328, 1e-05
      %v2330 = vstv %s2329
      %v2331 = vrsqrt.pop %v2330
      %s2332 = vtos %v2331
      %v2333 = vstv %s2322
      %v2334 = vsub.f32 %v2234, %v2333
      %v2335 = vsub.f32 %v2237, %v2333
      %v2336 = vsub.f32 %v2242, %v2333
      %v2337 = vsub.f32 %v2245, %v2333
      %v2338 = vsub.f32 %v2250, %v2333
      %v2339 = vsub.f32 %v2253, %v2333
      %v2340 = vsub.f32 %v2258, %v2333
      %v2341 = vsub.f32 %v2261, %v2333
      %v2342 = vstv %s2332
      %v2343 = vmul.f32 %v2334, %v2342
      %v2344 = vmul.f32 %v2335, %v2342
      %v2345 = vmul.f32 %v2336, %v2342
      %v2346 = vmul.f32 %v2337, %v2342
      %v2347 = vmul.f32 %v2338, %v2342
      %v2348 = vmul.f32 %v2339, %v2342
      %v2349 = vmul.f32 %v2340, %v2342
      %v2350 = vmul.f32 %v2341, %v2342
      %v2351 = vld [vmem:[%s10] sm:$0x1]
      %v2353 = vlaneseq
      %v2354 = vshrl.u32 %v2353, 7
      %v2355 = vsub.s32 0, %v2354
      %v2356 = vrot.slane %v2351, %v2355
      %v2358 = vmul.f32 %v2343, %v2356
      %v2359 = vmul.f32 %v2344, %v2356
      %v2360 = vmul.f32 %v2345, %v2356
      %v2361 = vmul.f32 %v2346, %v2356
      %v2362 = vmul.f32 %v2347, %v2356
      %v2363 = vmul.f32 %v2348, %v2356
      %v2364 = vmul.f32 %v2349, %v2356
      %v2365 = vmul.f32 %v2350, %v2356
      %v2366 = vld [vmem:[%s11] sm:$0x1]
      %v2368 = vlaneseq
      %v2369 = vshrl.u32 %v2368, 7
      %v2370 = vsub.s32 0, %v2369
      %v2371 = vrot.slane %v2366, %v2370
      %v2373 = vadd.f32 %v2358, %v2371
      %v2374 = vadd.f32 %v2359, %v2371
      %v2375 = vadd.f32 %v2360, %v2371
      %v2376 = vadd.f32 %v2361, %v2371
      %v2377 = vadd.f32 %v2362, %v2371
      %v2378 = vadd.f32 %v2363, %v2371
      %v2379 = vadd.f32 %v2364, %v2371
      %v2380 = vadd.f32 %v2365, %v2371
      %v2381 = vmul.f32 %v2373, 0.5
      %v2382 = vmul.f32 %v2374, 0.5
      %v2383 = vmul.f32 %v2375, 0.5
      %v2384 = vmul.f32 %v2376, 0.5
      %v2385 = vmul.f32 %v2377, 0.5
      %v2386 = vmul.f32 %v2378, 0.5
      %v2387 = vmul.f32 %v2379, 0.5
      %v2388 = vmul.f32 %v2380, 0.5
      %v2389 = vmul.f32 %v2373, 0.044715
      %v2390 = vmul.f32 %v2374, 0.044715
      %v2391 = vmul.f32 %v2375, 0.044715
      %v2392 = vmul.f32 %v2376, 0.044715
      %v2393 = vmul.f32 %v2377, 0.044715
      %v2394 = vmul.f32 %v2378, 0.044715
      %v2395 = vmul.f32 %v2379, 0.044715
      %v2396 = vmul.f32 %v2380, 0.044715
      %v2397 = vmul.f32 %v2389, %v2373
      %v2398 = vmul.f32 %v2390, %v2374
      %v2399 = vmul.f32 %v2391, %v2375
      %v2400 = vmul.f32 %v2392, %v2376
      %v2401 = vmul.f32 %v2393, %v2377
      %v2402 = vmul.f32 %v2394, %v2378
      %v2403 = vmul.f32 %v2395, %v2379
      %v2404 = vmul.f32 %v2396, %v2380
      %v2405 = vmul.f32 %v2397, %v2373
      %v2406 = vmul.f32 %v2398, %v2374
      %v2407 = vmul.f32 %v2399, %v2375
      %v2408 = vmul.f32 %v2400, %v2376
      %v2409 = vmul.f32 %v2401, %v2377
      %v2410 = vmul.f32 %v2402, %v2378
      %v2411 = vmul.f32 %v2403, %v2379
      %v2412 = vmul.f32 %v2404, %v2380
      %v2413 = vadd.f32 %v2373, %v2405
      %v2414 = vadd.f32 %v2374, %v2406
      %v2415 = vadd.f32 %v2375, %v2407
      %v2416 = vadd.f32 %v2376, %v2408
      %v2417 = vadd.f32 %v2377, %v2409
      %v2418 = vadd.f32 %v2378, %v2410
      %v2419 = vadd.f32 %v2379, %v2411
      %v2420 = vadd.f32 %v2380, %v2412
      %v2421 = vmul.f32 %v2413, 0.7978846
      %v2422 = vmul.f32 %v2414, 0.7978846
      %v2423 = vmul.f32 %v2415, 0.7978846
      %v2424 = vmul.f32 %v2416, 0.7978846
      %v2425 = vmul.f32 %v2417, 0.7978846
      %v2426 = vmul.f32 %v2418, 0.7978846
      %v2427 = vmul.f32 %v2419, 0.7978846
      %v2428 = vmul.f32 %v2420, 0.7978846
      %v2429 = vtanh.pop %v2421
      %v2430 = vtanh.pop %v2422
      %v2431 = vtanh.pop %v2423
      %v2432 = vtanh.pop %v2424
      %v2433 = vtanh.pop %v2425
      %v2434 = vtanh.pop %v2426
      %v2435 = vtanh.pop %v2427
      %v2436 = vtanh.pop %v2428
      %v2437 = vadd.f32 %v2429, 1.0
      %v2438 = vadd.f32 %v2430, 1.0
      %v2439 = vadd.f32 %v2431, 1.0
      %v2440 = vadd.f32 %v2432, 1.0
      %v2441 = vadd.f32 %v2433, 1.0
      %v2442 = vadd.f32 %v2434, 1.0
      %v2443 = vadd.f32 %v2435, 1.0
      %v2444 = vadd.f32 %v2436, 1.0
      %v2445 = vmul.f32 %v2381, %v2437
      %v2446 = vmul.f32 %v2382, %v2438
      %v2447 = vmul.f32 %v2383, %v2439
      %v2448 = vmul.f32 %v2384, %v2440
      %v2449 = vmul.f32 %v2385, %v2441
      %v2450 = vmul.f32 %v2386, %v2442
      %v2451 = vmul.f32 %v2387, %v2443
      %v2452 = vmul.f32 %v2388, %v2444
      %s2453 = scalar_lea.vmem [#allocation3], 16
      %2454 = vst.msk [vmem:[%s2453 + $0x1] sm:$0xff] %vm565, %v2445
      %2455 = vst.msk [vmem:[%s2453 + $0x11] sm:$0xff] %vm565, %v2446
      %2456 = vst.msk [vmem:[%s2453 + $0x21] sm:$0xff] %vm565, %v2447
      %2457 = vst.msk [vmem:[%s2453 + $0x31] sm:$0xff] %vm565, %v2448
      %2458 = vst.msk [vmem:[%s2453 + $0x41] sm:$0xff] %vm565, %v2449
      %2459 = vst.msk [vmem:[%s2453 + $0x51] sm:$0xff] %vm565, %v2450
      %2460 = vst.msk [vmem:[%s2453 + $0x61] sm:$0xff] %vm565, %v2451
      %2461 = vst.msk [vmem:[%s2453 + $0x71] sm:$0xff] %vm565, %v2452
      %v2462 = vld [vmem:[#allocation3] sm:$0xff]
      %v2463 = vld [vmem:[#allocation3 + $0x10] sm:$0xff]
      %v2464 = vld [vmem:[#allocation3 + $0x20] sm:$0xff]
      %v2465 = vld [vmem:[#allocation3 + $0x30] sm:$0xff]
      %v2466 = vld [vmem:[#allocation3 + $0x40] sm:$0xff]
      %v2467 = vld [vmem:[#allocation3 + $0x50] sm:$0xff]
      %v2468 = vld [vmem:[#allocation3 + $0x60] sm:$0xff]
      %v2469 = vld [vmem:[#allocation3 + $0x70] sm:$0xff]
      %v2470 = vpack.c.bf16 %v2463, %v2462
      %v2471 = vpack.c.bf16 %v2465, %v2464
      %v2472 = vpack.c.bf16 %v2467, %v2466
      %v2473 = vpack.c.bf16 %v2469, %v2468
      %2474 = vst.msk [vmem:[#allocation5] sm:$0xff] %vm565, %v2470
      %2475 = vst.msk [vmem:[#allocation5 + $0x8] sm:$0xff] %vm565, %v2471
      %2476 = vst.msk [vmem:[#allocation5 + $0x10] sm:$0xff] %vm565, %v2472
      %2477 = vst.msk [vmem:[#allocation5 + $0x18] sm:$0xff] %vm565, %v2473
      %v2478 = vld [vmem:[#allocation3 + $0x1] sm:$0xff]
      %v2479 = vld [vmem:[#allocation3 + $0x11] sm:$0xff]
      %v2480 = vld [vmem:[#allocation3 + $0x21] sm:$0xff]
      %v2481 = vld [vmem:[#allocation3 + $0x31] sm:$0xff]
      %v2482 = vld [vmem:[#allocation3 + $0x41] sm:$0xff]
      %v2483 = vld [vmem:[#allocation3 + $0x51] sm:$0xff]
      %v2484 = vld [vmem:[#allocation3 + $0x61] sm:$0xff]
      %v2485 = vld [vmem:[#allocation3 + $0x71] sm:$0xff]
      %v2486 = vpack.c.bf16 %v2479, %v2478
      %v2487 = vpack.c.bf16 %v2481, %v2480
      %v2488 = vpack.c.bf16 %v2483, %v2482
      %v2489 = vpack.c.bf16 %v2485, %v2484
      %2494 = vrot.lane.b32.xlu0 %v2486, 8
      %v2495 = vpop.permute.xlu0 %2494
      %2496 = vrot.lane.b32.xlu0 %v2487, 8
      %v2497 = vpop.permute.xlu0 %2496
      %2498 = vrot.lane.b32.xlu0 %v2488, 8
      %v2499 = vpop.permute.xlu0 %2498
      %2500 = vrot.lane.b32.xlu0 %v2489, 8
      %v2501 = vpop.permute.xlu0 %2500
      %vm2506 = vcmask 130112
      %2507 = vst.msk [vmem:[#allocation5] sm:$0xff] %vm2506, %v2495
      %2508 = vst.msk [vmem:[#allocation5 + $0x8] sm:$0xff] %vm2506, %v2497
      %2509 = vst.msk [vmem:[#allocation5 + $0x10] sm:$0xff] %vm2506, %v2499
      %2510 = vst.msk [vmem:[#allocation5 + $0x18] sm:$0xff] %vm2506, %v2501
      %v2511 = vld [vmem:[#allocation3 + $0x2] sm:$0xff]
      %v2512 = vld [vmem:[#allocation3 + $0x12] sm:$0xff]
      %v2513 = vld [vmem:[#allocation3 + $0x22] sm:$0xff]
      %v2514 = vld [vmem:[#allocation3 + $0x32] sm:$0xff]
      %v2515 = vld [vmem:[#allocation3 + $0x42] sm:$0xff]
      %v2516 = vld [vmem:[#allocation3 + $0x52] sm:$0xff]
      %v2517 = vld [vmem:[#allocation3 + $0x62] sm:$0xff]
      %v2518 = vld [vmem:[#allocation3 + $0x72] sm:$0xff]
      %v2519 = vpack.c.bf16 %v2512, %v2511
      %v2520 = vpack.c.bf16 %v2514, %v2513
      %v2521 = vpack.c.bf16 %v2516, %v2515
      %v2522 = vpack.c.bf16 %v2518, %v2517
      %2527 = vrot.lane.b32.xlu0 %v2519, 16
      %v2528 = vpop.permute.xlu0 %2527
      %2529 = vrot.lane.b32.xlu0 %v2520, 16
      %v2530 = vpop.permute.xlu0 %2529
      %2531 = vrot.lane.b32.xlu0 %v2521, 16
      %v2532 = vpop.permute.xlu0 %2531
      %2533 = vrot.lane.b32.xlu0 %v2522, 16
      %v2534 = vpop.permute.xlu0 %2533
      %vm2539 = vcmask 195712
      %2540 = vst.msk [vmem:[#allocation5] sm:$0xff] %vm2539, %v2528
      %2541 = vst.msk [vmem:[#allocation5 + $0x8] sm:$0xff] %vm2539, %v2530
      %2542 = vst.msk [vmem:[#allocation5 + $0x10] sm:$0xff] %vm2539, %v2532
      %2543 = vst.msk [vmem:[#allocation5 + $0x18] sm:$0xff] %vm2539, %v2534
      %v2544 = vld [vmem:[%s2453] sm:$0xff]
      %v2545 = vld [vmem:[%s2453 + $0x10] sm:$0xff]
      %v2546 = vld [vmem:[%s2453 + $0x20] sm:$0xff]
      %v2547 = vld [vmem:[%s2453 + $0x30] sm:$0xff]
      %v2548 = vld [vmem:[%s2453 + $0x40] sm:$0xff]
      %v2549 = vld [vmem:[%s2453 + $0x50] sm:$0xff]
      %v2550 = vld [vmem:[%s2453 + $0x60] sm:$0xff]
      %v2551 = vld [vmem:[%s2453 + $0x70] sm:$0xff]
      %v2552 = vpack.c.bf16 %v2545, %v2544
      %v2553 = vpack.c.bf16 %v2547, %v2546
      %v2554 = vpack.c.bf16 %v2549, %v2548
      %v2555 = vpack.c.bf16 %v2551, %v2550
      %2560 = vrot.lane.b32.xlu0 %v2552, 24
      %v2561 = vpop.permute.xlu0 %2560
      %2562 = vrot.lane.b32.xlu0 %v2553, 24
      %v2563 = vpop.permute.xlu0 %2562
      %2564 = vrot.lane.b32.xlu0 %v2554, 24
      %v2565 = vpop.permute.xlu0 %2564
      %2566 = vrot.lane.b32.xlu0 %v2555, 24
      %v2567 = vpop.permute.xlu0 %2566
      %vm2572 = vcmask 261312
      %2573 = vst.msk [vmem:[#allocation5] sm:$0xff] %vm2572, %v2561
      %2574 = vst.msk [vmem:[#allocation5 + $0x8] sm:$0xff] %vm2572, %v2563
      %2575 = vst.msk [vmem:[#allocation5 + $0x10] sm:$0xff] %vm2572, %v2565
      %2576 = vst.msk [vmem:[#allocation5 + $0x18] sm:$0xff] %vm2572, %v2567
      %v2577 = vld [vmem:[%s2453 + $0x1] sm:$0xff]
      %v2578 = vld [vmem:[%s2453 + $0x11] sm:$0xff]
      %v2579 = vld [vmem:[%s2453 + $0x21] sm:$0xff]
      %v2580 = vld [vmem:[%s2453 + $0x31] sm:$0xff]
      %v2581 = vld [vmem:[%s2453 + $0x41] sm:$0xff]
      %v2582 = vld [vmem:[%s2453 + $0x51] sm:$0xff]
      %v2583 = vld [vmem:[%s2453 + $0x61] sm:$0xff]
      %v2584 = vld [vmem:[%s2453 + $0x71] sm:$0xff]
      %v2585 = vpack.c.bf16 %v2578, %v2577
      %v2586 = vpack.c.bf16 %v2580, %v2579
      %v2587 = vpack.c.bf16 %v2582, %v2581
      %v2588 = vpack.c.bf16 %v2584, %v2583
      %2593 = vrot.lane.b32.xlu0 %v2585, 32
      %v2594 = vpop.permute.xlu0 %2593
      %2595 = vrot.lane.b32.xlu0 %v2586, 32
      %v2596 = vpop.permute.xlu0 %2595
      %2597 = vrot.lane.b32.xlu0 %v2587, 32
      %v2598 = vpop.permute.xlu0 %2597
      %2599 = vrot.lane.b32.xlu0 %v2588, 32
      %v2600 = vpop.permute.xlu0 %2599
      %vm2605 = vcmask 326912
      %2606 = vst.msk [vmem:[#allocation5] sm:$0xff] %vm2605, %v2594
      %2607 = vst.msk [vmem:[#allocation5 + $0x8] sm:$0xff] %vm2605, %v2596
      %2608 = vst.msk [vmem:[#allocation5 + $0x10] sm:$0xff] %vm2605, %v2598
      %2609 = vst.msk [vmem:[#allocation5 + $0x18] sm:$0xff] %vm2605, %v2600
      %v2610 = vld [vmem:[%s2453 + $0x2] sm:$0xff]
      %v2611 = vld [vmem:[%s2453 + $0x12] sm:$0xff]
      %v2612 = vld [vmem:[%s2453 + $0x22] sm:$0xff]
      %v2613 = vld [vmem:[%s2453 + $0x32] sm:$0xff]
      %v2614 = vld [vmem:[%s2453 + $0x42] sm:$0xff]
      %v2615 = vld [vmem:[%s2453 + $0x52] sm:$0xff]
      %v2616 = vld [vmem:[%s2453 + $0x62] sm:$0xff]
      %v2617 = vld [vmem:[%s2453 + $0x72] sm:$0xff]
      %v2618 = vpack.c.bf16 %v2611, %v2610
      %v2619 = vpack.c.bf16 %v2613, %v2612
      %v2620 = vpack.c.bf16 %v2615, %v2614
      %v2621 = vpack.c.bf16 %v2617, %v2616
      %2626 = vrot.lane.b32.xlu0 %v2618, 40
      %v2627 = vpop.permute.xlu0 %2626
      %2628 = vrot.lane.b32.xlu0 %v2619, 40
      %v2629 = vpop.permute.xlu0 %2628
      %2630 = vrot.lane.b32.xlu0 %v2620, 40
      %v2631 = vpop.permute.xlu0 %2630
      %2632 = vrot.lane.b32.xlu0 %v2621, 40
      %v2633 = vpop.permute.xlu0 %2632
      %vm2638 = vcmask 392512
      %2639 = vst.msk [vmem:[#allocation5] sm:$0xff] %vm2638, %v2627
      %2640 = vst.msk [vmem:[#allocation5 + $0x8] sm:$0xff] %vm2638, %v2629
      %2641 = vst.msk [vmem:[#allocation5 + $0x10] sm:$0xff] %vm2638, %v2631
      %2642 = vst.msk [vmem:[#allocation5 + $0x18] sm:$0xff] %vm2638, %v2633
      %s2643 = scalar_lea.vmem [#allocation3], 32
      %v2644 = vld [vmem:[%s2643] sm:$0xff]
      %v2645 = vld [vmem:[%s2643 + $0x10] sm:$0xff]
      %v2646 = vld [vmem:[%s2643 + $0x20] sm:$0xff]
      %v2647 = vld [vmem:[%s2643 + $0x30] sm:$0xff]
      %v2648 = vld [vmem:[%s2643 + $0x40] sm:$0xff]
      %v2649 = vld [vmem:[%s2643 + $0x50] sm:$0xff]
      %v2650 = vld [vmem:[%s2643 + $0x60] sm:$0xff]
      %v2651 = vld [vmem:[%s2643 + $0x70] sm:$0xff]
      %v2652 = vpack.c.bf16 %v2645, %v2644
      %v2653 = vpack.c.bf16 %v2647, %v2646
      %v2654 = vpack.c.bf16 %v2649, %v2648
      %v2655 = vpack.c.bf16 %v2651, %v2650
      %2660 = vrot.lane.b32.xlu0 %v2652, 48
      %v2661 = vpop.permute.xlu0 %2660
      %2662 = vrot.lane.b32.xlu0 %v2653, 48
      %v2663 = vpop.permute.xlu0 %2662
      %2664 = vrot.lane.b32.xlu0 %v2654, 48
      %v2665 = vpop.permute.xlu0 %2664
      %2666 = vrot.lane.b32.xlu0 %v2655, 48
      %v2667 = vpop.permute.xlu0 %2666
      %vm2672 = vcmask 458112
      %2673 = vst.msk [vmem:[#allocation5] sm:$0xff] %vm2672, %v2661
      %2674 = vst.msk [vmem:[#allocation5 + $0x8] sm:$0xff] %vm2672, %v2663
      %2675 = vst.msk [vmem:[#allocation5 + $0x10] sm:$0xff] %vm2672, %v2665
      %2676 = vst.msk [vmem:[#allocation5 + $0x18] sm:$0xff] %vm2672, %v2667
      %v2677 = vld [vmem:[%s2643 + $0x1] sm:$0xff]
      %v2678 = vld [vmem:[%s2643 + $0x11] sm:$0xff]
      %v2679 = vld [vmem:[%s2643 + $0x21] sm:$0xff]
      %v2680 = vld [vmem:[%s2643 + $0x31] sm:$0xff]
      %v2681 = vld [vmem:[%s2643 + $0x41] sm:$0xff]
      %v2682 = vld [vmem:[%s2643 + $0x51] sm:$0xff]
      %v2683 = vld [vmem:[%s2643 + $0x61] sm:$0xff]
      %v2684 = vld [vmem:[%s2643 + $0x71] sm:$0xff]
      %v2685 = vpack.c.bf16 %v2678, %v2677
      %v2686 = vpack.c.bf16 %v2680, %v2679
      %v2687 = vpack.c.bf16 %v2682, %v2681
      %v2688 = vpack.c.bf16 %v2684, %v2683
      %2693 = vrot.lane.b32.xlu0 %v2685, 56
      %v2694 = vpop.permute.xlu0 %2693
      %2695 = vrot.lane.b32.xlu0 %v2686, 56
      %v2696 = vpop.permute.xlu0 %2695
      %2697 = vrot.lane.b32.xlu0 %v2687, 56
      %v2698 = vpop.permute.xlu0 %2697
      %2699 = vrot.lane.b32.xlu0 %v2688, 56
      %v2700 = vpop.permute.xlu0 %2699
      %vm2705 = vcmask 523712
      %2706 = vst.msk [vmem:[#allocation5] sm:$0xff] %vm2705, %v2694
      %2707 = vst.msk [vmem:[#allocation5 + $0x8] sm:$0xff] %vm2705, %v2696
      %2708 = vst.msk [vmem:[#allocation5 + $0x10] sm:$0xff] %vm2705, %v2698
      %2709 = vst.msk [vmem:[#allocation5 + $0x18] sm:$0xff] %vm2705, %v2700
      %v2710 = vld [vmem:[%s2643 + $0x2] sm:$0xff]
      %v2711 = vld [vmem:[%s2643 + $0x12] sm:$0xff]
      %v2712 = vld [vmem:[%s2643 + $0x22] sm:$0xff]
      %v2713 = vld [vmem:[%s2643 + $0x32] sm:$0xff]
      %v2714 = vld [vmem:[%s2643 + $0x42] sm:$0xff]
      %v2715 = vld [vmem:[%s2643 + $0x52] sm:$0xff]
      %v2716 = vld [vmem:[%s2643 + $0x62] sm:$0xff]
      %v2717 = vld [vmem:[%s2643 + $0x72] sm:$0xff]
      %v2718 = vpack.c.bf16 %v2711, %v2710
      %v2719 = vpack.c.bf16 %v2713, %v2712
      %v2720 = vpack.c.bf16 %v2715, %v2714
      %v2721 = vpack.c.bf16 %v2717, %v2716
      %2726 = vrot.lane.b32.xlu0 %v2718, 64
      %v2727 = vpop.permute.xlu0 %2726
      %2728 = vrot.lane.b32.xlu0 %v2719, 64
      %v2729 = vpop.permute.xlu0 %2728
      %2730 = vrot.lane.b32.xlu0 %v2720, 64
      %v2731 = vpop.permute.xlu0 %2730
      %2732 = vrot.lane.b32.xlu0 %v2721, 64
      %v2733 = vpop.permute.xlu0 %2732
      %vm2738 = vcmask 589312
      %2739 = vst.msk [vmem:[#allocation5] sm:$0xff] %vm2738, %v2727
      %2740 = vst.msk [vmem:[#allocation5 + $0x8] sm:$0xff] %vm2738, %v2729
      %2741 = vst.msk [vmem:[#allocation5 + $0x10] sm:$0xff] %vm2738, %v2731
      %2742 = vst.msk [vmem:[#allocation5 + $0x18] sm:$0xff] %vm2738, %v2733
      %v2743 = vld [vmem:[#allocation5] sm:$0xff]
      %v2744 = vld [vmem:[#allocation5 + $0x8] sm:$0xff]
      %v2745 = vld [vmem:[#allocation5 + $0x10] sm:$0xff]
      %v2746 = vld [vmem:[#allocation5 + $0x18] sm:$0xff]
      %v2747 = vld [vmem:[%s12] sm:$0xf]
      %v2748 = vld [vmem:[%s12 + $0x4] sm:$0xf]
      %v2749 = vld [vmem:[%s12 + $0x8] sm:$0xf]
      %v2750 = vld [vmem:[%s12 + $0xc] sm:$0xf]
      %v2751 = vld [vmem:[%s12 + $0x10] sm:$0xf]
      %v2752 = vld [vmem:[%s12 + $0x14] sm:$0xf]
      %v2753 = vld [vmem:[%s12 + $0x18] sm:$0xf]
      %v2754 = vld [vmem:[%s12 + $0x1c] sm:$0xf]
      %v2755 = vld [vmem:[%s12 + $0x20] sm:$0xf]
      %v2765 = vunpack.c.l.b16 %v2747
      %v2766 = vunpack.c.l.b16 %v2748
      %v2767 = vunpack.c.l.b16 %v2749
      %v2768 = vunpack.c.l.b16 %v2750
      %v2769 = vunpack.c.l.b16 %v2751
      %v2770 = vunpack.c.l.b16 %v2752
      %v2771 = vunpack.c.l.b16 %v2753
      %v2772 = vunpack.c.l.b16 %v2754
      %v2773 = vunpack.c.l.b16 %v2755
      %v2774 = vpack.c.b16 %v2766, %v2765
      %v2775 = vpack.c.b16 %v2768, %v2767
      %v2776 = vpack.c.b16 %v2770, %v2769
      %v2777 = vpack.c.b16 %v2772, %v2771
      %v2778 = vpack.c.b16 %v2773, %v2773
      %vm2783 = vcmask 588800
      %v2785 = vsel %vm2783, %v2743, 0
      %v2788 = vsel %vm2783, %v2744, 0
      %v2791 = vsel %vm2783, %v2745, 0
      %v2794 = vsel %vm2783, %v2746, 0
      %vm2796 = vcmask 1043456
      %v2798 = vsel %vm2796, %v2778, 0
      %2800 = vmatprep.subr.bf16.mxu0 0
      %2801 = vmatpush1.bf16.msra.mxu0 %v2774
      %2802 = vmatprep.subr.bf16.mxu0 0
      %2803 = vmatpush1.bf16.msra.mxu0 %v2775
      %2804 = vmatprep.subr.bf16.mxu0 0
      %2805 = vmatpush1.bf16.msra.mxu0 %v2776
      %2806 = vmatprep.subr.bf16.mxu0 0
      %2807 = vmatpush1.bf16.msra.mxu0 %v2777
      %2808 = vmatprep.subr.bf16.mxu0 0
      %2809 = vmatpush1.bf16.msra.mxu0 %v2798
      %2810 = vmatprep.subr.bf16.mxu0 0
      %2811 = vmatpush1.bf16.msra.mxu0 0
      %2812 = vmatprep.subr.bf16.mxu0 0
      %2813 = vmatpush1.bf16.msra.mxu0 0
      %2814 = vmatprep.subr.bf16.mxu0 0
      %2815 = vmatpush1.bf16.msra.mxu0 0
      %2816 = vmatprep.subr.bf16.mxu0 0
      %2817 = vmatpush1.bf16.msra.mxu0 0
      %2818 = vmatprep.subr.bf16.mxu0 0
      %2819 = vmatpush1.bf16.msra.mxu0 0
      %2820 = vmatprep.subr.bf16.mxu0 0
      %2821 = vmatpush1.bf16.msra.mxu0 0
      %2822 = vmatprep.subr.bf16.mxu0 0
      %2823 = vmatpush1.bf16.msra.mxu0 0
      %2824 = vmatprep.subr.bf16.mxu0 0
      %2825 = vmatpush1.bf16.msra.mxu0 0
      %2826 = vmatprep.subr.bf16.mxu0 0
      %2827 = vmatpush1.bf16.msra.mxu0 0
      %2828 = vmatprep.subr.bf16.mxu0 0
      %2829 = vmatpush1.bf16.msra.mxu0 0
      %2830 = vmatprep.subr.bf16.mxu0 0
      %2831 = vmatpush1.bf16.msra.mxu0 0
      %2832 = vmatprep.mubr.bf16.mxu0 0
      %2833 = vmatmul.mubr.bf16.gmra.mrb[0].mxu0 %v2785
      %v2834 = vpop.f32.mrb[0].mxu0
      %v2835 = vadd.f32 0.0, %v2834
      %v2836 = vpop.f32.mrb[0].mxu0
      %v2837 = vpop.f32.mrb[0].mxu0
      %v2838 = vadd.f32 0.0, %v2837
      %v2839 = vpop.f32.mrb[0].mxu0
      %2840 = vmatprep.mubr.bf16.mxu0 0
      %2841 = vmatmul.mubr.bf16.gmra.mrb[0].mxu0 %v2788
      %v2842 = vpop.f32.mrb[0].mxu0
      %v2843 = vadd.f32 0.0, %v2842
      %v2844 = vpop.f32.mrb[0].mxu0
      %v2845 = vpop.f32.mrb[0].mxu0
      %v2846 = vadd.f32 0.0, %v2845
      %v2847 = vpop.f32.mrb[0].mxu0
      %2848 = vmatprep.mubr.bf16.mxu0 0
      %2849 = vmatmul.mubr.bf16.gmra.mrb[0].mxu0 %v2791
      %v2850 = vpop.f32.mrb[0].mxu0
      %v2851 = vadd.f32 0.0, %v2850
      %v2852 = vpop.f32.mrb[0].mxu0
      %v2853 = vpop.f32.mrb[0].mxu0
      %v2854 = vadd.f32 0.0, %v2853
      %v2855 = vpop.f32.mrb[0].mxu0
      %2856 = vmatprep.mubr.bf16.mxu0 0
      %2857 = vmatmul.mubr.bf16.gmra.mrb[0].mxu0 %v2794
      %v2858 = vpop.f32.mrb[0].mxu0
      %v2859 = vadd.f32 0.0, %v2858
      %v2860 = vpop.f32.mrb[0].mxu0
      %v2861 = vpop.f32.mrb[0].mxu0
      %v2862 = vadd.f32 0.0, %v2861
      %v2863 = vpop.f32.mrb[0].mxu0
      %2864 = vdwg.mxu0
      %v2865 = vsel %vm565, %v2835, 0.0
      %v2866 = vsel %vm565, %v2838, 0.0
      %v2867 = vadd.f32 %v2865, %v2866
      %v2868 = vsel %vm565, %v2843, 0.0
      %v2869 = vadd.f32 %v2867, %v2868
      %v2870 = vsel %vm565, %v2846, 0.0
      %v2871 = vadd.f32 %v2869, %v2870
      %v2872 = vsel %vm565, %v2851, 0.0
      %v2873 = vadd.f32 %v2871, %v2872
      %v2874 = vsel %vm565, %v2854, 0.0
      %v2875 = vadd.f32 %v2873, %v2874
      %v2876 = vsel %vm565, %v2859, 0.0
      %v2877 = vadd.f32 %v2875, %v2876
      %v2878 = vsel %vm565, %v2862, 0.0
      %v2879 = vadd.f32 %v2877, %v2878
      %2880 = vadd.xlane.f32.xlu0 %v2879
      %v2881 = vpop.xlane.xlu0 %2880
      %v2882 = vrot.slane %v2881, 4
      %v2883 = vadd.f32 %v2881, %v2882
      %v2884 = vrot.slane %v2883, 2
      %v2885 = vadd.f32 %v2883, %v2884
      %v2886 = vrot.slane %v2885, 1
      %v2887 = vadd.f32 %v2885, %v2886
      %s2888 = vtos %v2887
      %v2889 = vmul.f32 %v2835, %v2835
      %v2890 = vmul.f32 %v2838, %v2838
      %v2891 = vmul.f32 %v2843, %v2843
      %v2892 = vmul.f32 %v2846, %v2846
      %v2893 = vmul.f32 %v2851, %v2851
      %v2894 = vmul.f32 %v2854, %v2854
      %v2895 = vmul.f32 %v2859, %v2859
      %v2896 = vmul.f32 %v2862, %v2862
      %v2897 = vsel %vm565, %v2889, 0.0
      %v2898 = vsel %vm565, %v2890, 0.0
      %v2899 = vadd.f32 %v2897, %v2898
      %v2900 = vsel %vm565, %v2891, 0.0
      %v2901 = vadd.f32 %v2899, %v2900
      %v2902 = vsel %vm565, %v2892, 0.0
      %v2903 = vadd.f32 %v2901, %v2902
      %v2904 = vsel %vm565, %v2893, 0.0
      %v2905 = vadd.f32 %v2903, %v2904
      %v2906 = vsel %vm565, %v2894, 0.0
      %v2907 = vadd.f32 %v2905, %v2906
      %v2908 = vsel %vm565, %v2895, 0.0
      %v2909 = vadd.f32 %v2907, %v2908
      %v2910 = vsel %vm565, %v2896, 0.0
      %v2911 = vadd.f32 %v2909, %v2910
      %2912 = vadd.xlane.f32.xlu0 %v2911
      %v2913 = vpop.xlane.xlu0 %2912
      %v2914 = vrot.slane %v2913, 4
      %v2915 = vadd.f32 %v2913, %v2914
      %v2916 = vrot.slane %v2915, 2
      %v2917 = vadd.f32 %v2915, %v2916
      %v2918 = vrot.slane %v2917, 1
      %v2919 = vadd.f32 %v2917, %v2918
      %s2920 = vtos %v2919
      %v2921 = vrcp.pop 512.0
      %s2922 = vtos %v2921
      %s2923 = smul.f32 %s2888, %s2922
      %v2924 = vrcp.pop 512.0
      %s2925 = vtos %v2924
      %s2926 = smul.f32 %s2920, %s2925
      %s2927 = smul.f32 %s2923, %s2923
      %s2928 = ssub.f32 %s2926, %s2927
      %s2929 = smax.f32 %s2928, 0.0
      %s2930 = sadd.f32 %s2929, 1e-05
      %v2931 = vstv %s2930
      %v2932 = vrsqrt.pop %v2931
      %s2933 = vtos %v2932
      %v2934 = vstv %s2923
      %v2935 = vsub.f32 %v2835, %v2934
      %v2936 = vsub.f32 %v2838, %v2934
      %v2937 = vsub.f32 %v2843, %v2934
      %v2938 = vsub.f32 %v2846, %v2934
      %v2939 = vsub.f32 %v2851, %v2934
      %v2940 = vsub.f32 %v2854, %v2934
      %v2941 = vsub.f32 %v2859, %v2934
      %v2942 = vsub.f32 %v2862, %v2934
      %v2943 = vstv %s2933
      %v2944 = vmul.f32 %v2935, %v2943
      %v2945 = vmul.f32 %v2936, %v2943
      %v2946 = vmul.f32 %v2937, %v2943
      %v2947 = vmul.f32 %v2938, %v2943
      %v2948 = vmul.f32 %v2939, %v2943
      %v2949 = vmul.f32 %v2940, %v2943
      %v2950 = vmul.f32 %v2941, %v2943
      %v2951 = vmul.f32 %v2942, %v2943
      %v2952 = vld [vmem:[%s13] sm:$0x1]
      %v2954 = vlaneseq
      %v2955 = vshrl.u32 %v2954, 7
      %v2956 = vsub.s32 0, %v2955
      %v2957 = vrot.slane %v2952, %v2956
      %v2959 = vmul.f32 %v2944, %v2957
      %v2960 = vmul.f32 %v2945, %v2957
      %v2961 = vmul.f32 %v2946, %v2957
      %v2962 = vmul.f32 %v2947, %v2957
      %v2963 = vmul.f32 %v2948, %v2957
      %v2964 = vmul.f32 %v2949, %v2957
      %v2965 = vmul.f32 %v2950, %v2957
      %v2966 = vmul.f32 %v2951, %v2957
      %v2967 = vld [vmem:[%s14] sm:$0x1]
      %v2969 = vlaneseq
      %v2970 = vshrl.u32 %v2969, 7
      %v2971 = vsub.s32 0, %v2970
      %v2972 = vrot.slane %v2967, %v2971
      %v2974 = vadd.f32 %v2959, %v2972
      %v2975 = vadd.f32 %v2960, %v2972
      %v2976 = vadd.f32 %v2961, %v2972
      %v2977 = vadd.f32 %v2962, %v2972
      %v2978 = vadd.f32 %v2963, %v2972
      %v2979 = vadd.f32 %v2964, %v2972
      %v2980 = vadd.f32 %v2965, %v2972
      %v2981 = vadd.f32 %v2966, %v2972
      %v2982 = vmul.f32 %v2974, 0.5
      %v2983 = vmul.f32 %v2975, 0.5
      %v2984 = vmul.f32 %v2976, 0.5
      %v2985 = vmul.f32 %v2977, 0.5
      %v2986 = vmul.f32 %v2978, 0.5
      %v2987 = vmul.f32 %v2979, 0.5
      %v2988 = vmul.f32 %v2980, 0.5
      %v2989 = vmul.f32 %v2981, 0.5
      %v2990 = vmul.f32 %v2974, 0.044715
      %v2991 = vmul.f32 %v2975, 0.044715
      %v2992 = vmul.f32 %v2976, 0.044715
      %v2993 = vmul.f32 %v2977, 0.044715
      %v2994 = vmul.f32 %v2978, 0.044715
      %v2995 = vmul.f32 %v2979, 0.044715
      %v2996 = vmul.f32 %v2980, 0.044715
      %v2997 = vmul.f32 %v2981, 0.044715
      %v2998 = vmul.f32 %v2990, %v2974
      %v2999 = vmul.f32 %v2991, %v2975
      %v3000 = vmul.f32 %v2992, %v2976
      %v3001 = vmul.f32 %v2993, %v2977
      %v3002 = vmul.f32 %v2994, %v2978
      %v3003 = vmul.f32 %v2995, %v2979
      %v3004 = vmul.f32 %v2996, %v2980
      %v3005 = vmul.f32 %v2997, %v2981
      %v3006 = vmul.f32 %v2998, %v2974
      %v3007 = vmul.f32 %v2999, %v2975
      %v3008 = vmul.f32 %v3000, %v2976
      %v3009 = vmul.f32 %v3001, %v2977
      %v3010 = vmul.f32 %v3002, %v2978
      %v3011 = vmul.f32 %v3003, %v2979
      %v3012 = vmul.f32 %v3004, %v2980
      %v3013 = vmul.f32 %v3005, %v2981
      %v3014 = vadd.f32 %v2974, %v3006
      %v3015 = vadd.f32 %v2975, %v3007
      %v3016 = vadd.f32 %v2976, %v3008
      %v3017 = vadd.f32 %v2977, %v3009
      %v3018 = vadd.f32 %v2978, %v3010
      %v3019 = vadd.f32 %v2979, %v3011
      %v3020 = vadd.f32 %v2980, %v3012
      %v3021 = vadd.f32 %v2981, %v3013
      %v3022 = vmul.f32 %v3014, 0.7978846
      %v3023 = vmul.f32 %v3015, 0.7978846
      %v3024 = vmul.f32 %v3016, 0.7978846
      %v3025 = vmul.f32 %v3017, 0.7978846
      %v3026 = vmul.f32 %v3018, 0.7978846
      %v3027 = vmul.f32 %v3019, 0.7978846
      %v3028 = vmul.f32 %v3020, 0.7978846
      %v3029 = vmul.f32 %v3021, 0.7978846
      %v3030 = vtanh.pop %v3022
      %v3031 = vtanh.pop %v3023
      %v3032 = vtanh.pop %v3024
      %v3033 = vtanh.pop %v3025
      %v3034 = vtanh.pop %v3026
      %v3035 = vtanh.pop %v3027
      %v3036 = vtanh.pop %v3028
      %v3037 = vtanh.pop %v3029
      %v3038 = vadd.f32 %v3030, 1.0
      %v3039 = vadd.f32 %v3031, 1.0
      %v3040 = vadd.f32 %v3032, 1.0
      %v3041 = vadd.f32 %v3033, 1.0
      %v3042 = vadd.f32 %v3034, 1.0
      %v3043 = vadd.f32 %v3035, 1.0
      %v3044 = vadd.f32 %v3036, 1.0
      %v3045 = vadd.f32 %v3037, 1.0
      %v3046 = vmul.f32 %v2982, %v3038
      %v3047 = vmul.f32 %v2983, %v3039
      %v3048 = vmul.f32 %v2984, %v3040
      %v3049 = vmul.f32 %v2985, %v3041
      %v3050 = vmul.f32 %v2986, %v3042
      %v3051 = vmul.f32 %v2987, %v3043
      %v3052 = vmul.f32 %v2988, %v3044
      %v3053 = vmul.f32 %v2989, %v3045
      %v3054 = vld [vmem:[%s530] sm:$0x1]
      %v3056 = vlaneseq
      %v3057 = vshrl.u32 %v3056, 7
      %v3058 = vsub.s32 0, %v3057
      %v3059 = vrot.slane %v3054, %v3058
      %v3061 = vadd.f32 %v3046, %v3059
      %v3062 = vadd.f32 %v3047, %v3059
      %v3063 = vadd.f32 %v3048, %v3059
      %v3064 = vadd.f32 %v3049, %v3059
      %v3065 = vadd.f32 %v3050, %v3059
      %v3066 = vadd.f32 %v3051, %v3059
      %v3067 = vadd.f32 %v3052, %v3059
      %v3068 = vadd.f32 %v3053, %v3059
      %3069 = vst.msk [vmem:[%s535] sm:$0xff] %vm565, %v3061
      %3070 = vst.msk [vmem:[%s535 + $0x8] sm:$0xff] %vm565, %v3062
      %3071 = vst.msk [vmem:[%s535 + $0x10] sm:$0xff] %vm565, %v3063
      %3072 = vst.msk [vmem:[%s535 + $0x18] sm:$0xff] %vm565, %v3064
      %3073 = vst.msk [vmem:[%s535 + $0x20] sm:$0xff] %vm565, %v3065
      %3074 = vst.msk [vmem:[%s535 + $0x28] sm:$0xff] %vm565, %v3066
      %3075 = vst.msk [vmem:[%s535 + $0x30] sm:$0xff] %vm565, %v3067
      %3076 = vst.msk [vmem:[%s535 + $0x38] sm:$0xff] %vm565, %v3068
      %p3077 = scmp.lt.s32.totalorder %s27, 1
      %s3078 = scalar_select %p3077, %s27, 1
      %s3079 = smul.addr %s3078, 8
      %s3080 = smul.addr %s3079, 8
      %s3081 = scalar_lea.vmem %s16, %s3080
      // Predicated region
      $region85: #{down_forward.1} parent=83 // pred_check
        %p3082 = pneg %p391
      $region86: #{down_forward.1} parent=83 // pred_check_branch
        %3084 = sbr.rel (%p3082) target = $region88
      $region87: #{down_forward.1} parent=83 // pred_region
        _
      $region88: #{down_forward.1} parent=83 // pred_fallthru
        _
    $region84: #{down_forward.1} parent=5 // pred_fallthru
      _
    %p3085 = scmp.le.s32.totalorder 2, %s22
    // Predicated region
    $region89: #{down_forward.1} parent=5 // pred_check
      %p3086 = pneg %p3085
    $region90: #{down_forward.1} parent=5 // pred_check_branch
      %3088 = sbr.rel (%p3086) target = $region92
    $region91: #{down_forward.1} parent=5 // pred_region
      %s3089 = ssub.s32 %s22, 2
      // Predicated region
      $region93: #{down_forward.1} parent=91 // pred_check
        %p3090 = pneg %p397
      $region94: #{down_forward.1} parent=91 // pred_check_branch
        %3092 = sbr.rel (%p3090) target = $region96
      $region95: #{down_forward.1} parent=91 // pred_region
        %p3093 = scmp.lt.s32.totalorder %s28, 1
        %s3094 = scalar_select %p3093, %s28, 1
        %s3095 = smul.addr %s3094, 8
        %s3096 = smul.addr %s3095, 8
        %s3097 = scalar_lea.vmem %s16, %s3096
      $region96: #{down_forward.1} parent=91 // pred_fallthru
        _
    $region92: #{down_forward.1} parent=5 // pred_fallthru
      _
  $region6: #{down_forward.1} parent=0 // loop_footer
    %s26 = sadd.s32 1, %s22
  $region7: #{down_forward.1} parent=0 // loop_footer_branch
    %21 = sbr.rel target = $region3
  $region8: #{down_forward.1} parent=0 // loop_exit
    _

</llo_original>
